<compile_context>
chip_gen: v7x
topology: tpu7x:2x2x1
jax: 0.10.0
libtpu: 0.0.40
codegen_flags: <defaults>
</compile_context>

<pallas_src>
import functools

import numpy as np
import jax
import jax.numpy as jnp
from jax import lax
from jax.experimental import pallas as pl
from jax.experimental.pallas import tpu as pltpu

EMBEDDING_DIM = 100
N_FILTERS = 100
FILTER_SIZES = (3, 4, 5)
OUTPUT_DIM = 2
VOCAB_SIZE = 50
PAD_IDX = 1          # torchtext convention: <unk>=0, <pad>=1
UNK_IDX = 0
NSHIFT = max(FILTER_SIZES)   # number of time shifts in the fused conv
LANE = 128
SUBLANE = 8


def _round_up(x, m):
    return ((x + m - 1) // m) * m


# --------------------------------------------------------------------------
# Pallas kernel: one grid step == tb examples.
# --------------------------------------------------------------------------
def _scnn_kernel(tok_ref,     # (tb, s_ext, 1)            int32  token ids
                 wfused_ref,  # (NSHIFT*V_pad, 3*F_pad)   bf16   table@W_k, K-stacked
                 bconv_ref,   # (1, 3*F_pad)              f32
                 mask_ref,    # (s_pad, 3*F_pad)          f32    0/1 time-validity mask
                 wfc_ref,     # (3*F_pad, OUT_pad)        bf16
                 bfc_ref,     # (1, OUT_pad)              f32    (-1e30 on padded lanes)
                 out_ref,     # (tb, OUT_pad)             f32
                 *, tb, s_pad, nshift):
    m_rows = tb * s_pad
    v_pad = wfused_ref.shape[0] // nshift
    c = wfused_ref.shape[1]

    # Build the K-stacked one-hot operand: lanes [k*V_pad, (k+1)*V_pad) hold the
    # one-hot of the token k positions ahead.  0/1 values are exact in bf16.
    # Reads that run past the valid sequence only feed rows that the time mask
    # zeroes before the max-pool, so the result is exact.
    lane_v = lax.broadcasted_iota(jnp.int32, (tb, s_pad, v_pad), 2)
    onehots = []
    for k in range(nshift):                              # static unroll
        tok_k = tok_ref[:, k:k + s_pad, :]               # (tb, s_pad, 1) int32
        oh = (tok_k == lane_v).astype(jnp.bfloat16)      # (tb, s_pad, V_pad)
        onehots.append(oh.reshape(m_rows, v_pad))
    onehot_wide = jnp.concatenate(onehots, axis=1)       # (M, nshift*V_pad)

    # Fused conv: one MXU pass (M, 640) @ (640, 384) with f32 accumulation.
    acc = jnp.dot(onehot_wide, wfused_ref[...],
                  preferred_element_type=jnp.float32)
    conv = jnp.maximum(acc + bconv_ref[...], 0.0)        # ReLU, f32
    conv = conv.reshape(tb, s_pad, c)

    # Zero out time positions past each branch's valid window (ReLU >= 0, so a
    # 0/1 multiply equals pooling over the valid window only), then max-pool.
    pooled = jnp.max(conv * mask_ref[...], axis=1)       # (tb, 3*F_pad) f32

    # dropout p=0.0 -> identity.  FC over the fused (virtual) concat.
    logits = (jnp.dot(pooled.astype(jnp.bfloat16), wfc_ref[...],
                      preferred_element_type=jnp.float32)
              + bfc_ref[...])                            # (tb, OUT_pad) f32

    # log_softmax over lanes (padded lanes carry a -1e30 bias -> exp == 0).
    m = jnp.max(logits, axis=-1, keepdims=True)
    z = logits - m
    lse = jnp.log(jnp.sum(jnp.exp(z), axis=-1, keepdims=True))
    out_ref[...] = z - lse


# --------------------------------------------------------------------------
# Parameter packing: fold embedding into the conv weights, pad, cast to bf16.
# --------------------------------------------------------------------------
def pack_params(params):
    emb = jnp.asarray(params["embedding"], jnp.float32)
    v, e = emb.shape
    f = params["b0"].shape[0]
    v_pad = _round_up(v, LANE)
    f_pad = _round_up(f, LANE)
    out_pad = _round_up(OUTPUT_DIM, LANE)
    c = len(FILTER_SIZES) * f_pad

    # Fold the (frozen) embedding into the conv weights: for time shift k,
    # fused[k] = table_pad @ W_k with zero columns where k >= filter_size.
    table = jnp.zeros((v_pad, e), jnp.float32).at[:v, :].set(emb)
    wfused = jnp.zeros((NSHIFT, v_pad, c), jnp.float32)
    bconv = jnp.zeros((1, c), jnp.float32)
    for i, fs in enumerate(FILTER_SIZES):
        w = jnp.asarray(params[f"w{i}"], jnp.float32)          # (fs, E, F)
        for k in range(fs):
            wfused = wfused.at[k, :, i * f_pad:i * f_pad + f].set(table @ w[k])
        bconv = bconv.at[0, i * f_pad:i * f_pad + f].set(params[f"b{i}"])
    # K-stack the shifts: row k*v_pad + v pairs with one-hot lane k*v_pad + v.
    wfused = wfused.reshape(NSHIFT * v_pad, c).astype(jnp.bfloat16)

    wfc = jnp.zeros((c, out_pad), jnp.float32)
    for i in range(len(FILTER_SIZES)):
        wfc = wfc.at[i * f_pad:i * f_pad + f, :OUTPUT_DIM].set(
            params["wfc"][i * f:(i + 1) * f])
    wfc = wfc.astype(jnp.bfloat16)
    # Padded logit lanes get a huge negative bias so the in-kernel log_softmax
    # over the full 128-lane row ignores them.
    bfc = jnp.full((1, out_pad), -1e30, jnp.float32).at[0, :OUTPUT_DIM].set(
        params["bfc"])

    return dict(wfused=wfused, bconv=bconv, wfc=wfc, bfc=bfc,
                v_pad=v_pad, f_pad=f_pad, out_pad=out_pad, c=c)


def make_time_mask(s_orig, s_pad, f_pad):
    mask = np.zeros((s_pad, len(FILTER_SIZES) * f_pad), np.float32)
    for i, fs in enumerate(FILTER_SIZES):
        mask[:s_orig - fs + 1, i * f_pad:(i + 1) * f_pad] = 1.0
    return jnp.asarray(mask)


# --------------------------------------------------------------------------
# Forward wrapper.
# --------------------------------------------------------------------------
def scnn_forward(tokens, params, block_batch=None):
    # TODO(synk): TEXT.process (torchtext tokenization / vocab lookup) has no
    # Pallas equivalent; the kernel consumes integer token ids directly.
    B, S = tokens.shape
    assert S >= max(FILTER_SIZES), "sequence shorter than the largest filter"

    packed = pack_params(params)
    v_pad, f_pad = packed["v_pad"], packed["f_pad"]
    out_pad, c = packed["out_pad"], packed["c"]

    s_pad = _round_up(S, SUBLANE)
    s_ext = s_pad + SUBLANE      # head-room for the k in [0, NSHIFT) shifted reads
    if block_batch is None:
        # Target ~1024 MXU rows per grid step (amortizes the ~0.35us/step
        # pipeline overhead) while staying small enough for v7x's 64 MiB VMEM.
        block_batch = max(1, 1024 // s_pad)
    tb = min(_round_up(block_batch, SUBLANE), _round_up(B, SUBLANE))
    b_pad = _round_up(B, tb)

    tok = jnp.pad(tokens.astype(jnp.int32),
                  ((0, b_pad - B), (0, s_ext - S)),
                  constant_values=PAD_IDX)[:, :, None]        # (b_pad, s_ext, 1)

    mask = make_time_mask(S, s_pad, f_pad)                    # (s_pad, c)

    kernel = functools.partial(_scnn_kernel, tb=tb, s_pad=s_pad, nshift=NSHIFT)

    out = pl.pallas_call(
        kernel,
        out_shape=jax.ShapeDtypeStruct((b_pad, out_pad), jnp.float32),
        grid_spec=pltpu.PrefetchScalarGridSpec(
            num_scalar_prefetch=0,
            grid=(b_pad // tb,),
            in_specs=[
                pl.BlockSpec((tb, s_ext, 1), lambda b: (b, 0, 0)),
                pl.BlockSpec((NSHIFT * v_pad, c), lambda b: (0, 0)),
                pl.BlockSpec((1, c), lambda b: (0, 0)),
                pl.BlockSpec((s_pad, c), lambda b: (0, 0)),
                pl.BlockSpec((c, out_pad), lambda b: (0, 0)),
                pl.BlockSpec((1, out_pad), lambda b: (0, 0)),
            ],
            out_specs=pl.BlockSpec((tb, out_pad), lambda b: (b, 0)),
        ),
        compiler_params=pltpu.CompilerParams(
            dimension_semantics=("parallel",),        # v7x: shard over 2 TCs
            vmem_limit_bytes=32 * 1024 * 1024),
    )(tok, packed["wfused"], packed["bconv"], mask, packed["wfc"], packed["bfc"])

    return out[:B, :OUTPUT_DIM]                       # (B, 2) log-probs


# --------------------------------------------------------------------------
# Deterministic parameter construction (xavier_uniform gain=1.414 like torch).
# --------------------------------------------------------------------------
def xavier_uniform(key, shape, fan_in, fan_out, gain=1.414):
    bound = gain * np.sqrt(6.0 / (fan_in + fan_out))
    return jax.random.uniform(key, shape, jnp.float32, -bound, bound)


def make_params(key):
    keys = jax.random.split(key, 10)
    # "GloVe" embedding (frozen): random normal, UNK/PAD rows zeroed.
    emb = jax.random.normal(keys[0], (VOCAB_SIZE, EMBEDDING_DIM), jnp.float32)
    emb = emb.at[UNK_IDX].set(0.0).at[PAD_IDX].set(0.0)
    params = {"embedding": emb}
    for i, fs in enumerate(FILTER_SIZES):
        fan_in = 1 * fs * EMBEDDING_DIM
        fan_out = N_FILTERS * fs * EMBEDDING_DIM
        params[f"w{i}"] = xavier_uniform(keys[1 + 2 * i],
                                         (fs, EMBEDDING_DIM, N_FILTERS),
                                         fan_in, fan_out)
        b_bound = 1.0 / np.sqrt(fan_in)
        params[f"b{i}"] = jax.random.uniform(keys[2 + 2 * i], (N_FILTERS,),
                                             jnp.float32, -b_bound, b_bound)
    fc_in = len(FILTER_SIZES) * N_FILTERS
    params["wfc"] = xavier_uniform(keys[7], (fc_in, OUTPUT_DIM), fc_in, OUTPUT_DIM)
    b_bound = 1.0 / np.sqrt(fc_in)
    params["bfc"] = jax.random.uniform(keys[8], (OUTPUT_DIM,), jnp.float32,
                                       -b_bound, b_bound)
    return params


# --------------------------------------------------------------------------
# Pure-JAX reference for verification (f32 end-to-end).
# --------------------------------------------------------------------------
def reference_forward(tokens, params):
    emb = jnp.take(params["embedding"], tokens, axis=0)        # (B, S, E)
    B, S, E = emb.shape

    def branch(w, b):
        fs = w.shape[0]
        L = S - fs + 1
        w2d = w.reshape(fs * E, -1)
        rows = [emb[:, t:t + fs, :].reshape(B, fs * E) @ w2d + b
                for t in range(L)]
        conv = jax.nn.relu(jnp.stack(rows, axis=1))            # (B, L, F)
        return jnp.max(conv, axis=1)                           # (B, F)

    pooled = [branch(params[f"w{i}"], params[f"b{i}"])
              for i in range(len(FILTER_SIZES))]
    cat = jnp.concatenate(pooled, axis=1)
    logits = cat @ params["wfc"] + params["bfc"]
    return jax.nn.log_softmax(logits, axis=-1)


if __name__ == "__main__":
    key = jax.random.PRNGKey(0)
    pkey, tkey = jax.random.split(key)
    params = make_params(pkey)

    B, S = 24, 16      # block_batch=16 -> b_pad=32, grid=(2,): exercises padding
    tokens = jax.random.randint(tkey, (B, S), 0, VOCAB_SIZE, dtype=jnp.int32)

    out = jax.block_until_ready(scnn_forward(tokens, params, block_batch=16))
    ref = jax.block_until_ready(reference_forward(tokens, params))

    assert out.shape == (B, OUTPUT_DIM) and out.dtype == jnp.float32
    # bf16 matmul weights -> loosened tolerance (reference is f32 end-to-end).
    np.testing.assert_allclose(np.asarray(out), np.asarray(ref),
                               rtol=2e-2, atol=2e-2)
    print("KERNEL_OK")
</pallas_src>

<mosaic_0001>
module attributes {stable_mosaic.version = 11 : i64} {
  func.func @_scnn_kernel(%arg0: i32, %arg1: memref<16x24x1xi32, #tpu.memory_space<vmem>>, %arg2: memref<640x384xbf16, #tpu.memory_space<vmem>>, %arg3: memref<1x384xf32, #tpu.memory_space<vmem>>, %arg4: memref<16x384xf32, #tpu.memory_space<vmem>>, %arg5: memref<384x128xbf16, #tpu.memory_space<vmem>>, %arg6: memref<1x128xf32, #tpu.memory_space<vmem>>, %arg7: memref<16x128xf32, #tpu.memory_space<vmem>>) attributes {dimension_semantics = [#tpu.dimension_semantics<parallel>], iteration_bounds = array<i64: 2>, scalar_prefetch = 0 : i64, scratch_operands = 0 : i64, tpu.core_type = #tpu.core_type<tc>, window_params = [{transform_indices = @transform_0, window_bounds = array<i64: 16, 24, 1>}, {pipeline_mode = #tpu.pipeline_mode<synchronous>, transform_indices = @transform_1, window_bounds = array<i64: 640, 384>}, {pipeline_mode = #tpu.pipeline_mode<synchronous>, transform_indices = @transform_2, window_bounds = array<i64: 1, 384>}, {pipeline_mode = #tpu.pipeline_mode<synchronous>, transform_indices = @transform_3, window_bounds = array<i64: 16, 384>}, {pipeline_mode = #tpu.pipeline_mode<synchronous>, transform_indices = @transform_4, window_bounds = array<i64: 384, 128>}, {pipeline_mode = #tpu.pipeline_mode<synchronous>, transform_indices = @transform_5, window_bounds = array<i64: 1, 128>}, {transform_indices = @transform_6, window_bounds = array<i64: 16, 128>}]} {
    %0 = tpu.iota {dimensions = array<i32: 2>} : vector<16x16x128xi32>
    %c0 = arith.constant 0 : index
    %c0_0 = arith.constant 0 : index
    %c0_1 = arith.constant 0 : index
    %1 = vector.load %arg1[%c0, %c0_0, %c0_1] : memref<16x24x1xi32, #tpu.memory_space<vmem>>, vector<16x16x1xi32>
    %2 = vector.broadcast %1 : vector<16x16x1xi32> to vector<16x16x128xi32>
    %3 = arith.cmpi eq, %2, %0 : vector<16x16x128xi32>
    %4 = arith.extui %3 : vector<16x16x128xi1> to vector<16x16x128xi32>
    %5 = arith.sitofp %4 : vector<16x16x128xi32> to vector<16x16x128xf32>
    %6 = arith.truncf %5 : vector<16x16x128xf32> to vector<16x16x128xbf16>
    %7 = vector.shape_cast %6 : vector<16x16x128xbf16> to vector<256x128xbf16>
    %c0_2 = arith.constant 0 : index
    %c1 = arith.constant 1 : index
    %c0_3 = arith.constant 0 : index
    %8 = vector.load %arg1[%c0_2, %c1, %c0_3] : memref<16x24x1xi32, #tpu.memory_space<vmem>>, vector<16x16x1xi32>
    %9 = vector.broadcast %8 : vector<16x16x1xi32> to vector<16x16x128xi32>
    %10 = arith.cmpi eq, %9, %0 : vector<16x16x128xi32>
    %11 = arith.extui %10 : vector<16x16x128xi1> to vector<16x16x128xi32>
    %12 = arith.sitofp %11 : vector<16x16x128xi32> to vector<16x16x128xf32>
    %13 = arith.truncf %12 : vector<16x16x128xf32> to vector<16x16x128xbf16>
    %14 = vector.shape_cast %13 : vector<16x16x128xbf16> to vector<256x128xbf16>
    %c0_4 = arith.constant 0 : index
    %c2 = arith.constant 2 : index
    %c0_5 = arith.constant 0 : index
    %15 = vector.load %arg1[%c0_4, %c2, %c0_5] : memref<16x24x1xi32, #tpu.memory_space<vmem>>, vector<16x16x1xi32>
    %16 = vector.broadcast %15 : vector<16x16x1xi32> to vector<16x16x128xi32>
    %17 = arith.cmpi eq, %16, %0 : vector<16x16x128xi32>
    %18 = arith.extui %17 : vector<16x16x128xi1> to vector<16x16x128xi32>
    %19 = arith.sitofp %18 : vector<16x16x128xi32> to vector<16x16x128xf32>
    %20 = arith.truncf %19 : vector<16x16x128xf32> to vector<16x16x128xbf16>
    %21 = vector.shape_cast %20 : vector<16x16x128xbf16> to vector<256x128xbf16>
    %c0_6 = arith.constant 0 : index
    %c3 = arith.constant 3 : index
    %c0_7 = arith.constant 0 : index
    %22 = vector.load %arg1[%c0_6, %c3, %c0_7] : memref<16x24x1xi32, #tpu.memory_space<vmem>>, vector<16x16x1xi32>
    %23 = vector.broadcast %22 : vector<16x16x1xi32> to vector<16x16x128xi32>
    %24 = arith.cmpi eq, %23, %0 : vector<16x16x128xi32>
    %25 = arith.extui %24 : vector<16x16x128xi1> to vector<16x16x128xi32>
    %26 = arith.sitofp %25 : vector<16x16x128xi32> to vector<16x16x128xf32>
    %27 = arith.truncf %26 : vector<16x16x128xf32> to vector<16x16x128xbf16>
    %28 = vector.shape_cast %27 : vector<16x16x128xbf16> to vector<256x128xbf16>
    %c0_8 = arith.constant 0 : index
    %c4 = arith.constant 4 : index
    %c0_9 = arith.constant 0 : index
    %29 = vector.load %arg1[%c0_8, %c4, %c0_9] : memref<16x24x1xi32, #tpu.memory_space<vmem>>, vector<16x16x1xi32>
    %30 = vector.broadcast %29 : vector<16x16x1xi32> to vector<16x16x128xi32>
    %31 = arith.cmpi eq, %30, %0 : vector<16x16x128xi32>
    %32 = arith.extui %31 : vector<16x16x128xi1> to vector<16x16x128xi32>
    %33 = arith.sitofp %32 : vector<16x16x128xi32> to vector<16x16x128xf32>
    %34 = arith.truncf %33 : vector<16x16x128xf32> to vector<16x16x128xbf16>
    %35 = vector.shape_cast %34 : vector<16x16x128xbf16> to vector<256x128xbf16>
    %36 = tpu.concatenate %7, %14, %21, %28, %35 in 1 : vector<256x128xbf16>, vector<256x128xbf16>, vector<256x128xbf16>, vector<256x128xbf16>, vector<256x128xbf16> -> vector<256x640xbf16>
    %c0_10 = arith.constant 0 : index
    %c0_11 = arith.constant 0 : index
    %37 = vector.load %arg2[%c0_10, %c0_11] : memref<640x384xbf16, #tpu.memory_space<vmem>>, vector<640x384xbf16>
    %cst = arith.constant dense<0.000000e+00> : vector<256x384xf32>
    %38 = tpu.matmul %36, %37, %cst {dimension_numbers = #tpu.dot_dimension_numbers<[1], [0], [0], [1], [0, 0, 1, 1], [], []>} : vector<256x640xbf16>, vector<640x384xbf16>, vector<256x384xf32> -> vector<256x384xf32>
    %c0_12 = arith.constant 0 : index
    %c0_13 = arith.constant 0 : index
    %39 = vector.load %arg3[%c0_12, %c0_13] : memref<1x384xf32, #tpu.memory_space<vmem>>, vector<1x384xf32>
    %40 = vector.broadcast %39 : vector<1x384xf32> to vector<256x384xf32>
    %41 = arith.addf %38, %40 : vector<256x384xf32>
    %cst_14 = arith.constant 0.000000e+00 : f32
    %42 = vector.broadcast %cst_14 : f32 to vector<256x384xf32>
    %43 = arith.maximumf %41, %42 : vector<256x384xf32>
    %44 = vector.shape_cast %43 : vector<256x384xf32> to vector<16x16x384xf32>
    %c0_15 = arith.constant 0 : index
    %c0_16 = arith.constant 0 : index
    %45 = vector.load %arg4[%c0_15, %c0_16] : memref<16x384xf32, #tpu.memory_space<vmem>>, vector<16x384xf32>
    %46 = vector.shape_cast %45 : vector<16x384xf32> to vector<1x16x384xf32>
    %47 = vector.broadcast %46 : vector<1x16x384xf32> to vector<16x16x384xf32>
    %48 = arith.mulf %44, %47 : vector<16x16x384xf32>
    %cst_17 = arith.constant dense<0xFF800000> : vector<16x384xf32>
    %49 = vector.multi_reduction <maximumf>, %48, %cst_17 [1] : vector<16x16x384xf32> to vector<16x384xf32>
    %50 = arith.truncf %49 : vector<16x384xf32> to vector<16x384xbf16>
    %c0_18 = arith.constant 0 : index
    %c0_19 = arith.constant 0 : index
    %51 = vector.load %arg5[%c0_18, %c0_19] : memref<384x128xbf16, #tpu.memory_space<vmem>>, vector<384x128xbf16>
    %cst_20 = arith.constant dense<0.000000e+00> : vector<16x128xf32>
    %52 = tpu.matmul %50, %51, %cst_20 {dimension_numbers = #tpu.dot_dimension_numbers<[1], [0], [0], [1], [0, 0, 1, 1], [], []>} : vector<16x384xbf16>, vector<384x128xbf16>, vector<16x128xf32> -> vector<16x128xf32>
    %c0_21 = arith.constant 0 : index
    %c0_22 = arith.constant 0 : index
    %53 = vector.load %arg6[%c0_21, %c0_22] : memref<1x128xf32, #tpu.memory_space<vmem>>, vector<1x128xf32>
    %54 = vector.broadcast %53 : vector<1x128xf32> to vector<16x128xf32>
    %55 = arith.addf %52, %54 : vector<16x128xf32>
    %cst_23 = arith.constant dense<0xFF800000> : vector<16xf32>
    %56 = vector.multi_reduction <maximumf>, %55, %cst_23 [1] : vector<16x128xf32> to vector<16xf32>
    %57 = vector.shape_cast %56 : vector<16xf32> to vector<16x1xf32>
    %58 = vector.broadcast %57 : vector<16x1xf32> to vector<16x128xf32>
    %59 = arith.subf %55, %58 : vector<16x128xf32>
    %60 = math.exp %59 : vector<16x128xf32>
    %cst_24 = arith.constant dense<0.000000e+00> : vector<16xf32>
    %61 = vector.multi_reduction <add>, %60, %cst_24 [1] : vector<16x128xf32> to vector<16xf32>
    %62 = vector.shape_cast %61 : vector<16xf32> to vector<16x1xf32>
    %63 = math.log %62 : vector<16x1xf32>
    %64 = vector.broadcast %63 : vector<16x1xf32> to vector<16x128xf32>
    %65 = arith.subf %59, %64 : vector<16x128xf32>
    %c0_25 = arith.constant 0 : index
    %c0_26 = arith.constant 0 : index
    %66 = vector.load %arg7[%c0_25, %c0_26] : memref<16x128xf32, #tpu.memory_space<vmem>>, vector<16x128xf32>
    tpu.vector_store %arg7[%c0_25, %c0_26], %65 {strides = array<i32>} : memref<16x128xf32, #tpu.memory_space<vmem>>, vector<16x128xf32>,
    return
  }
  func.func @transform_0(%arg0: i32) -> (i32, i32, i32) {
    %c0_i32 = arith.constant 0 : i32
    %c0_i32_0 = arith.constant 0 : i32
    %c0_i32_1 = arith.constant 0 : i32
    return %arg0, %c0_i32, %c0_i32_0 : i32, i32, i32
  }
  func.func @transform_1(%arg0: i32) -> (i32, i32) {
    %c0_i32 = arith.constant 0 : i32
    %c0_i32_0 = arith.constant 0 : i32
    %c0_i32_1 = arith.constant 0 : i32
    return %c0_i32, %c0_i32_0 : i32, i32
  }
  func.func @transform_2(%arg0: i32) -> (i32, i32) {
    %c0_i32 = arith.constant 0 : i32
    %c0_i32_0 = arith.constant 0 : i32
    %c0_i32_1 = arith.constant 0 : i32
    return %c0_i32, %c0_i32_0 : i32, i32
  }
  func.func @transform_3(%arg0: i32) -> (i32, i32) {
    %c0_i32 = arith.constant 0 : i32
    %c0_i32_0 = arith.constant 0 : i32
    %c0_i32_1 = arith.constant 0 : i32
    return %c0_i32, %c0_i32_0 : i32, i32
  }
  func.func @transform_4(%arg0: i32) -> (i32, i32) {
    %c0_i32 = arith.constant 0 : i32
    %c0_i32_0 = arith.constant 0 : i32
    %c0_i32_1 = arith.constant 0 : i32
    return %c0_i32, %c0_i32_0 : i32, i32
  }
  func.func @transform_5(%arg0: i32) -> (i32, i32) {
    %c0_i32 = arith.constant 0 : i32
    %c0_i32_0 = arith.constant 0 : i32
    %c0_i32_1 = arith.constant 0 : i32
    return %c0_i32, %c0_i32_0 : i32, i32
  }
  func.func @transform_6(%arg0: i32) -> (i32, i32) {
    %c0_i32 = arith.constant 0 : i32
    %c0_i32_0 = arith.constant 0 : i32
    return %arg0, %c0_i32 : i32, i32
  }
}

</mosaic_0001>

<llo_original>
// kernel: tpu_custom_call.1
$region0: #{tpu_custom_call.1}
  #allocation0 [shape = 'u32[]', space=smem, size = 0x4, offset = 0x4, fixed_abs, tag = 'smem constant byte address 0x4 - core index']
  #allocation1 [shape = 'u32[144,128]{1,0:T(1,128)}', space=vmem, size = 0x12000, scoped, tag = 'internal scratch']
  %s0 = inlined_call_operand.vmem [shape: s32[32,24,1], index: 0, kind: input, shape index: {}]
  %s1 = inlined_call_operand.hbm [shape: bf16[640,384], index: 1, kind: input, shape index: {}]
  %s2 = inlined_call_operand.vmem [shape: f32[1,384], index: 2, kind: input, shape index: {}]
  %s3 = inlined_call_operand.vmem [shape: f32[16,384], index: 3, kind: input, shape index: {}]
  %s4 = inlined_call_operand.vmem [shape: bf16[384,128], index: 4, kind: input, shape index: {}]
  %s5 = inlined_call_operand.vmem [shape: f32[1,128], index: 5, kind: input, shape index: {}]
  %s6 = inlined_call_operand.hbm [shape: f32[32,128], index: 6, kind: output, shape index: {}]
  %s7 = sld [smem:[#allocation0]]
  $region61: #{tpu_custom_call.1} parent=0
    _
  %s9 = ssub.s32 1, %s7
  %s10 = scalar_select 0, %s9, %s7
  $region1: #{tpu_custom_call.1} parent=0
    #allocation2 [shape = 'u8[491520]{0}', space=vmem, size = 0x78000, scoped, tag = 'input window, operand 1, single buffered']
    #allocation3 [shape = 's32[2]{0}', space=sflag, size = 0x8, scoped, tag = 'scoped memory for tpu_custom_call.1']
    #allocation4 [shape = 's32[2]{0}', space=sflag, size = 0x8, scoped, tag = 'scoped memory for tpu_custom_call.1']
    #allocation5 [shape = 'u8[16384]{0}', space=vmem, size = 0x4000, scoped, tag = 'output window, operand 0']
    %11 = vsyncpa [#allocation3], 0
    %12 = vsyncpa [#allocation4], 0
    %s13 = scalar_lea.sflag [#allocation4], 1
    %14 = vsyncpa %s13, 0
    loop: start=0, step=1, limit=4
    $region2: #{tpu_custom_call.1} parent=1 // loop_pre_header
      _
    $region3: #{tpu_custom_call.1} parent=1 // loop_header
      %s16 = sphi 0, %s20
      %p17 = scmp.ge.s32.totalorder %s16, 4
      %s26 = sphi 0, %s28
      %s29 = sphi 0, %s26
      %s30 = sphi 0, %s29
      %s46 = sphi 0, %s30
      %s50 = sphi 0, %s50
      %s52 = sphi 0, %s50
      %s53 = sphi 0, %s52
      %s67 = sphi 0, %s53
      %s71 = sphi 0, %s71
      %s73 = sphi 0, %s71
      %s74 = sphi 0, %s73
      %s88 = sphi 0, %s74
      %s92 = sphi 0, %s92
      %s94 = sphi 0, %s92
      %s95 = sphi 0, %s94
      %s109 = sphi 0, %s95
      %s113 = sphi 0, %s113
      %s115 = sphi 0, %s113
      %s116 = sphi 0, %s115
      %s130 = sphi 0, %s116
      %s134 = sphi 0, %s134
      %s136 = sphi 0, %s134
      %s137 = sphi 0, %s136
      %s151 = sphi 0, %s137
      %s157 = sphi 0, %s159
      %s160 = sphi 0, %s157
      %s161 = sphi 0, %s160
      %s177 = sphi 0, %s161
    $region4: #{tpu_custom_call.1} parent=1 // loop_header_branch
      %19 = sbr.rel (%p17) target = $region8
    $region5: #{tpu_custom_call.1} parent=1 // loop_body
      %s21 = ssub.s32 %s16, 1
      %s22 = ssub.s32 %s16, 2
      %s23 = sadd.s32 %s16, 1
      %s24 = ssub.s32 %s16, %s23
      %p25 = scmp.eq.s32.totalorder %s24, 0
      %s27 = sadd.s32 %s26, 1
      %s28 = scalar_select %p25, %s26, %s27
      %p31 = pneg %p25
      %p32 = scmp.eq.s32.totalorder %s16, 1
      %p33 = por %p31, %p32
      %p34 = scmp.ne.s32.totalorder %s26, %s29
      %p35 = scmp.eq.s32.totalorder %s16, 0
      %p36 = por %p34, %p35
      %p37 = scmp.ne.s32.totalorder %s26, %s29
      %p38 = scmp.eq.s32.totalorder %s21, 1
      %p39 = por %p37, %p38
      %p40 = scmp.ne.s32.totalorder %s29, %s30
      %p41 = scmp.eq.s32.totalorder %s21, 0
      %p42 = por %p40, %p41
      %p43 = scmp.ne.s32.totalorder %s29, %s30
      %p44 = scmp.eq.s32.totalorder %s22, 1
      %p45 = por %p43, %p44
      %p47 = scmp.ne.s32.totalorder %s30, %s46
      %p48 = scmp.eq.s32.totalorder %s22, 0
      %p49 = por %p47, %p48
      %s51 = sadd.s32 %s50, 1
      %p54 = scmp.eq.s32.totalorder %s16, 1
      %p55 = scmp.ne.s32.totalorder %s50, %s52
      %p56 = scmp.eq.s32.totalorder %s16, 0
      %p57 = por %p55, %p56
      %p58 = scmp.ne.s32.totalorder %s50, %s52
      %p59 = scmp.eq.s32.totalorder %s21, 1
      %p60 = por %p58, %p59
      %p61 = scmp.ne.s32.totalorder %s52, %s53
      %p62 = scmp.eq.s32.totalorder %s21, 0
      %p63 = por %p61, %p62
      %p64 = scmp.ne.s32.totalorder %s52, %s53
      %p65 = scmp.eq.s32.totalorder %s22, 1
      %p66 = por %p64, %p65
      %p68 = scmp.ne.s32.totalorder %s53, %s67
      %p69 = scmp.eq.s32.totalorder %s22, 0
      %p70 = por %p68, %p69
      %s72 = sadd.s32 %s71, 1
      %p75 = scmp.eq.s32.totalorder %s16, 1
      %p76 = scmp.ne.s32.totalorder %s71, %s73
      %p77 = scmp.eq.s32.totalorder %s16, 0
      %p78 = por %p76, %p77
      %p79 = scmp.ne.s32.totalorder %s71, %s73
      %p80 = scmp.eq.s32.totalorder %s21, 1
      %p81 = por %p79, %p80
      %p82 = scmp.ne.s32.totalorder %s73, %s74
      %p83 = scmp.eq.s32.totalorder %s21, 0
      %p84 = por %p82, %p83
      %p85 = scmp.ne.s32.totalorder %s73, %s74
      %p86 = scmp.eq.s32.totalorder %s22, 1
      %p87 = por %p85, %p86
      %p89 = scmp.ne.s32.totalorder %s74, %s88
      %p90 = scmp.eq.s32.totalorder %s22, 0
      %p91 = por %p89, %p90
      %s93 = sadd.s32 %s92, 1
      %p96 = scmp.eq.s32.totalorder %s16, 1
      %p97 = scmp.ne.s32.totalorder %s92, %s94
      %p98 = scmp.eq.s32.totalorder %s16, 0
      %p99 = por %p97, %p98
      %p100 = scmp.ne.s32.totalorder %s92, %s94
      %p101 = scmp.eq.s32.totalorder %s21, 1
      %p102 = por %p100, %p101
      %p103 = scmp.ne.s32.totalorder %s94, %s95
      %p104 = scmp.eq.s32.totalorder %s21, 0
      %p105 = por %p103, %p104
      %p106 = scmp.ne.s32.totalorder %s94, %s95
      %p107 = scmp.eq.s32.totalorder %s22, 1
      %p108 = por %p106, %p107
      %p110 = scmp.ne.s32.totalorder %s95, %s109
      %p111 = scmp.eq.s32.totalorder %s22, 0
      %p112 = por %p110, %p111
      %s114 = sadd.s32 %s113, 1
      %p117 = scmp.eq.s32.totalorder %s16, 1
      %p118 = scmp.ne.s32.totalorder %s113, %s115
      %p119 = scmp.eq.s32.totalorder %s16, 0
      %p120 = por %p118, %p119
      %p121 = scmp.ne.s32.totalorder %s113, %s115
      %p122 = scmp.eq.s32.totalorder %s21, 1
      %p123 = por %p121, %p122
      %p124 = scmp.ne.s32.totalorder %s115, %s116
      %p125 = scmp.eq.s32.totalorder %s21, 0
      %p126 = por %p124, %p125
      %p127 = scmp.ne.s32.totalorder %s115, %s116
      %p128 = scmp.eq.s32.totalorder %s22, 1
      %p129 = por %p127, %p128
      %p131 = scmp.ne.s32.totalorder %s116, %s130
      %p132 = scmp.eq.s32.totalorder %s22, 0
      %p133 = por %p131, %p132
      %s135 = sadd.s32 %s134, 1
      %p138 = scmp.eq.s32.totalorder %s16, 1
      %p139 = scmp.ne.s32.totalorder %s134, %s136
      %p140 = scmp.eq.s32.totalorder %s16, 0
      %p141 = por %p139, %p140
      %p142 = scmp.ne.s32.totalorder %s134, %s136
      %p143 = scmp.eq.s32.totalorder %s21, 1
      %p144 = por %p142, %p143
      %p145 = scmp.ne.s32.totalorder %s136, %s137
      %p146 = scmp.eq.s32.totalorder %s21, 0
      %p147 = por %p145, %p146
      %p148 = scmp.ne.s32.totalorder %s136, %s137
      %p149 = scmp.eq.s32.totalorder %s22, 1
      %p150 = por %p148, %p149
      %p152 = scmp.ne.s32.totalorder %s137, %s151
      %p153 = scmp.eq.s32.totalorder %s22, 0
      %p154 = por %p152, %p153
      %s155 = ssub.s32 %s16, %s23
      %p156 = scmp.eq.s32.totalorder %s155, 0
      %s158 = sadd.s32 %s157, 1
      %s159 = scalar_select %p156, %s157, %s158
      %p162 = pneg %p156
      %p163 = scmp.eq.s32.totalorder %s16, 1
      %p164 = por %p162, %p163
      %p165 = scmp.ne.s32.totalorder %s157, %s160
      %p166 = scmp.eq.s32.totalorder %s16, 0
      %p167 = por %p165, %p166
      %p168 = scmp.ne.s32.totalorder %s157, %s160
      %p169 = scmp.eq.s32.totalorder %s21, 1
      %p170 = por %p168, %p169
      %p171 = scmp.ne.s32.totalorder %s160, %s161
      %p172 = scmp.eq.s32.totalorder %s21, 0
      %p173 = por %p171, %p172
      %p174 = scmp.ne.s32.totalorder %s160, %s161
      %p175 = scmp.eq.s32.totalorder %s22, 1
      %p176 = por %p174, %p175
      %p178 = scmp.ne.s32.totalorder %s161, %s177
      %p179 = scmp.eq.s32.totalorder %s22, 0
      %p180 = por %p178, %p179
      %p181 = scmp.le.s32.totalorder 1, %s16
      %p182 = scmp.lt.s32.totalorder %s16, 3
      %p183 = pnand %p181, %p182
      %p184 = pneg %p183
      // Predicated region
      $region9: #{tpu_custom_call.1} parent=5 // pred_check
        _
      $region10: #{tpu_custom_call.1} parent=5 // pred_check_branch
        %186 = sbr.rel (%p183) target = $region12
      $region11: #{tpu_custom_call.1} parent=5 // pred_region
        %s187 = ssub.s32 %s16, 1
        // Predicated region
        $region13: #{tpu_custom_call.1} parent=11 // pred_check
          %p188 = pneg %p63
        $region14: #{tpu_custom_call.1} parent=11 // pred_check_branch
          %190 = sbr.rel (%p188) target = $region16
        $region15: #{tpu_custom_call.1} parent=11 // pred_region
          %s192 = ssub.s32 15360, 15360
          %193 = vsyncadd [#allocation3], %s192
          %s194 = sshll.u32 [#allocation2], 4
          %s195 = int_to_ptr.vmem [resolvable:$true] %s194
          %200 = dma.hbm_to_vmem [thread:$0]  %s1, 15360, %s195, [#allocation3], 192, 192, 12
        $region16: #{tpu_custom_call.1} parent=11 // pred_fallthru
          _
        // Predicated region
        $region17: #{tpu_custom_call.1} parent=11 // pred_check
          %p201 = pneg %p84
        $region18: #{tpu_custom_call.1} parent=11 // pred_check_branch
          %203 = sbr.rel (%p201) target = $region20
        $region19: #{tpu_custom_call.1} parent=11 // pred_region
          _
        $region20: #{tpu_custom_call.1} parent=11 // pred_fallthru
          _
        // Predicated region
        $region21: #{tpu_custom_call.1} parent=11 // pred_check
          %p204 = pneg %p105
        $region22: #{tpu_custom_call.1} parent=11 // pred_check_branch
          %206 = sbr.rel (%p204) target = $region24
        $region23: #{tpu_custom_call.1} parent=11 // pred_region
          _
        $region24: #{tpu_custom_call.1} parent=11 // pred_fallthru
          _
        // Predicated region
        $region25: #{tpu_custom_call.1} parent=11 // pred_check
          %p207 = pneg %p126
        $region26: #{tpu_custom_call.1} parent=11 // pred_check_branch
          %209 = sbr.rel (%p207) target = $region28
        $region27: #{tpu_custom_call.1} parent=11 // pred_region
          _
        $region28: #{tpu_custom_call.1} parent=11 // pred_fallthru
          _
        // Predicated region
        $region29: #{tpu_custom_call.1} parent=11 // pred_check
          %p210 = pneg %p147
        $region30: #{tpu_custom_call.1} parent=11 // pred_check_branch
          %212 = sbr.rel (%p210) target = $region32
        $region31: #{tpu_custom_call.1} parent=11 // pred_region
          _
        $region32: #{tpu_custom_call.1} parent=11 // pred_fallthru
          _
      $region12: #{tpu_custom_call.1} parent=5 // pred_fallthru
        _
      %p213 = scmp.lt.s32.totalorder %s16, 2
      // Predicated region
      $region33: #{tpu_custom_call.1} parent=5 // pred_check
        %p214 = pneg %p213
      $region34: #{tpu_custom_call.1} parent=5 // pred_check_branch
        %216 = sbr.rel (%p214) target = $region36
      $region35: #{tpu_custom_call.1} parent=5 // pred_region
        // Predicated region
        $region37: #{tpu_custom_call.1} parent=35 // pred_check
          %p217 = pneg %p36
        $region38: #{tpu_custom_call.1} parent=35 // pred_check_branch
          %219 = sbr.rel (%p217) target = $region40
        $region39: #{tpu_custom_call.1} parent=35 // pred_region
          %s220 = smul.u32 16, %s16
          %p221 = scmp.lt.s32.totalorder %s220, 31
          %s222 = scalar_select %p221, %s220, 31
          %s223 = smul.addr %s222, 3
          %s224 = smul.addr %s223, 8
          %s225 = scalar_lea.vmem %s0, %s224
          %s226 = smul.u32 16, %s16
        $region40: #{tpu_custom_call.1} parent=35 // pred_fallthru
          _
      $region36: #{tpu_custom_call.1} parent=5 // pred_fallthru
        _
      %p227 = scmp.le.s32.totalorder 1, %s16
      %p228 = scmp.lt.s32.totalorder %s16, 3
      %p229 = pnand %p227, %p228
      %p230 = pneg %p229
      // Predicated region
      $region41: #{tpu_custom_call.1} parent=5 // pred_check
        _
      $region42: #{tpu_custom_call.1} parent=5 // pred_check_branch
        %232 = sbr.rel (%p229) target = $region44
      $region43: #{tpu_custom_call.1} parent=5 // pred_region
        %s233 = ssub.s32 %s16, 1
        // Predicated region
        $region45: #{tpu_custom_call.1} parent=43 // pred_check
          %p234 = pneg %p63
        $region46: #{tpu_custom_call.1} parent=43 // pred_check_branch
          %236 = sbr.rel (%p234) target = $region48
        $region47: #{tpu_custom_call.1} parent=43 // pred_region
          %237 = dma.done [#allocation3], 15360
        $region48: #{tpu_custom_call.1} parent=43 // pred_fallthru
          _
        %s238 = smul.u32 16, %s21
        %p239 = scmp.lt.s32.totalorder %s238, 31
        %s240 = scalar_select %p239, %s238, 31
        %s241 = smul.addr %s240, 3
        %s242 = smul.addr %s241, 8
        %s243 = scalar_lea.vmem %s0, %s242
        %p244 = pneg %p42
        %p245 = pneg %p39
        %p246 = pneg %p63
        %p247 = pneg %p60
        %p248 = pneg %p84
        %p249 = pneg %p81
        %p250 = pneg %p105
        %p251 = pneg %p102
        %p252 = pneg %p126
        %p253 = pneg %p123
        %p254 = pneg %p147
        %p255 = pneg %p144
        %p256 = pneg %p173
        %p257 = pneg %p170
        %s258 = sand.u32 %s160, 1
        %s259 = scalar_lea.sflag [#allocation4], %s258
        %s260 = sand.u32 %s160, 1
        %s261 = smul.addr %s260, 16
        %s262 = scalar_lea.vmem [#allocation5], %s261
        %s263 = smul.u32 16, %s21
        %p264 = scmp.lt.s32.totalorder %s263, 31
        %s265 = scalar_select %p264, %s263, 31
        %s266 = smul.addr %s265, 3
        %s267 = smul.addr %s266, 8
        %s268 = scalar_lea.vmem %s0, %s267
        %s269 = smul.u32 16, %s21
        %s270 = smul.u32 2, %s21
        %v272 = vlaneseq
        %v273 = vand.u32 %v272, 127
        %v274 = vld [vmem:[%s268] sm:$0xff]
        %v275 = vld [vmem:[%s268 + $0x8] sm:$0xff]
        %v276 = vld [vmem:[%s268 + $0x18] sm:$0xff]
        %v277 = vld [vmem:[%s268 + $0x20] sm:$0xff]
        %v278 = vld [vmem:[%s268 + $0x30] sm:$0xff]
        %v279 = vld [vmem:[%s268 + $0x38] sm:$0xff]
        %v280 = vld [vmem:[%s268 + $0x48] sm:$0xff]
        %v281 = vld [vmem:[%s268 + $0x50] sm:$0xff]
        %v282 = vld [vmem:[%s268 + $0x60] sm:$0xff]
        %v283 = vld [vmem:[%s268 + $0x68] sm:$0xff]
        %v284 = vld [vmem:[%s268 + $0x78] sm:$0xff]
        %v285 = vld [vmem:[%s268 + $0x80] sm:$0xff]
        %v286 = vld [vmem:[%s268 + $0x90] sm:$0xff]
        %v287 = vld [vmem:[%s268 + $0x98] sm:$0xff]
        %v288 = vld [vmem:[%s268 + $0xa8] sm:$0xff]
        %v289 = vld [vmem:[%s268 + $0xb0] sm:$0xff]
        %v290 = vld [vmem:[%s268 + $0xc0] sm:$0xff]
        %v291 = vld [vmem:[%s268 + $0xc8] sm:$0xff]
        %v292 = vld [vmem:[%s268 + $0xd8] sm:$0xff]
        %v293 = vld [vmem:[%s268 + $0xe0] sm:$0xff]
        %v294 = vld [vmem:[%s268 + $0xf0] sm:$0xff]
        %v295 = vld [vmem:[%s268 + $0xf8] sm:$0xff]
        %v296 = vld [vmem:[%s268 + $0x108] sm:$0xff]
        %v297 = vld [vmem:[%s268 + $0x110] sm:$0xff]
        %v298 = vld [vmem:[%s268 + $0x120] sm:$0xff]
        %v299 = vld [vmem:[%s268 + $0x128] sm:$0xff]
        %v300 = vld [vmem:[%s268 + $0x138] sm:$0xff]
        %v301 = vld [vmem:[%s268 + $0x140] sm:$0xff]
        %v302 = vld [vmem:[%s268 + $0x150] sm:$0xff]
        %v303 = vld [vmem:[%s268 + $0x158] sm:$0xff]
        %v304 = vld [vmem:[%s268 + $0x168] sm:$0xff]
        %v305 = vld [vmem:[%s268 + $0x170] sm:$0xff]
        %306 = vset.pattern.permute.xlu0 0
        %307 = vperm.xlu0 %306, %v274
        %v308 = vpop.permute.xlu0 %307
        %309 = vset.pattern.permute.xlu0 0
        %310 = vperm.xlu0 %309, %v275
        %v311 = vpop.permute.xlu0 %310
        %312 = vset.pattern.permute.xlu0 0
        %313 = vperm.xlu0 %312, %v276
        %v314 = vpop.permute.xlu0 %313
        %315 = vset.pattern.permute.xlu0 0
        %316 = vperm.xlu0 %315, %v277
        %v317 = vpop.permute.xlu0 %316
        %318 = vset.pattern.permute.xlu0 0
        %319 = vperm.xlu0 %318, %v278
        %v320 = vpop.permute.xlu0 %319
        %321 = vset.pattern.permute.xlu0 0
        %322 = vperm.xlu0 %321, %v279
        %v323 = vpop.permute.xlu0 %322
        %324 = vset.pattern.permute.xlu0 0
        %325 = vperm.xlu0 %324, %v280
        %v326 = vpop.permute.xlu0 %325
        %327 = vset.pattern.permute.xlu0 0
        %328 = vperm.xlu0 %327, %v281
        %v329 = vpop.permute.xlu0 %328
        %330 = vset.pattern.permute.xlu0 0
        %331 = vperm.xlu0 %330, %v282
        %v332 = vpop.permute.xlu0 %331
        %333 = vset.pattern.permute.xlu0 0
        %334 = vperm.xlu0 %333, %v283
        %v335 = vpop.permute.xlu0 %334
        %336 = vset.pattern.permute.xlu0 0
        %337 = vperm.xlu0 %336, %v284
        %v338 = vpop.permute.xlu0 %337
        %339 = vset.pattern.permute.xlu0 0
        %340 = vperm.xlu0 %339, %v285
        %v341 = vpop.permute.xlu0 %340
        %342 = vset.pattern.permute.xlu0 0
        %343 = vperm.xlu0 %342, %v286
        %v344 = vpop.permute.xlu0 %343
        %345 = vset.pattern.permute.xlu0 0
        %346 = vperm.xlu0 %345, %v287
        %v347 = vpop.permute.xlu0 %346
        %348 = vset.pattern.permute.xlu0 0
        %349 = vperm.xlu0 %348, %v288
        %v350 = vpop.permute.xlu0 %349
        %351 = vset.pattern.permute.xlu0 0
        %352 = vperm.xlu0 %351, %v289
        %v353 = vpop.permute.xlu0 %352
        %354 = vset.pattern.permute.xlu0 0
        %355 = vperm.xlu0 %354, %v290
        %v356 = vpop.permute.xlu0 %355
        %357 = vset.pattern.permute.xlu0 0
        %358 = vperm.xlu0 %357, %v291
        %v359 = vpop.permute.xlu0 %358
        %360 = vset.pattern.permute.xlu0 0
        %361 = vperm.xlu0 %360, %v292
        %v362 = vpop.permute.xlu0 %361
        %363 = vset.pattern.permute.xlu0 0
        %364 = vperm.xlu0 %363, %v293
        %v365 = vpop.permute.xlu0 %364
        %366 = vset.pattern.permute.xlu0 0
        %367 = vperm.xlu0 %366, %v294
        %v368 = vpop.permute.xlu0 %367
        %369 = vset.pattern.permute.xlu0 0
        %370 = vperm.xlu0 %369, %v295
        %v371 = vpop.permute.xlu0 %370
        %372 = vset.pattern.permute.xlu0 0
        %373 = vperm.xlu0 %372, %v296
        %v374 = vpop.permute.xlu0 %373
        %375 = vset.pattern.permute.xlu0 0
        %376 = vperm.xlu0 %375, %v297
        %v377 = vpop.permute.xlu0 %376
        %378 = vset.pattern.permute.xlu0 0
        %379 = vperm.xlu0 %378, %v298
        %v380 = vpop.permute.xlu0 %379
        %381 = vset.pattern.permute.xlu0 0
        %382 = vperm.xlu0 %381, %v299
        %v383 = vpop.permute.xlu0 %382
        %384 = vset.pattern.permute.xlu0 0
        %385 = vperm.xlu0 %384, %v300
        %v386 = vpop.permute.xlu0 %385
        %387 = vset.pattern.permute.xlu0 0
        %388 = vperm.xlu0 %387, %v301
        %v389 = vpop.permute.xlu0 %388
        %390 = vset.pattern.permute.xlu0 0
        %391 = vperm.xlu0 %390, %v302
        %v392 = vpop.permute.xlu0 %391
        %393 = vset.pattern.permute.xlu0 0
        %394 = vperm.xlu0 %393, %v303
        %v395 = vpop.permute.xlu0 %394
        %396 = vset.pattern.permute.xlu0 0
        %397 = vperm.xlu0 %396, %v304
        %v398 = vpop.permute.xlu0 %397
        %399 = vset.pattern.permute.xlu0 0
        %400 = vperm.xlu0 %399, %v305
        %v401 = vpop.permute.xlu0 %400
        %vm402 = vcmp.eq.s32.totalorder %v308, %v273
        %vm403 = vcmp.eq.s32.totalorder %v311, %v273
        %vm404 = vcmp.eq.s32.totalorder %v314, %v273
        %vm405 = vcmp.eq.s32.totalorder %v317, %v273
        %vm406 = vcmp.eq.s32.totalorder %v320, %v273
        %vm407 = vcmp.eq.s32.totalorder %v323, %v273
        %vm408 = vcmp.eq.s32.totalorder %v326, %v273
        %vm409 = vcmp.eq.s32.totalorder %v329, %v273
        %vm410 = vcmp.eq.s32.totalorder %v332, %v273
        %vm411 = vcmp.eq.s32.totalorder %v335, %v273
        %vm412 = vcmp.eq.s32.totalorder %v338, %v273
        %vm413 = vcmp.eq.s32.totalorder %v341, %v273
        %vm414 = vcmp.eq.s32.totalorder %v344, %v273
        %vm415 = vcmp.eq.s32.totalorder %v347, %v273
        %vm416 = vcmp.eq.s32.totalorder %v350, %v273
        %vm417 = vcmp.eq.s32.totalorder %v353, %v273
        %vm418 = vcmp.eq.s32.totalorder %v356, %v273
        %vm419 = vcmp.eq.s32.totalorder %v359, %v273
        %vm420 = vcmp.eq.s32.totalorder %v362, %v273
        %vm421 = vcmp.eq.s32.totalorder %v365, %v273
        %vm422 = vcmp.eq.s32.totalorder %v368, %v273
        %vm423 = vcmp.eq.s32.totalorder %v371, %v273
        %vm424 = vcmp.eq.s32.totalorder %v374, %v273
        %vm425 = vcmp.eq.s32.totalorder %v377, %v273
        %vm426 = vcmp.eq.s32.totalorder %v380, %v273
        %vm427 = vcmp.eq.s32.totalorder %v383, %v273
        %vm428 = vcmp.eq.s32.totalorder %v386, %v273
        %vm429 = vcmp.eq.s32.totalorder %v389, %v273
        %vm430 = vcmp.eq.s32.totalorder %v392, %v273
        %vm431 = vcmp.eq.s32.totalorder %v395, %v273
        %vm432 = vcmp.eq.s32.totalorder %v398, %v273
        %vm433 = vcmp.eq.s32.totalorder %v401, %v273
        %v434 = vsel %vm402, 1, 0
        %v435 = vsel %vm403, 1, 0
        %v436 = vsel %vm404, 1, 0
        %v437 = vsel %vm405, 1, 0
        %v438 = vsel %vm406, 1, 0
        %v439 = vsel %vm407, 1, 0
        %v440 = vsel %vm408, 1, 0
        %v441 = vsel %vm409, 1, 0
        %v442 = vsel %vm410, 1, 0
        %v443 = vsel %vm411, 1, 0
        %v444 = vsel %vm412, 1, 0
        %v445 = vsel %vm413, 1, 0
        %v446 = vsel %vm414, 1, 0
        %v447 = vsel %vm415, 1, 0
        %v448 = vsel %vm416, 1, 0
        %v449 = vsel %vm417, 1, 0
        %v450 = vsel %vm418, 1, 0
        %v451 = vsel %vm419, 1, 0
        %v452 = vsel %vm420, 1, 0
        %v453 = vsel %vm421, 1, 0
        %v454 = vsel %vm422, 1, 0
        %v455 = vsel %vm423, 1, 0
        %v456 = vsel %vm424, 1, 0
        %v457 = vsel %vm425, 1, 0
        %v458 = vsel %vm426, 1, 0
        %v459 = vsel %vm427, 1, 0
        %v460 = vsel %vm428, 1, 0
        %v461 = vsel %vm429, 1, 0
        %v462 = vsel %vm430, 1, 0
        %v463 = vsel %vm431, 1, 0
        %v464 = vsel %vm432, 1, 0
        %v465 = vsel %vm433, 1, 0
        %v466 = vcvt.s32.f32 %v434
        %v467 = vcvt.s32.f32 %v435
        %v468 = vcvt.s32.f32 %v436
        %v469 = vcvt.s32.f32 %v437
        %v470 = vcvt.s32.f32 %v438
        %v471 = vcvt.s32.f32 %v439
        %v472 = vcvt.s32.f32 %v440
        %v473 = vcvt.s32.f32 %v441
        %v474 = vcvt.s32.f32 %v442
        %v475 = vcvt.s32.f32 %v443
        %v476 = vcvt.s32.f32 %v444
        %v477 = vcvt.s32.f32 %v445
        %v478 = vcvt.s32.f32 %v446
        %v479 = vcvt.s32.f32 %v447
        %v480 = vcvt.s32.f32 %v448
        %v481 = vcvt.s32.f32 %v449
        %v482 = vcvt.s32.f32 %v450
        %v483 = vcvt.s32.f32 %v451
        %v484 = vcvt.s32.f32 %v452
        %v485 = vcvt.s32.f32 %v453
        %v486 = vcvt.s32.f32 %v454
        %v487 = vcvt.s32.f32 %v455
        %v488 = vcvt.s32.f32 %v456
        %v489 = vcvt.s32.f32 %v457
        %v490 = vcvt.s32.f32 %v458
        %v491 = vcvt.s32.f32 %v459
        %v492 = vcvt.s32.f32 %v460
        %v493 = vcvt.s32.f32 %v461
        %v494 = vcvt.s32.f32 %v462
        %v495 = vcvt.s32.f32 %v463
        %v496 = vcvt.s32.f32 %v464
        %v497 = vcvt.s32.f32 %v465
        %v498 = vpack.c.bf16 %v467, %v466
        %v499 = vpack.c.bf16 %v469, %v468
        %v500 = vpack.c.bf16 %v471, %v470
        %v501 = vpack.c.bf16 %v473, %v472
        %v502 = vpack.c.bf16 %v475, %v474
        %v503 = vpack.c.bf16 %v477, %v476
        %v504 = vpack.c.bf16 %v479, %v478
        %v505 = vpack.c.bf16 %v481, %v480
        %v506 = vpack.c.bf16 %v483, %v482
        %v507 = vpack.c.bf16 %v485, %v484
        %v508 = vpack.c.bf16 %v487, %v486
        %v509 = vpack.c.bf16 %v489, %v488
        %v510 = vpack.c.bf16 %v491, %v490
        %v511 = vpack.c.bf16 %v493, %v492
        %v512 = vpack.c.bf16 %v495, %v494
        %v513 = vpack.c.bf16 %v497, %v496
        %v514 = vld [vmem:[%s268 + $0x1] sm:$0xff]
        %v515 = vld [vmem:[%s268 + $0x9] sm:$0xff]
        %v516 = vld [vmem:[%s268 + $0x19] sm:$0xff]
        %v517 = vld [vmem:[%s268 + $0x21] sm:$0xff]
        %v518 = vld [vmem:[%s268 + $0x31] sm:$0xff]
        %v519 = vld [vmem:[%s268 + $0x39] sm:$0xff]
        %v520 = vld [vmem:[%s268 + $0x49] sm:$0xff]
        %v521 = vld [vmem:[%s268 + $0x51] sm:$0xff]
        %v522 = vld [vmem:[%s268 + $0x61] sm:$0xff]
        %v523 = vld [vmem:[%s268 + $0x69] sm:$0xff]
        %v524 = vld [vmem:[%s268 + $0x79] sm:$0xff]
        %v525 = vld [vmem:[%s268 + $0x81] sm:$0xff]
        %v526 = vld [vmem:[%s268 + $0x91] sm:$0xff]
        %v527 = vld [vmem:[%s268 + $0x99] sm:$0xff]
        %v528 = vld [vmem:[%s268 + $0xa9] sm:$0xff]
        %v529 = vld [vmem:[%s268 + $0xb1] sm:$0xff]
        %v530 = vld [vmem:[%s268 + $0xc1] sm:$0xff]
        %v531 = vld [vmem:[%s268 + $0xc9] sm:$0xff]
        %v532 = vld [vmem:[%s268 + $0xd9] sm:$0xff]
        %v533 = vld [vmem:[%s268 + $0xe1] sm:$0xff]
        %v534 = vld [vmem:[%s268 + $0xf1] sm:$0xff]
        %v535 = vld [vmem:[%s268 + $0xf9] sm:$0xff]
        %v536 = vld [vmem:[%s268 + $0x109] sm:$0xff]
        %v537 = vld [vmem:[%s268 + $0x111] sm:$0xff]
        %v538 = vld [vmem:[%s268 + $0x121] sm:$0xff]
        %v539 = vld [vmem:[%s268 + $0x129] sm:$0xff]
        %v540 = vld [vmem:[%s268 + $0x139] sm:$0xff]
        %v541 = vld [vmem:[%s268 + $0x141] sm:$0xff]
        %v542 = vld [vmem:[%s268 + $0x151] sm:$0xff]
        %v543 = vld [vmem:[%s268 + $0x159] sm:$0xff]
        %v544 = vld [vmem:[%s268 + $0x169] sm:$0xff]
        %v545 = vld [vmem:[%s268 + $0x171] sm:$0xff]
        %546 = vset.pattern.permute.xlu0 0
        %547 = vperm.xlu0 %546, %v514
        %v548 = vpop.permute.xlu0 %547
        %549 = vset.pattern.permute.xlu0 0
        %550 = vperm.xlu0 %549, %v515
        %v551 = vpop.permute.xlu0 %550
        %552 = vset.pattern.permute.xlu0 0
        %553 = vperm.xlu0 %552, %v516
        %v554 = vpop.permute.xlu0 %553
        %555 = vset.pattern.permute.xlu0 0
        %556 = vperm.xlu0 %555, %v517
        %v557 = vpop.permute.xlu0 %556
        %558 = vset.pattern.permute.xlu0 0
        %559 = vperm.xlu0 %558, %v518
        %v560 = vpop.permute.xlu0 %559
        %561 = vset.pattern.permute.xlu0 0
        %562 = vperm.xlu0 %561, %v519
        %v563 = vpop.permute.xlu0 %562
        %564 = vset.pattern.permute.xlu0 0
        %565 = vperm.xlu0 %564, %v520
        %v566 = vpop.permute.xlu0 %565
        %567 = vset.pattern.permute.xlu0 0
        %568 = vperm.xlu0 %567, %v521
        %v569 = vpop.permute.xlu0 %568
        %570 = vset.pattern.permute.xlu0 0
        %571 = vperm.xlu0 %570, %v522
        %v572 = vpop.permute.xlu0 %571
        %573 = vset.pattern.permute.xlu0 0
        %574 = vperm.xlu0 %573, %v523
        %v575 = vpop.permute.xlu0 %574
        %576 = vset.pattern.permute.xlu0 0
        %577 = vperm.xlu0 %576, %v524
        %v578 = vpop.permute.xlu0 %577
        %579 = vset.pattern.permute.xlu0 0
        %580 = vperm.xlu0 %579, %v525
        %v581 = vpop.permute.xlu0 %580
        %582 = vset.pattern.permute.xlu0 0
        %583 = vperm.xlu0 %582, %v526
        %v584 = vpop.permute.xlu0 %583
        %585 = vset.pattern.permute.xlu0 0
        %586 = vperm.xlu0 %585, %v527
        %v587 = vpop.permute.xlu0 %586
        %588 = vset.pattern.permute.xlu0 0
        %589 = vperm.xlu0 %588, %v528
        %v590 = vpop.permute.xlu0 %589
        %591 = vset.pattern.permute.xlu0 0
        %592 = vperm.xlu0 %591, %v529
        %v593 = vpop.permute.xlu0 %592
        %594 = vset.pattern.permute.xlu0 0
        %595 = vperm.xlu0 %594, %v530
        %v596 = vpop.permute.xlu0 %595
        %597 = vset.pattern.permute.xlu0 0
        %598 = vperm.xlu0 %597, %v531
        %v599 = vpop.permute.xlu0 %598
        %600 = vset.pattern.permute.xlu0 0
        %601 = vperm.xlu0 %600, %v532
        %v602 = vpop.permute.xlu0 %601
        %603 = vset.pattern.permute.xlu0 0
        %604 = vperm.xlu0 %603, %v533
        %v605 = vpop.permute.xlu0 %604
        %606 = vset.pattern.permute.xlu0 0
        %607 = vperm.xlu0 %606, %v534
        %v608 = vpop.permute.xlu0 %607
        %609 = vset.pattern.permute.xlu0 0
        %610 = vperm.xlu0 %609, %v535
        %v611 = vpop.permute.xlu0 %610
        %612 = vset.pattern.permute.xlu0 0
        %613 = vperm.xlu0 %612, %v536
        %v614 = vpop.permute.xlu0 %613
        %615 = vset.pattern.permute.xlu0 0
        %616 = vperm.xlu0 %615, %v537
        %v617 = vpop.permute.xlu0 %616
        %618 = vset.pattern.permute.xlu0 0
        %619 = vperm.xlu0 %618, %v538
        %v620 = vpop.permute.xlu0 %619
        %621 = vset.pattern.permute.xlu0 0
        %622 = vperm.xlu0 %621, %v539
        %v623 = vpop.permute.xlu0 %622
        %624 = vset.pattern.permute.xlu0 0
        %625 = vperm.xlu0 %624, %v540
        %v626 = vpop.permute.xlu0 %625
        %627 = vset.pattern.permute.xlu0 0
        %628 = vperm.xlu0 %627, %v541
        %v629 = vpop.permute.xlu0 %628
        %630 = vset.pattern.permute.xlu0 0
        %631 = vperm.xlu0 %630, %v542
        %v632 = vpop.permute.xlu0 %631
        %633 = vset.pattern.permute.xlu0 0
        %634 = vperm.xlu0 %633, %v543
        %v635 = vpop.permute.xlu0 %634
        %636 = vset.pattern.permute.xlu0 0
        %637 = vperm.xlu0 %636, %v544
        %v638 = vpop.permute.xlu0 %637
        %639 = vset.pattern.permute.xlu0 0
        %640 = vperm.xlu0 %639, %v545
        %v641 = vpop.permute.xlu0 %640
        %vm642 = vcmp.eq.s32.totalorder %v548, %v273
        %vm643 = vcmp.eq.s32.totalorder %v551, %v273
        %vm644 = vcmp.eq.s32.totalorder %v554, %v273
        %vm645 = vcmp.eq.s32.totalorder %v557, %v273
        %vm646 = vcmp.eq.s32.totalorder %v560, %v273
        %vm647 = vcmp.eq.s32.totalorder %v563, %v273
        %vm648 = vcmp.eq.s32.totalorder %v566, %v273
        %vm649 = vcmp.eq.s32.totalorder %v569, %v273
        %vm650 = vcmp.eq.s32.totalorder %v572, %v273
        %vm651 = vcmp.eq.s32.totalorder %v575, %v273
        %vm652 = vcmp.eq.s32.totalorder %v578, %v273
        %vm653 = vcmp.eq.s32.totalorder %v581, %v273
        %vm654 = vcmp.eq.s32.totalorder %v584, %v273
        %vm655 = vcmp.eq.s32.totalorder %v587, %v273
        %vm656 = vcmp.eq.s32.totalorder %v590, %v273
        %vm657 = vcmp.eq.s32.totalorder %v593, %v273
        %vm658 = vcmp.eq.s32.totalorder %v596, %v273
        %vm659 = vcmp.eq.s32.totalorder %v599, %v273
        %vm660 = vcmp.eq.s32.totalorder %v602, %v273
        %vm661 = vcmp.eq.s32.totalorder %v605, %v273
        %vm662 = vcmp.eq.s32.totalorder %v608, %v273
        %vm663 = vcmp.eq.s32.totalorder %v611, %v273
        %vm664 = vcmp.eq.s32.totalorder %v614, %v273
        %vm665 = vcmp.eq.s32.totalorder %v617, %v273
        %vm666 = vcmp.eq.s32.totalorder %v620, %v273
        %vm667 = vcmp.eq.s32.totalorder %v623, %v273
        %vm668 = vcmp.eq.s32.totalorder %v626, %v273
        %vm669 = vcmp.eq.s32.totalorder %v629, %v273
        %vm670 = vcmp.eq.s32.totalorder %v632, %v273
        %vm671 = vcmp.eq.s32.totalorder %v635, %v273
        %vm672 = vcmp.eq.s32.totalorder %v638, %v273
        %vm673 = vcmp.eq.s32.totalorder %v641, %v273
        %v674 = vsel %vm642, 1, 0
        %v675 = vsel %vm643, 1, 0
        %v676 = vsel %vm644, 1, 0
        %v677 = vsel %vm645, 1, 0
        %v678 = vsel %vm646, 1, 0
        %v679 = vsel %vm647, 1, 0
        %v680 = vsel %vm648, 1, 0
        %v681 = vsel %vm649, 1, 0
        %v682 = vsel %vm650, 1, 0
        %v683 = vsel %vm651, 1, 0
        %v684 = vsel %vm652, 1, 0
        %v685 = vsel %vm653, 1, 0
        %v686 = vsel %vm654, 1, 0
        %v687 = vsel %vm655, 1, 0
        %v688 = vsel %vm656, 1, 0
        %v689 = vsel %vm657, 1, 0
        %v690 = vsel %vm658, 1, 0
        %v691 = vsel %vm659, 1, 0
        %v692 = vsel %vm660, 1, 0
        %v693 = vsel %vm661, 1, 0
        %v694 = vsel %vm662, 1, 0
        %v695 = vsel %vm663, 1, 0
        %v696 = vsel %vm664, 1, 0
        %v697 = vsel %vm665, 1, 0
        %v698 = vsel %vm666, 1, 0
        %v699 = vsel %vm667, 1, 0
        %v700 = vsel %vm668, 1, 0
        %v701 = vsel %vm669, 1, 0
        %v702 = vsel %vm670, 1, 0
        %v703 = vsel %vm671, 1, 0
        %v704 = vsel %vm672, 1, 0
        %v705 = vsel %vm673, 1, 0
        %v706 = vcvt.s32.f32 %v674
        %v707 = vcvt.s32.f32 %v675
        %v708 = vcvt.s32.f32 %v676
        %v709 = vcvt.s32.f32 %v677
        %v710 = vcvt.s32.f32 %v678
        %v711 = vcvt.s32.f32 %v679
        %v712 = vcvt.s32.f32 %v680
        %v713 = vcvt.s32.f32 %v681
        %v714 = vcvt.s32.f32 %v682
        %v715 = vcvt.s32.f32 %v683
        %v716 = vcvt.s32.f32 %v684
        %v717 = vcvt.s32.f32 %v685
        %v718 = vcvt.s32.f32 %v686
        %v719 = vcvt.s32.f32 %v687
        %v720 = vcvt.s32.f32 %v688
        %v721 = vcvt.s32.f32 %v689
        %v722 = vcvt.s32.f32 %v690
        %v723 = vcvt.s32.f32 %v691
        %v724 = vcvt.s32.f32 %v692
        %v725 = vcvt.s32.f32 %v693
        %v726 = vcvt.s32.f32 %v694
        %v727 = vcvt.s32.f32 %v695
        %v728 = vcvt.s32.f32 %v696
        %v729 = vcvt.s32.f32 %v697
        %v730 = vcvt.s32.f32 %v698
        %v731 = vcvt.s32.f32 %v699
        %v732 = vcvt.s32.f32 %v700
        %v733 = vcvt.s32.f32 %v701
        %v734 = vcvt.s32.f32 %v702
        %v735 = vcvt.s32.f32 %v703
        %v736 = vcvt.s32.f32 %v704
        %v737 = vcvt.s32.f32 %v705
        %v738 = vpack.c.bf16 %v707, %v706
        %v739 = vpack.c.bf16 %v709, %v708
        %v740 = vpack.c.bf16 %v711, %v710
        %v741 = vpack.c.bf16 %v713, %v712
        %v742 = vpack.c.bf16 %v715, %v714
        %v743 = vpack.c.bf16 %v717, %v716
        %v744 = vpack.c.bf16 %v719, %v718
        %v745 = vpack.c.bf16 %v721, %v720
        %v746 = vpack.c.bf16 %v723, %v722
        %v747 = vpack.c.bf16 %v725, %v724
        %v748 = vpack.c.bf16 %v727, %v726
        %v749 = vpack.c.bf16 %v729, %v728
        %v750 = vpack.c.bf16 %v731, %v730
        %v751 = vpack.c.bf16 %v733, %v732
        %v752 = vpack.c.bf16 %v735, %v734
        %v753 = vpack.c.bf16 %v737, %v736
        %v754 = vld [vmem:[%s268 + $0x2] sm:$0xff]
        %v755 = vld [vmem:[%s268 + $0xa] sm:$0xff]
        %v756 = vld [vmem:[%s268 + $0x1a] sm:$0xff]
        %v757 = vld [vmem:[%s268 + $0x22] sm:$0xff]
        %v758 = vld [vmem:[%s268 + $0x32] sm:$0xff]
        %v759 = vld [vmem:[%s268 + $0x3a] sm:$0xff]
        %v760 = vld [vmem:[%s268 + $0x4a] sm:$0xff]
        %v761 = vld [vmem:[%s268 + $0x52] sm:$0xff]
        %v762 = vld [vmem:[%s268 + $0x62] sm:$0xff]
        %v763 = vld [vmem:[%s268 + $0x6a] sm:$0xff]
        %v764 = vld [vmem:[%s268 + $0x7a] sm:$0xff]
        %v765 = vld [vmem:[%s268 + $0x82] sm:$0xff]
        %v766 = vld [vmem:[%s268 + $0x92] sm:$0xff]
        %v767 = vld [vmem:[%s268 + $0x9a] sm:$0xff]
        %v768 = vld [vmem:[%s268 + $0xaa] sm:$0xff]
        %v769 = vld [vmem:[%s268 + $0xb2] sm:$0xff]
        %v770 = vld [vmem:[%s268 + $0xc2] sm:$0xff]
        %v771 = vld [vmem:[%s268 + $0xca] sm:$0xff]
        %v772 = vld [vmem:[%s268 + $0xda] sm:$0xff]
        %v773 = vld [vmem:[%s268 + $0xe2] sm:$0xff]
        %v774 = vld [vmem:[%s268 + $0xf2] sm:$0xff]
        %v775 = vld [vmem:[%s268 + $0xfa] sm:$0xff]
        %v776 = vld [vmem:[%s268 + $0x10a] sm:$0xff]
        %v777 = vld [vmem:[%s268 + $0x112] sm:$0xff]
        %v778 = vld [vmem:[%s268 + $0x122] sm:$0xff]
        %v779 = vld [vmem:[%s268 + $0x12a] sm:$0xff]
        %v780 = vld [vmem:[%s268 + $0x13a] sm:$0xff]
        %v781 = vld [vmem:[%s268 + $0x142] sm:$0xff]
        %v782 = vld [vmem:[%s268 + $0x152] sm:$0xff]
        %v783 = vld [vmem:[%s268 + $0x15a] sm:$0xff]
        %v784 = vld [vmem:[%s268 + $0x16a] sm:$0xff]
        %v785 = vld [vmem:[%s268 + $0x172] sm:$0xff]
        %786 = vset.pattern.permute.xlu0 0
        %787 = vperm.xlu0 %786, %v754
        %v788 = vpop.permute.xlu0 %787
        %789 = vset.pattern.permute.xlu0 0
        %790 = vperm.xlu0 %789, %v755
        %v791 = vpop.permute.xlu0 %790
        %792 = vset.pattern.permute.xlu0 0
        %793 = vperm.xlu0 %792, %v756
        %v794 = vpop.permute.xlu0 %793
        %795 = vset.pattern.permute.xlu0 0
        %796 = vperm.xlu0 %795, %v757
        %v797 = vpop.permute.xlu0 %796
        %798 = vset.pattern.permute.xlu0 0
        %799 = vperm.xlu0 %798, %v758
        %v800 = vpop.permute.xlu0 %799
        %801 = vset.pattern.permute.xlu0 0
        %802 = vperm.xlu0 %801, %v759
        %v803 = vpop.permute.xlu0 %802
        %804 = vset.pattern.permute.xlu0 0
        %805 = vperm.xlu0 %804, %v760
        %v806 = vpop.permute.xlu0 %805
        %807 = vset.pattern.permute.xlu0 0
        %808 = vperm.xlu0 %807, %v761
        %v809 = vpop.permute.xlu0 %808
        %810 = vset.pattern.permute.xlu0 0
        %811 = vperm.xlu0 %810, %v762
        %v812 = vpop.permute.xlu0 %811
        %813 = vset.pattern.permute.xlu0 0
        %814 = vperm.xlu0 %813, %v763
        %v815 = vpop.permute.xlu0 %814
        %816 = vset.pattern.permute.xlu0 0
        %817 = vperm.xlu0 %816, %v764
        %v818 = vpop.permute.xlu0 %817
        %819 = vset.pattern.permute.xlu0 0
        %820 = vperm.xlu0 %819, %v765
        %v821 = vpop.permute.xlu0 %820
        %822 = vset.pattern.permute.xlu0 0
        %823 = vperm.xlu0 %822, %v766
        %v824 = vpop.permute.xlu0 %823
        %825 = vset.pattern.permute.xlu0 0
        %826 = vperm.xlu0 %825, %v767
        %v827 = vpop.permute.xlu0 %826
        %828 = vset.pattern.permute.xlu0 0
        %829 = vperm.xlu0 %828, %v768
        %v830 = vpop.permute.xlu0 %829
        %831 = vset.pattern.permute.xlu0 0
        %832 = vperm.xlu0 %831, %v769
        %v833 = vpop.permute.xlu0 %832
        %834 = vset.pattern.permute.xlu0 0
        %835 = vperm.xlu0 %834, %v770
        %v836 = vpop.permute.xlu0 %835
        %837 = vset.pattern.permute.xlu0 0
        %838 = vperm.xlu0 %837, %v771
        %v839 = vpop.permute.xlu0 %838
        %840 = vset.pattern.permute.xlu0 0
        %841 = vperm.xlu0 %840, %v772
        %v842 = vpop.permute.xlu0 %841
        %843 = vset.pattern.permute.xlu0 0
        %844 = vperm.xlu0 %843, %v773
        %v845 = vpop.permute.xlu0 %844
        %846 = vset.pattern.permute.xlu0 0
        %847 = vperm.xlu0 %846, %v774
        %v848 = vpop.permute.xlu0 %847
        %849 = vset.pattern.permute.xlu0 0
        %850 = vperm.xlu0 %849, %v775
        %v851 = vpop.permute.xlu0 %850
        %852 = vset.pattern.permute.xlu0 0
        %853 = vperm.xlu0 %852, %v776
        %v854 = vpop.permute.xlu0 %853
        %855 = vset.pattern.permute.xlu0 0
        %856 = vperm.xlu0 %855, %v777
        %v857 = vpop.permute.xlu0 %856
        %858 = vset.pattern.permute.xlu0 0
        %859 = vperm.xlu0 %858, %v778
        %v860 = vpop.permute.xlu0 %859
        %861 = vset.pattern.permute.xlu0 0
        %862 = vperm.xlu0 %861, %v779
        %v863 = vpop.permute.xlu0 %862
        %864 = vset.pattern.permute.xlu0 0
        %865 = vperm.xlu0 %864, %v780
        %v866 = vpop.permute.xlu0 %865
        %867 = vset.pattern.permute.xlu0 0
        %868 = vperm.xlu0 %867, %v781
        %v869 = vpop.permute.xlu0 %868
        %870 = vset.pattern.permute.xlu0 0
        %871 = vperm.xlu0 %870, %v782
        %v872 = vpop.permute.xlu0 %871
        %873 = vset.pattern.permute.xlu0 0
        %874 = vperm.xlu0 %873, %v783
        %v875 = vpop.permute.xlu0 %874
        %876 = vset.pattern.permute.xlu0 0
        %877 = vperm.xlu0 %876, %v784
        %v878 = vpop.permute.xlu0 %877
        %879 = vset.pattern.permute.xlu0 0
        %880 = vperm.xlu0 %879, %v785
        %v881 = vpop.permute.xlu0 %880
        %vm882 = vcmp.eq.s32.totalorder %v788, %v273
        %vm883 = vcmp.eq.s32.totalorder %v791, %v273
        %vm884 = vcmp.eq.s32.totalorder %v794, %v273
        %vm885 = vcmp.eq.s32.totalorder %v797, %v273
        %vm886 = vcmp.eq.s32.totalorder %v800, %v273
        %vm887 = vcmp.eq.s32.totalorder %v803, %v273
        %vm888 = vcmp.eq.s32.totalorder %v806, %v273
        %vm889 = vcmp.eq.s32.totalorder %v809, %v273
        %vm890 = vcmp.eq.s32.totalorder %v812, %v273
        %vm891 = vcmp.eq.s32.totalorder %v815, %v273
        %vm892 = vcmp.eq.s32.totalorder %v818, %v273
        %vm893 = vcmp.eq.s32.totalorder %v821, %v273
        %vm894 = vcmp.eq.s32.totalorder %v824, %v273
        %vm895 = vcmp.eq.s32.totalorder %v827, %v273
        %vm896 = vcmp.eq.s32.totalorder %v830, %v273
        %vm897 = vcmp.eq.s32.totalorder %v833, %v273
        %vm898 = vcmp.eq.s32.totalorder %v836, %v273
        %vm899 = vcmp.eq.s32.totalorder %v839, %v273
        %vm900 = vcmp.eq.s32.totalorder %v842, %v273
        %vm901 = vcmp.eq.s32.totalorder %v845, %v273
        %vm902 = vcmp.eq.s32.totalorder %v848, %v273
        %vm903 = vcmp.eq.s32.totalorder %v851, %v273
        %vm904 = vcmp.eq.s32.totalorder %v854, %v273
        %vm905 = vcmp.eq.s32.totalorder %v857, %v273
        %vm906 = vcmp.eq.s32.totalorder %v860, %v273
        %vm907 = vcmp.eq.s32.totalorder %v863, %v273
        %vm908 = vcmp.eq.s32.totalorder %v866, %v273
        %vm909 = vcmp.eq.s32.totalorder %v869, %v273
        %vm910 = vcmp.eq.s32.totalorder %v872, %v273
        %vm911 = vcmp.eq.s32.totalorder %v875, %v273
        %vm912 = vcmp.eq.s32.totalorder %v878, %v273
        %vm913 = vcmp.eq.s32.totalorder %v881, %v273
        %v914 = vsel %vm882, 1, 0
        %v915 = vsel %vm883, 1, 0
        %v916 = vsel %vm884, 1, 0
        %v917 = vsel %vm885, 1, 0
        %v918 = vsel %vm886, 1, 0
        %v919 = vsel %vm887, 1, 0
        %v920 = vsel %vm888, 1, 0
        %v921 = vsel %vm889, 1, 0
        %v922 = vsel %vm890, 1, 0
        %v923 = vsel %vm891, 1, 0
        %v924 = vsel %vm892, 1, 0
        %v925 = vsel %vm893, 1, 0
        %v926 = vsel %vm894, 1, 0
        %v927 = vsel %vm895, 1, 0
        %v928 = vsel %vm896, 1, 0
        %v929 = vsel %vm897, 1, 0
        %v930 = vsel %vm898, 1, 0
        %v931 = vsel %vm899, 1, 0
        %v932 = vsel %vm900, 1, 0
        %v933 = vsel %vm901, 1, 0
        %v934 = vsel %vm902, 1, 0
        %v935 = vsel %vm903, 1, 0
        %v936 = vsel %vm904, 1, 0
        %v937 = vsel %vm905, 1, 0
        %v938 = vsel %vm906, 1, 0
        %v939 = vsel %vm907, 1, 0
        %v940 = vsel %vm908, 1, 0
        %v941 = vsel %vm909, 1, 0
        %v942 = vsel %vm910, 1, 0
        %v943 = vsel %vm911, 1, 0
        %v944 = vsel %vm912, 1, 0
        %v945 = vsel %vm913, 1, 0
        %v946 = vcvt.s32.f32 %v914
        %v947 = vcvt.s32.f32 %v915
        %v948 = vcvt.s32.f32 %v916
        %v949 = vcvt.s32.f32 %v917
        %v950 = vcvt.s32.f32 %v918
        %v951 = vcvt.s32.f32 %v919
        %v952 = vcvt.s32.f32 %v920
        %v953 = vcvt.s32.f32 %v921
        %v954 = vcvt.s32.f32 %v922
        %v955 = vcvt.s32.f32 %v923
        %v956 = vcvt.s32.f32 %v924
        %v957 = vcvt.s32.f32 %v925
        %v958 = vcvt.s32.f32 %v926
        %v959 = vcvt.s32.f32 %v927
        %v960 = vcvt.s32.f32 %v928
        %v961 = vcvt.s32.f32 %v929
        %v962 = vcvt.s32.f32 %v930
        %v963 = vcvt.s32.f32 %v931
        %v964 = vcvt.s32.f32 %v932
        %v965 = vcvt.s32.f32 %v933
        %v966 = vcvt.s32.f32 %v934
        %v967 = vcvt.s32.f32 %v935
        %v968 = vcvt.s32.f32 %v936
        %v969 = vcvt.s32.f32 %v937
        %v970 = vcvt.s32.f32 %v938
        %v971 = vcvt.s32.f32 %v939
        %v972 = vcvt.s32.f32 %v940
        %v973 = vcvt.s32.f32 %v941
        %v974 = vcvt.s32.f32 %v942
        %v975 = vcvt.s32.f32 %v943
        %v976 = vcvt.s32.f32 %v944
        %v977 = vcvt.s32.f32 %v945
        %v978 = vpack.c.bf16 %v947, %v946
        %v979 = vpack.c.bf16 %v949, %v948
        %v980 = vpack.c.bf16 %v951, %v950
        %v981 = vpack.c.bf16 %v953, %v952
        %v982 = vpack.c.bf16 %v955, %v954
        %v983 = vpack.c.bf16 %v957, %v956
        %v984 = vpack.c.bf16 %v959, %v958
        %v985 = vpack.c.bf16 %v961, %v960
        %v986 = vpack.c.bf16 %v963, %v962
        %v987 = vpack.c.bf16 %v965, %v964
        %v988 = vpack.c.bf16 %v967, %v966
        %v989 = vpack.c.bf16 %v969, %v968
        %v990 = vpack.c.bf16 %v971, %v970
        %v991 = vpack.c.bf16 %v973, %v972
        %v992 = vpack.c.bf16 %v975, %v974
        %v993 = vpack.c.bf16 %v977, %v976
        %v994 = vld [vmem:[%s268 + $0x3] sm:$0xff]
        %v995 = vld [vmem:[%s268 + $0xb] sm:$0xff]
        %v996 = vld [vmem:[%s268 + $0x1b] sm:$0xff]
        %v997 = vld [vmem:[%s268 + $0x23] sm:$0xff]
        %v998 = vld [vmem:[%s268 + $0x33] sm:$0xff]
        %v999 = vld [vmem:[%s268 + $0x3b] sm:$0xff]
        %v1000 = vld [vmem:[%s268 + $0x4b] sm:$0xff]
        %v1001 = vld [vmem:[%s268 + $0x53] sm:$0xff]
        %v1002 = vld [vmem:[%s268 + $0x63] sm:$0xff]
        %v1003 = vld [vmem:[%s268 + $0x6b] sm:$0xff]
        %v1004 = vld [vmem:[%s268 + $0x7b] sm:$0xff]
        %v1005 = vld [vmem:[%s268 + $0x83] sm:$0xff]
        %v1006 = vld [vmem:[%s268 + $0x93] sm:$0xff]
        %v1007 = vld [vmem:[%s268 + $0x9b] sm:$0xff]
        %v1008 = vld [vmem:[%s268 + $0xab] sm:$0xff]
        %v1009 = vld [vmem:[%s268 + $0xb3] sm:$0xff]
        %v1010 = vld [vmem:[%s268 + $0xc3] sm:$0xff]
        %v1011 = vld [vmem:[%s268 + $0xcb] sm:$0xff]
        %v1012 = vld [vmem:[%s268 + $0xdb] sm:$0xff]
        %v1013 = vld [vmem:[%s268 + $0xe3] sm:$0xff]
        %v1014 = vld [vmem:[%s268 + $0xf3] sm:$0xff]
        %v1015 = vld [vmem:[%s268 + $0xfb] sm:$0xff]
        %v1016 = vld [vmem:[%s268 + $0x10b] sm:$0xff]
        %v1017 = vld [vmem:[%s268 + $0x113] sm:$0xff]
        %v1018 = vld [vmem:[%s268 + $0x123] sm:$0xff]
        %v1019 = vld [vmem:[%s268 + $0x12b] sm:$0xff]
        %v1020 = vld [vmem:[%s268 + $0x13b] sm:$0xff]
        %v1021 = vld [vmem:[%s268 + $0x143] sm:$0xff]
        %v1022 = vld [vmem:[%s268 + $0x153] sm:$0xff]
        %v1023 = vld [vmem:[%s268 + $0x15b] sm:$0xff]
        %v1024 = vld [vmem:[%s268 + $0x16b] sm:$0xff]
        %v1025 = vld [vmem:[%s268 + $0x173] sm:$0xff]
        %1026 = vset.pattern.permute.xlu0 0
        %1027 = vperm.xlu0 %1026, %v994
        %v1028 = vpop.permute.xlu0 %1027
        %1029 = vset.pattern.permute.xlu0 0
        %1030 = vperm.xlu0 %1029, %v995
        %v1031 = vpop.permute.xlu0 %1030
        %1032 = vset.pattern.permute.xlu0 0
        %1033 = vperm.xlu0 %1032, %v996
        %v1034 = vpop.permute.xlu0 %1033
        %1035 = vset.pattern.permute.xlu0 0
        %1036 = vperm.xlu0 %1035, %v997
        %v1037 = vpop.permute.xlu0 %1036
        %1038 = vset.pattern.permute.xlu0 0
        %1039 = vperm.xlu0 %1038, %v998
        %v1040 = vpop.permute.xlu0 %1039
        %1041 = vset.pattern.permute.xlu0 0
        %1042 = vperm.xlu0 %1041, %v999
        %v1043 = vpop.permute.xlu0 %1042
        %1044 = vset.pattern.permute.xlu0 0
        %1045 = vperm.xlu0 %1044, %v1000
        %v1046 = vpop.permute.xlu0 %1045
        %1047 = vset.pattern.permute.xlu0 0
        %1048 = vperm.xlu0 %1047, %v1001
        %v1049 = vpop.permute.xlu0 %1048
        %1050 = vset.pattern.permute.xlu0 0
        %1051 = vperm.xlu0 %1050, %v1002
        %v1052 = vpop.permute.xlu0 %1051
        %1053 = vset.pattern.permute.xlu0 0
        %1054 = vperm.xlu0 %1053, %v1003
        %v1055 = vpop.permute.xlu0 %1054
        %1056 = vset.pattern.permute.xlu0 0
        %1057 = vperm.xlu0 %1056, %v1004
        %v1058 = vpop.permute.xlu0 %1057
        %1059 = vset.pattern.permute.xlu0 0
        %1060 = vperm.xlu0 %1059, %v1005
        %v1061 = vpop.permute.xlu0 %1060
        %1062 = vset.pattern.permute.xlu0 0
        %1063 = vperm.xlu0 %1062, %v1006
        %v1064 = vpop.permute.xlu0 %1063
        %1065 = vset.pattern.permute.xlu0 0
        %1066 = vperm.xlu0 %1065, %v1007
        %v1067 = vpop.permute.xlu0 %1066
        %1068 = vset.pattern.permute.xlu0 0
        %1069 = vperm.xlu0 %1068, %v1008
        %v1070 = vpop.permute.xlu0 %1069
        %1071 = vset.pattern.permute.xlu0 0
        %1072 = vperm.xlu0 %1071, %v1009
        %v1073 = vpop.permute.xlu0 %1072
        %1074 = vset.pattern.permute.xlu0 0
        %1075 = vperm.xlu0 %1074, %v1010
        %v1076 = vpop.permute.xlu0 %1075
        %1077 = vset.pattern.permute.xlu0 0
        %1078 = vperm.xlu0 %1077, %v1011
        %v1079 = vpop.permute.xlu0 %1078
        %1080 = vset.pattern.permute.xlu0 0
        %1081 = vperm.xlu0 %1080, %v1012
        %v1082 = vpop.permute.xlu0 %1081
        %1083 = vset.pattern.permute.xlu0 0
        %1084 = vperm.xlu0 %1083, %v1013
        %v1085 = vpop.permute.xlu0 %1084
        %1086 = vset.pattern.permute.xlu0 0
        %1087 = vperm.xlu0 %1086, %v1014
        %v1088 = vpop.permute.xlu0 %1087
        %1089 = vset.pattern.permute.xlu0 0
        %1090 = vperm.xlu0 %1089, %v1015
        %v1091 = vpop.permute.xlu0 %1090
        %1092 = vset.pattern.permute.xlu0 0
        %1093 = vperm.xlu0 %1092, %v1016
        %v1094 = vpop.permute.xlu0 %1093
        %1095 = vset.pattern.permute.xlu0 0
        %1096 = vperm.xlu0 %1095, %v1017
        %v1097 = vpop.permute.xlu0 %1096
        %1098 = vset.pattern.permute.xlu0 0
        %1099 = vperm.xlu0 %1098, %v1018
        %v1100 = vpop.permute.xlu0 %1099
        %1101 = vset.pattern.permute.xlu0 0
        %1102 = vperm.xlu0 %1101, %v1019
        %v1103 = vpop.permute.xlu0 %1102
        %1104 = vset.pattern.permute.xlu0 0
        %1105 = vperm.xlu0 %1104, %v1020
        %v1106 = vpop.permute.xlu0 %1105
        %1107 = vset.pattern.permute.xlu0 0
        %1108 = vperm.xlu0 %1107, %v1021
        %v1109 = vpop.permute.xlu0 %1108
        %1110 = vset.pattern.permute.xlu0 0
        %1111 = vperm.xlu0 %1110, %v1022
        %v1112 = vpop.permute.xlu0 %1111
        %1113 = vset.pattern.permute.xlu0 0
        %1114 = vperm.xlu0 %1113, %v1023
        %v1115 = vpop.permute.xlu0 %1114
        %1116 = vset.pattern.permute.xlu0 0
        %1117 = vperm.xlu0 %1116, %v1024
        %v1118 = vpop.permute.xlu0 %1117
        %1119 = vset.pattern.permute.xlu0 0
        %1120 = vperm.xlu0 %1119, %v1025
        %v1121 = vpop.permute.xlu0 %1120
        %vm1122 = vcmp.eq.s32.totalorder %v1028, %v273
        %vm1123 = vcmp.eq.s32.totalorder %v1031, %v273
        %vm1124 = vcmp.eq.s32.totalorder %v1034, %v273
        %vm1125 = vcmp.eq.s32.totalorder %v1037, %v273
        %vm1126 = vcmp.eq.s32.totalorder %v1040, %v273
        %vm1127 = vcmp.eq.s32.totalorder %v1043, %v273
        %vm1128 = vcmp.eq.s32.totalorder %v1046, %v273
        %vm1129 = vcmp.eq.s32.totalorder %v1049, %v273
        %vm1130 = vcmp.eq.s32.totalorder %v1052, %v273
        %vm1131 = vcmp.eq.s32.totalorder %v1055, %v273
        %vm1132 = vcmp.eq.s32.totalorder %v1058, %v273
        %vm1133 = vcmp.eq.s32.totalorder %v1061, %v273
        %vm1134 = vcmp.eq.s32.totalorder %v1064, %v273
        %vm1135 = vcmp.eq.s32.totalorder %v1067, %v273
        %vm1136 = vcmp.eq.s32.totalorder %v1070, %v273
        %vm1137 = vcmp.eq.s32.totalorder %v1073, %v273
        %vm1138 = vcmp.eq.s32.totalorder %v1076, %v273
        %vm1139 = vcmp.eq.s32.totalorder %v1079, %v273
        %vm1140 = vcmp.eq.s32.totalorder %v1082, %v273
        %vm1141 = vcmp.eq.s32.totalorder %v1085, %v273
        %vm1142 = vcmp.eq.s32.totalorder %v1088, %v273
        %vm1143 = vcmp.eq.s32.totalorder %v1091, %v273
        %vm1144 = vcmp.eq.s32.totalorder %v1094, %v273
        %vm1145 = vcmp.eq.s32.totalorder %v1097, %v273
        %vm1146 = vcmp.eq.s32.totalorder %v1100, %v273
        %vm1147 = vcmp.eq.s32.totalorder %v1103, %v273
        %vm1148 = vcmp.eq.s32.totalorder %v1106, %v273
        %vm1149 = vcmp.eq.s32.totalorder %v1109, %v273
        %vm1150 = vcmp.eq.s32.totalorder %v1112, %v273
        %vm1151 = vcmp.eq.s32.totalorder %v1115, %v273
        %vm1152 = vcmp.eq.s32.totalorder %v1118, %v273
        %vm1153 = vcmp.eq.s32.totalorder %v1121, %v273
        %v1154 = vsel %vm1122, 1, 0
        %v1155 = vsel %vm1123, 1, 0
        %v1156 = vsel %vm1124, 1, 0
        %v1157 = vsel %vm1125, 1, 0
        %v1158 = vsel %vm1126, 1, 0
        %v1159 = vsel %vm1127, 1, 0
        %v1160 = vsel %vm1128, 1, 0
        %v1161 = vsel %vm1129, 1, 0
        %v1162 = vsel %vm1130, 1, 0
        %v1163 = vsel %vm1131, 1, 0
        %v1164 = vsel %vm1132, 1, 0
        %v1165 = vsel %vm1133, 1, 0
        %v1166 = vsel %vm1134, 1, 0
        %v1167 = vsel %vm1135, 1, 0
        %v1168 = vsel %vm1136, 1, 0
        %v1169 = vsel %vm1137, 1, 0
        %v1170 = vsel %vm1138, 1, 0
        %v1171 = vsel %vm1139, 1, 0
        %v1172 = vsel %vm1140, 1, 0
        %v1173 = vsel %vm1141, 1, 0
        %v1174 = vsel %vm1142, 1, 0
        %v1175 = vsel %vm1143, 1, 0
        %v1176 = vsel %vm1144, 1, 0
        %v1177 = vsel %vm1145, 1, 0
        %v1178 = vsel %vm1146, 1, 0
        %v1179 = vsel %vm1147, 1, 0
        %v1180 = vsel %vm1148, 1, 0
        %v1181 = vsel %vm1149, 1, 0
        %v1182 = vsel %vm1150, 1, 0
        %v1183 = vsel %vm1151, 1, 0
        %v1184 = vsel %vm1152, 1, 0
        %v1185 = vsel %vm1153, 1, 0
        %v1186 = vcvt.s32.f32 %v1154
        %v1187 = vcvt.s32.f32 %v1155
        %v1188 = vcvt.s32.f32 %v1156
        %v1189 = vcvt.s32.f32 %v1157
        %v1190 = vcvt.s32.f32 %v1158
        %v1191 = vcvt.s32.f32 %v1159
        %v1192 = vcvt.s32.f32 %v1160
        %v1193 = vcvt.s32.f32 %v1161
        %v1194 = vcvt.s32.f32 %v1162
        %v1195 = vcvt.s32.f32 %v1163
        %v1196 = vcvt.s32.f32 %v1164
        %v1197 = vcvt.s32.f32 %v1165
        %v1198 = vcvt.s32.f32 %v1166
        %v1199 = vcvt.s32.f32 %v1167
        %v1200 = vcvt.s32.f32 %v1168
        %v1201 = vcvt.s32.f32 %v1169
        %v1202 = vcvt.s32.f32 %v1170
        %v1203 = vcvt.s32.f32 %v1171
        %v1204 = vcvt.s32.f32 %v1172
        %v1205 = vcvt.s32.f32 %v1173
        %v1206 = vcvt.s32.f32 %v1174
        %v1207 = vcvt.s32.f32 %v1175
        %v1208 = vcvt.s32.f32 %v1176
        %v1209 = vcvt.s32.f32 %v1177
        %v1210 = vcvt.s32.f32 %v1178
        %v1211 = vcvt.s32.f32 %v1179
        %v1212 = vcvt.s32.f32 %v1180
        %v1213 = vcvt.s32.f32 %v1181
        %v1214 = vcvt.s32.f32 %v1182
        %v1215 = vcvt.s32.f32 %v1183
        %v1216 = vcvt.s32.f32 %v1184
        %v1217 = vcvt.s32.f32 %v1185
        %v1218 = vpack.c.bf16 %v1187, %v1186
        %v1219 = vpack.c.bf16 %v1189, %v1188
        %v1220 = vpack.c.bf16 %v1191, %v1190
        %v1221 = vpack.c.bf16 %v1193, %v1192
        %v1222 = vpack.c.bf16 %v1195, %v1194
        %v1223 = vpack.c.bf16 %v1197, %v1196
        %v1224 = vpack.c.bf16 %v1199, %v1198
        %v1225 = vpack.c.bf16 %v1201, %v1200
        %v1226 = vpack.c.bf16 %v1203, %v1202
        %v1227 = vpack.c.bf16 %v1205, %v1204
        %v1228 = vpack.c.bf16 %v1207, %v1206
        %v1229 = vpack.c.bf16 %v1209, %v1208
        %v1230 = vpack.c.bf16 %v1211, %v1210
        %v1231 = vpack.c.bf16 %v1213, %v1212
        %v1232 = vpack.c.bf16 %v1215, %v1214
        %v1233 = vpack.c.bf16 %v1217, %v1216
        %v1234 = vld [vmem:[%s268 + $0x4] sm:$0xff]
        %v1235 = vld [vmem:[%s268 + $0xc] sm:$0xff]
        %v1236 = vld [vmem:[%s268 + $0x1c] sm:$0xff]
        %v1237 = vld [vmem:[%s268 + $0x24] sm:$0xff]
        %v1238 = vld [vmem:[%s268 + $0x34] sm:$0xff]
        %v1239 = vld [vmem:[%s268 + $0x3c] sm:$0xff]
        %v1240 = vld [vmem:[%s268 + $0x4c] sm:$0xff]
        %v1241 = vld [vmem:[%s268 + $0x54] sm:$0xff]
        %v1242 = vld [vmem:[%s268 + $0x64] sm:$0xff]
        %v1243 = vld [vmem:[%s268 + $0x6c] sm:$0xff]
        %v1244 = vld [vmem:[%s268 + $0x7c] sm:$0xff]
        %v1245 = vld [vmem:[%s268 + $0x84] sm:$0xff]
        %v1246 = vld [vmem:[%s268 + $0x94] sm:$0xff]
        %v1247 = vld [vmem:[%s268 + $0x9c] sm:$0xff]
        %v1248 = vld [vmem:[%s268 + $0xac] sm:$0xff]
        %v1249 = vld [vmem:[%s268 + $0xb4] sm:$0xff]
        %v1250 = vld [vmem:[%s268 + $0xc4] sm:$0xff]
        %v1251 = vld [vmem:[%s268 + $0xcc] sm:$0xff]
        %v1252 = vld [vmem:[%s268 + $0xdc] sm:$0xff]
        %v1253 = vld [vmem:[%s268 + $0xe4] sm:$0xff]
        %v1254 = vld [vmem:[%s268 + $0xf4] sm:$0xff]
        %v1255 = vld [vmem:[%s268 + $0xfc] sm:$0xff]
        %v1256 = vld [vmem:[%s268 + $0x10c] sm:$0xff]
        %v1257 = vld [vmem:[%s268 + $0x114] sm:$0xff]
        %v1258 = vld [vmem:[%s268 + $0x124] sm:$0xff]
        %v1259 = vld [vmem:[%s268 + $0x12c] sm:$0xff]
        %v1260 = vld [vmem:[%s268 + $0x13c] sm:$0xff]
        %v1261 = vld [vmem:[%s268 + $0x144] sm:$0xff]
        %v1262 = vld [vmem:[%s268 + $0x154] sm:$0xff]
        %v1263 = vld [vmem:[%s268 + $0x15c] sm:$0xff]
        %v1264 = vld [vmem:[%s268 + $0x16c] sm:$0xff]
        %v1265 = vld [vmem:[%s268 + $0x174] sm:$0xff]
        %1266 = vset.pattern.permute.xlu0 0
        %1267 = vperm.xlu0 %1266, %v1234
        %v1268 = vpop.permute.xlu0 %1267
        %1269 = vset.pattern.permute.xlu0 0
        %1270 = vperm.xlu0 %1269, %v1235
        %v1271 = vpop.permute.xlu0 %1270
        %1272 = vset.pattern.permute.xlu0 0
        %1273 = vperm.xlu0 %1272, %v1236
        %v1274 = vpop.permute.xlu0 %1273
        %1275 = vset.pattern.permute.xlu0 0
        %1276 = vperm.xlu0 %1275, %v1237
        %v1277 = vpop.permute.xlu0 %1276
        %1278 = vset.pattern.permute.xlu0 0
        %1279 = vperm.xlu0 %1278, %v1238
        %v1280 = vpop.permute.xlu0 %1279
        %1281 = vset.pattern.permute.xlu0 0
        %1282 = vperm.xlu0 %1281, %v1239
        %v1283 = vpop.permute.xlu0 %1282
        %1284 = vset.pattern.permute.xlu0 0
        %1285 = vperm.xlu0 %1284, %v1240
        %v1286 = vpop.permute.xlu0 %1285
        %1287 = vset.pattern.permute.xlu0 0
        %1288 = vperm.xlu0 %1287, %v1241
        %v1289 = vpop.permute.xlu0 %1288
        %1290 = vset.pattern.permute.xlu0 0
        %1291 = vperm.xlu0 %1290, %v1242
        %v1292 = vpop.permute.xlu0 %1291
        %1293 = vset.pattern.permute.xlu0 0
        %1294 = vperm.xlu0 %1293, %v1243
        %v1295 = vpop.permute.xlu0 %1294
        %1296 = vset.pattern.permute.xlu0 0
        %1297 = vperm.xlu0 %1296, %v1244
        %v1298 = vpop.permute.xlu0 %1297
        %1299 = vset.pattern.permute.xlu0 0
        %1300 = vperm.xlu0 %1299, %v1245
        %v1301 = vpop.permute.xlu0 %1300
        %1302 = vset.pattern.permute.xlu0 0
        %1303 = vperm.xlu0 %1302, %v1246
        %v1304 = vpop.permute.xlu0 %1303
        %1305 = vset.pattern.permute.xlu0 0
        %1306 = vperm.xlu0 %1305, %v1247
        %v1307 = vpop.permute.xlu0 %1306
        %1308 = vset.pattern.permute.xlu0 0
        %1309 = vperm.xlu0 %1308, %v1248
        %v1310 = vpop.permute.xlu0 %1309
        %1311 = vset.pattern.permute.xlu0 0
        %1312 = vperm.xlu0 %1311, %v1249
        %v1313 = vpop.permute.xlu0 %1312
        %1314 = vset.pattern.permute.xlu0 0
        %1315 = vperm.xlu0 %1314, %v1250
        %v1316 = vpop.permute.xlu0 %1315
        %1317 = vset.pattern.permute.xlu0 0
        %1318 = vperm.xlu0 %1317, %v1251
        %v1319 = vpop.permute.xlu0 %1318
        %1320 = vset.pattern.permute.xlu0 0
        %1321 = vperm.xlu0 %1320, %v1252
        %v1322 = vpop.permute.xlu0 %1321
        %1323 = vset.pattern.permute.xlu0 0
        %1324 = vperm.xlu0 %1323, %v1253
        %v1325 = vpop.permute.xlu0 %1324
        %1326 = vset.pattern.permute.xlu0 0
        %1327 = vperm.xlu0 %1326, %v1254
        %v1328 = vpop.permute.xlu0 %1327
        %1329 = vset.pattern.permute.xlu0 0
        %1330 = vperm.xlu0 %1329, %v1255
        %v1331 = vpop.permute.xlu0 %1330
        %1332 = vset.pattern.permute.xlu0 0
        %1333 = vperm.xlu0 %1332, %v1256
        %v1334 = vpop.permute.xlu0 %1333
        %1335 = vset.pattern.permute.xlu0 0
        %1336 = vperm.xlu0 %1335, %v1257
        %v1337 = vpop.permute.xlu0 %1336
        %1338 = vset.pattern.permute.xlu0 0
        %1339 = vperm.xlu0 %1338, %v1258
        %v1340 = vpop.permute.xlu0 %1339
        %1341 = vset.pattern.permute.xlu0 0
        %1342 = vperm.xlu0 %1341, %v1259
        %v1343 = vpop.permute.xlu0 %1342
        %1344 = vset.pattern.permute.xlu0 0
        %1345 = vperm.xlu0 %1344, %v1260
        %v1346 = vpop.permute.xlu0 %1345
        %1347 = vset.pattern.permute.xlu0 0
        %1348 = vperm.xlu0 %1347, %v1261
        %v1349 = vpop.permute.xlu0 %1348
        %1350 = vset.pattern.permute.xlu0 0
        %1351 = vperm.xlu0 %1350, %v1262
        %v1352 = vpop.permute.xlu0 %1351
        %1353 = vset.pattern.permute.xlu0 0
        %1354 = vperm.xlu0 %1353, %v1263
        %v1355 = vpop.permute.xlu0 %1354
        %1356 = vset.pattern.permute.xlu0 0
        %1357 = vperm.xlu0 %1356, %v1264
        %v1358 = vpop.permute.xlu0 %1357
        %1359 = vset.pattern.permute.xlu0 0
        %1360 = vperm.xlu0 %1359, %v1265
        %v1361 = vpop.permute.xlu0 %1360
        %vm1362 = vcmp.eq.s32.totalorder %v1268, %v273
        %vm1363 = vcmp.eq.s32.totalorder %v1271, %v273
        %vm1364 = vcmp.eq.s32.totalorder %v1274, %v273
        %vm1365 = vcmp.eq.s32.totalorder %v1277, %v273
        %vm1366 = vcmp.eq.s32.totalorder %v1280, %v273
        %vm1367 = vcmp.eq.s32.totalorder %v1283, %v273
        %vm1368 = vcmp.eq.s32.totalorder %v1286, %v273
        %vm1369 = vcmp.eq.s32.totalorder %v1289, %v273
        %vm1370 = vcmp.eq.s32.totalorder %v1292, %v273
        %vm1371 = vcmp.eq.s32.totalorder %v1295, %v273
        %vm1372 = vcmp.eq.s32.totalorder %v1298, %v273
        %vm1373 = vcmp.eq.s32.totalorder %v1301, %v273
        %vm1374 = vcmp.eq.s32.totalorder %v1304, %v273
        %vm1375 = vcmp.eq.s32.totalorder %v1307, %v273
        %vm1376 = vcmp.eq.s32.totalorder %v1310, %v273
        %vm1377 = vcmp.eq.s32.totalorder %v1313, %v273
        %vm1378 = vcmp.eq.s32.totalorder %v1316, %v273
        %vm1379 = vcmp.eq.s32.totalorder %v1319, %v273
        %vm1380 = vcmp.eq.s32.totalorder %v1322, %v273
        %vm1381 = vcmp.eq.s32.totalorder %v1325, %v273
        %vm1382 = vcmp.eq.s32.totalorder %v1328, %v273
        %vm1383 = vcmp.eq.s32.totalorder %v1331, %v273
        %vm1384 = vcmp.eq.s32.totalorder %v1334, %v273
        %vm1385 = vcmp.eq.s32.totalorder %v1337, %v273
        %vm1386 = vcmp.eq.s32.totalorder %v1340, %v273
        %vm1387 = vcmp.eq.s32.totalorder %v1343, %v273
        %vm1388 = vcmp.eq.s32.totalorder %v1346, %v273
        %vm1389 = vcmp.eq.s32.totalorder %v1349, %v273
        %vm1390 = vcmp.eq.s32.totalorder %v1352, %v273
        %vm1391 = vcmp.eq.s32.totalorder %v1355, %v273
        %vm1392 = vcmp.eq.s32.totalorder %v1358, %v273
        %vm1393 = vcmp.eq.s32.totalorder %v1361, %v273
        %v1394 = vsel %vm1362, 1, 0
        %v1395 = vsel %vm1363, 1, 0
        %v1396 = vsel %vm1364, 1, 0
        %v1397 = vsel %vm1365, 1, 0
        %v1398 = vsel %vm1366, 1, 0
        %v1399 = vsel %vm1367, 1, 0
        %v1400 = vsel %vm1368, 1, 0
        %v1401 = vsel %vm1369, 1, 0
        %v1402 = vsel %vm1370, 1, 0
        %v1403 = vsel %vm1371, 1, 0
        %v1404 = vsel %vm1372, 1, 0
        %v1405 = vsel %vm1373, 1, 0
        %v1406 = vsel %vm1374, 1, 0
        %v1407 = vsel %vm1375, 1, 0
        %v1408 = vsel %vm1376, 1, 0
        %v1409 = vsel %vm1377, 1, 0
        %v1410 = vsel %vm1378, 1, 0
        %v1411 = vsel %vm1379, 1, 0
        %v1412 = vsel %vm1380, 1, 0
        %v1413 = vsel %vm1381, 1, 0
        %v1414 = vsel %vm1382, 1, 0
        %v1415 = vsel %vm1383, 1, 0
        %v1416 = vsel %vm1384, 1, 0
        %v1417 = vsel %vm1385, 1, 0
        %v1418 = vsel %vm1386, 1, 0
        %v1419 = vsel %vm1387, 1, 0
        %v1420 = vsel %vm1388, 1, 0
        %v1421 = vsel %vm1389, 1, 0
        %v1422 = vsel %vm1390, 1, 0
        %v1423 = vsel %vm1391, 1, 0
        %v1424 = vsel %vm1392, 1, 0
        %v1425 = vsel %vm1393, 1, 0
        %v1426 = vcvt.s32.f32 %v1394
        %v1427 = vcvt.s32.f32 %v1395
        %v1428 = vcvt.s32.f32 %v1396
        %v1429 = vcvt.s32.f32 %v1397
        %v1430 = vcvt.s32.f32 %v1398
        %v1431 = vcvt.s32.f32 %v1399
        %v1432 = vcvt.s32.f32 %v1400
        %v1433 = vcvt.s32.f32 %v1401
        %v1434 = vcvt.s32.f32 %v1402
        %v1435 = vcvt.s32.f32 %v1403
        %v1436 = vcvt.s32.f32 %v1404
        %v1437 = vcvt.s32.f32 %v1405
        %v1438 = vcvt.s32.f32 %v1406
        %v1439 = vcvt.s32.f32 %v1407
        %v1440 = vcvt.s32.f32 %v1408
        %v1441 = vcvt.s32.f32 %v1409
        %v1442 = vcvt.s32.f32 %v1410
        %v1443 = vcvt.s32.f32 %v1411
        %v1444 = vcvt.s32.f32 %v1412
        %v1445 = vcvt.s32.f32 %v1413
        %v1446 = vcvt.s32.f32 %v1414
        %v1447 = vcvt.s32.f32 %v1415
        %v1448 = vcvt.s32.f32 %v1416
        %v1449 = vcvt.s32.f32 %v1417
        %v1450 = vcvt.s32.f32 %v1418
        %v1451 = vcvt.s32.f32 %v1419
        %v1452 = vcvt.s32.f32 %v1420
        %v1453 = vcvt.s32.f32 %v1421
        %v1454 = vcvt.s32.f32 %v1422
        %v1455 = vcvt.s32.f32 %v1423
        %v1456 = vcvt.s32.f32 %v1424
        %v1457 = vcvt.s32.f32 %v1425
        %v1458 = vpack.c.bf16 %v1427, %v1426
        %v1459 = vpack.c.bf16 %v1429, %v1428
        %v1460 = vpack.c.bf16 %v1431, %v1430
        %v1461 = vpack.c.bf16 %v1433, %v1432
        %v1462 = vpack.c.bf16 %v1435, %v1434
        %v1463 = vpack.c.bf16 %v1437, %v1436
        %v1464 = vpack.c.bf16 %v1439, %v1438
        %v1465 = vpack.c.bf16 %v1441, %v1440
        %v1466 = vpack.c.bf16 %v1443, %v1442
        %v1467 = vpack.c.bf16 %v1445, %v1444
        %v1468 = vpack.c.bf16 %v1447, %v1446
        %v1469 = vpack.c.bf16 %v1449, %v1448
        %v1470 = vpack.c.bf16 %v1451, %v1450
        %v1471 = vpack.c.bf16 %v1453, %v1452
        %v1472 = vpack.c.bf16 %v1455, %v1454
        %v1473 = vpack.c.bf16 %v1457, %v1456
        %v1474 = vld [vmem:[#allocation2] sm:$0xff]
        %v1475 = vld [vmem:[#allocation2 + $0x8] sm:$0xf]
        %v1476 = vld [vmem:[#allocation2 + $0xc] sm:$0xff]
        %v1477 = vld [vmem:[#allocation2 + $0x14] sm:$0xf]
        %v1478 = vld [vmem:[#allocation2 + $0x18] sm:$0xff]
        %v1479 = vld [vmem:[#allocation2 + $0x20] sm:$0xf]
        %v1480 = vld [vmem:[#allocation2 + $0x24] sm:$0xff]
        %v1481 = vld [vmem:[#allocation2 + $0x2c] sm:$0xf]
        %v1482 = vld [vmem:[#allocation2 + $0x30] sm:$0xff]
        %v1483 = vld [vmem:[#allocation2 + $0x38] sm:$0xf]
        %v1484 = vld [vmem:[#allocation2 + $0x3c] sm:$0xff]
        %v1485 = vld [vmem:[#allocation2 + $0x44] sm:$0xf]
        %v1486 = vld [vmem:[#allocation2 + $0x48] sm:$0xff]
        %v1487 = vld [vmem:[#allocation2 + $0x50] sm:$0xf]
        %v1488 = vld [vmem:[#allocation2 + $0x54] sm:$0xff]
        %v1489 = vld [vmem:[#allocation2 + $0x5c] sm:$0xf]
        %v1490 = vld [vmem:[#allocation2 + $0x60] sm:$0xff]
        %v1491 = vld [vmem:[#allocation2 + $0x68] sm:$0xf]
        %v1492 = vld [vmem:[#allocation2 + $0x6c] sm:$0xff]
        %v1493 = vld [vmem:[#allocation2 + $0x74] sm:$0xf]
        %v1494 = vld [vmem:[#allocation2 + $0x78] sm:$0xff]
        %v1495 = vld [vmem:[#allocation2 + $0x80] sm:$0xf]
        %v1496 = vld [vmem:[#allocation2 + $0x84] sm:$0xff]
        %v1497 = vld [vmem:[#allocation2 + $0x8c] sm:$0xf]
        %v1498 = vld [vmem:[#allocation2 + $0x90] sm:$0xff]
        %v1499 = vld [vmem:[#allocation2 + $0x98] sm:$0xf]
        %v1500 = vld [vmem:[#allocation2 + $0x9c] sm:$0xff]
        %v1501 = vld [vmem:[#allocation2 + $0xa4] sm:$0xf]
        %v1502 = vld [vmem:[#allocation2 + $0xa8] sm:$0xff]
        %v1503 = vld [vmem:[#allocation2 + $0xb0] sm:$0xf]
        %v1504 = vld [vmem:[#allocation2 + $0xb4] sm:$0xff]
        %v1505 = vld [vmem:[#allocation2 + $0xbc] sm:$0xf]
        %v1506 = vld [vmem:[#allocation2 + $0xc0] sm:$0xff]
        %v1507 = vld [vmem:[#allocation2 + $0xc8] sm:$0xf]
        %v1508 = vld [vmem:[#allocation2 + $0xcc] sm:$0xff]
        %v1509 = vld [vmem:[#allocation2 + $0xd4] sm:$0xf]
        %v1510 = vld [vmem:[#allocation2 + $0xd8] sm:$0xff]
        %v1511 = vld [vmem:[#allocation2 + $0xe0] sm:$0xf]
        %v1512 = vld [vmem:[#allocation2 + $0xe4] sm:$0xff]
        %v1513 = vld [vmem:[#allocation2 + $0xec] sm:$0xf]
        %v1514 = vld [vmem:[#allocation2 + $0xf0] sm:$0xff]
        %v1515 = vld [vmem:[#allocation2 + $0xf8] sm:$0xf]
        %v1516 = vld [vmem:[#allocation2 + $0xfc] sm:$0xff]
        %v1517 = vld [vmem:[#allocation2 + $0x104] sm:$0xf]
        %v1518 = vld [vmem:[#allocation2 + $0x108] sm:$0xff]
        %v1519 = vld [vmem:[#allocation2 + $0x110] sm:$0xf]
        %v1520 = vld [vmem:[#allocation2 + $0x114] sm:$0xff]
        %v1521 = vld [vmem:[#allocation2 + $0x11c] sm:$0xf]
        %v1522 = vld [vmem:[#allocation2 + $0x120] sm:$0xff]
        %v1523 = vld [vmem:[#allocation2 + $0x128] sm:$0xf]
        %v1524 = vld [vmem:[#allocation2 + $0x12c] sm:$0xff]
        %v1525 = vld [vmem:[#allocation2 + $0x134] sm:$0xf]
        %v1526 = vld [vmem:[#allocation2 + $0x138] sm:$0xff]
        %v1527 = vld [vmem:[#allocation2 + $0x140] sm:$0xf]
        %v1528 = vld [vmem:[#allocation2 + $0x144] sm:$0xff]
        %v1529 = vld [vmem:[#allocation2 + $0x14c] sm:$0xf]
        %v1530 = vld [vmem:[#allocation2 + $0x150] sm:$0xff]
        %v1531 = vld [vmem:[#allocation2 + $0x158] sm:$0xf]
        %v1532 = vld [vmem:[#allocation2 + $0x15c] sm:$0xff]
        %v1533 = vld [vmem:[#allocation2 + $0x164] sm:$0xf]
        %v1534 = vld [vmem:[#allocation2 + $0x168] sm:$0xff]
        %v1535 = vld [vmem:[#allocation2 + $0x170] sm:$0xf]
        %v1536 = vld [vmem:[#allocation2 + $0x174] sm:$0xff]
        %v1537 = vld [vmem:[#allocation2 + $0x17c] sm:$0xf]
        %v1538 = vld [vmem:[#allocation2 + $0x180] sm:$0xff]
        %v1539 = vld [vmem:[#allocation2 + $0x188] sm:$0xf]
        %v1540 = vld [vmem:[#allocation2 + $0x18c] sm:$0xff]
        %v1541 = vld [vmem:[#allocation2 + $0x194] sm:$0xf]
        %v1542 = vld [vmem:[#allocation2 + $0x198] sm:$0xff]
        %v1543 = vld [vmem:[#allocation2 + $0x1a0] sm:$0xf]
        %v1544 = vld [vmem:[#allocation2 + $0x1a4] sm:$0xff]
        %v1545 = vld [vmem:[#allocation2 + $0x1ac] sm:$0xf]
        %v1546 = vld [vmem:[#allocation2 + $0x1b0] sm:$0xff]
        %v1547 = vld [vmem:[#allocation2 + $0x1b8] sm:$0xf]
        %v1548 = vld [vmem:[#allocation2 + $0x1bc] sm:$0xff]
        %v1549 = vld [vmem:[#allocation2 + $0x1c4] sm:$0xf]
        %v1550 = vld [vmem:[#allocation2 + $0x1c8] sm:$0xff]
        %v1551 = vld [vmem:[#allocation2 + $0x1d0] sm:$0xf]
        %v1552 = vld [vmem:[#allocation2 + $0x1d4] sm:$0xff]
        %v1553 = vld [vmem:[#allocation2 + $0x1dc] sm:$0xf]
        %v1554 = vld [vmem:[#allocation2 + $0x1e0] sm:$0xff]
        %v1555 = vld [vmem:[#allocation2 + $0x1e8] sm:$0xf]
        %v1556 = vld [vmem:[#allocation2 + $0x1ec] sm:$0xff]
        %v1557 = vld [vmem:[#allocation2 + $0x1f4] sm:$0xf]
        %v1558 = vld [vmem:[#allocation2 + $0x1f8] sm:$0xff]
        %v1559 = vld [vmem:[#allocation2 + $0x200] sm:$0xf]
        %v1560 = vld [vmem:[#allocation2 + $0x204] sm:$0xff]
        %v1561 = vld [vmem:[#allocation2 + $0x20c] sm:$0xf]
        %v1562 = vld [vmem:[#allocation2 + $0x210] sm:$0xff]
        %v1563 = vld [vmem:[#allocation2 + $0x218] sm:$0xf]
        %v1564 = vld [vmem:[#allocation2 + $0x21c] sm:$0xff]
        %v1565 = vld [vmem:[#allocation2 + $0x224] sm:$0xf]
        %v1566 = vld [vmem:[#allocation2 + $0x228] sm:$0xff]
        %v1567 = vld [vmem:[#allocation2 + $0x230] sm:$0xf]
        %v1568 = vld [vmem:[#allocation2 + $0x234] sm:$0xff]
        %v1569 = vld [vmem:[#allocation2 + $0x23c] sm:$0xf]
        %v1570 = vld [vmem:[#allocation2 + $0x240] sm:$0xff]
        %v1571 = vld [vmem:[#allocation2 + $0x248] sm:$0xf]
        %v1572 = vld [vmem:[#allocation2 + $0x24c] sm:$0xff]
        %v1573 = vld [vmem:[#allocation2 + $0x254] sm:$0xf]
        %v1574 = vld [vmem:[#allocation2 + $0x258] sm:$0xff]
        %v1575 = vld [vmem:[#allocation2 + $0x260] sm:$0xf]
        %v1576 = vld [vmem:[#allocation2 + $0x264] sm:$0xff]
        %v1577 = vld [vmem:[#allocation2 + $0x26c] sm:$0xf]
        %v1578 = vld [vmem:[#allocation2 + $0x270] sm:$0xff]
        %v1579 = vld [vmem:[#allocation2 + $0x278] sm:$0xf]
        %v1580 = vld [vmem:[#allocation2 + $0x27c] sm:$0xff]
        %v1581 = vld [vmem:[#allocation2 + $0x284] sm:$0xf]
        %v1582 = vld [vmem:[#allocation2 + $0x288] sm:$0xff]
        %v1583 = vld [vmem:[#allocation2 + $0x290] sm:$0xf]
        %v1584 = vld [vmem:[#allocation2 + $0x294] sm:$0xff]
        %v1585 = vld [vmem:[#allocation2 + $0x29c] sm:$0xf]
        %v1586 = vld [vmem:[#allocation2 + $0x2a0] sm:$0xff]
        %v1587 = vld [vmem:[#allocation2 + $0x2a8] sm:$0xf]
        %v1588 = vld [vmem:[#allocation2 + $0x2ac] sm:$0xff]
        %v1589 = vld [vmem:[#allocation2 + $0x2b4] sm:$0xf]
        %v1590 = vld [vmem:[#allocation2 + $0x2b8] sm:$0xff]
        %v1591 = vld [vmem:[#allocation2 + $0x2c0] sm:$0xf]
        %v1592 = vld [vmem:[#allocation2 + $0x2c4] sm:$0xff]
        %v1593 = vld [vmem:[#allocation2 + $0x2cc] sm:$0xf]
        %v1594 = vld [vmem:[#allocation2 + $0x2d0] sm:$0xff]
        %v1595 = vld [vmem:[#allocation2 + $0x2d8] sm:$0xf]
        %v1596 = vld [vmem:[#allocation2 + $0x2dc] sm:$0xff]
        %v1597 = vld [vmem:[#allocation2 + $0x2e4] sm:$0xf]
        %v1598 = vld [vmem:[#allocation2 + $0x2e8] sm:$0xff]
        %v1599 = vld [vmem:[#allocation2 + $0x2f0] sm:$0xf]
        %v1600 = vld [vmem:[#allocation2 + $0x2f4] sm:$0xff]
        %v1601 = vld [vmem:[#allocation2 + $0x2fc] sm:$0xf]
        %v1602 = vld [vmem:[#allocation2 + $0x300] sm:$0xff]
        %v1603 = vld [vmem:[#allocation2 + $0x308] sm:$0xf]
        %v1604 = vld [vmem:[#allocation2 + $0x30c] sm:$0xff]
        %v1605 = vld [vmem:[#allocation2 + $0x314] sm:$0xf]
        %v1606 = vld [vmem:[#allocation2 + $0x318] sm:$0xff]
        %v1607 = vld [vmem:[#allocation2 + $0x320] sm:$0xf]
        %v1608 = vld [vmem:[#allocation2 + $0x324] sm:$0xff]
        %v1609 = vld [vmem:[#allocation2 + $0x32c] sm:$0xf]
        %v1610 = vld [vmem:[#allocation2 + $0x330] sm:$0xff]
        %v1611 = vld [vmem:[#allocation2 + $0x338] sm:$0xf]
        %v1612 = vld [vmem:[#allocation2 + $0x33c] sm:$0xff]
        %v1613 = vld [vmem:[#allocation2 + $0x344] sm:$0xf]
        %v1614 = vld [vmem:[#allocation2 + $0x348] sm:$0xff]
        %v1615 = vld [vmem:[#allocation2 + $0x350] sm:$0xf]
        %v1616 = vld [vmem:[#allocation2 + $0x354] sm:$0xff]
        %v1617 = vld [vmem:[#allocation2 + $0x35c] sm:$0xf]
        %v1618 = vld [vmem:[#allocation2 + $0x360] sm:$0xff]
        %v1619 = vld [vmem:[#allocation2 + $0x368] sm:$0xf]
        %v1620 = vld [vmem:[#allocation2 + $0x36c] sm:$0xff]
        %v1621 = vld [vmem:[#allocation2 + $0x374] sm:$0xf]
        %v1622 = vld [vmem:[#allocation2 + $0x378] sm:$0xff]
        %v1623 = vld [vmem:[#allocation2 + $0x380] sm:$0xf]
        %v1624 = vld [vmem:[#allocation2 + $0x384] sm:$0xff]
        %v1625 = vld [vmem:[#allocation2 + $0x38c] sm:$0xf]
        %v1626 = vld [vmem:[#allocation2 + $0x390] sm:$0xff]
        %v1627 = vld [vmem:[#allocation2 + $0x398] sm:$0xf]
        %v1628 = vld [vmem:[#allocation2 + $0x39c] sm:$0xff]
        %v1629 = vld [vmem:[#allocation2 + $0x3a4] sm:$0xf]
        %v1630 = vld [vmem:[#allocation2 + $0x3a8] sm:$0xff]
        %v1631 = vld [vmem:[#allocation2 + $0x3b0] sm:$0xf]
        %v1632 = vld [vmem:[#allocation2 + $0x3b4] sm:$0xff]
        %v1633 = vld [vmem:[#allocation2 + $0x3bc] sm:$0xf]
        %v1634 = vld [vmem:[%s2] sm:$0x7]
        %v1636 = vlaneseq
        %v1637 = vshrl.u32 %v1636, 7
        %v1638 = vsub.s32 0, %v1637
        %v1639 = vrot.slane %v1634, %v1638
        %v1640 = vlaneseq
        %v1641 = vshrl.u32 %v1640, 7
        %v1642 = vsub.s32 1, %v1641
        %v1643 = vrot.slane %v1634, %v1642
        %v1644 = vlaneseq
        %v1645 = vshrl.u32 %v1644, 7
        %v1646 = vsub.s32 2, %v1645
        %v1647 = vrot.slane %v1634, %v1646
        %v1811 = vunpack.c.l.b16 %v1474
        %v1812 = vunpack.c.h.b16 %v1474
        %v1813 = vunpack.c.l.b16 %v1475
        %v1814 = vunpack.c.l.b16 %v1476
        %v1815 = vunpack.c.h.b16 %v1476
        %v1816 = vunpack.c.l.b16 %v1477
        %v1817 = vunpack.c.l.b16 %v1478
        %v1818 = vunpack.c.h.b16 %v1478
        %v1819 = vunpack.c.l.b16 %v1479
        %v1820 = vunpack.c.l.b16 %v1480
        %v1821 = vunpack.c.h.b16 %v1480
        %v1822 = vunpack.c.l.b16 %v1481
        %v1823 = vunpack.c.l.b16 %v1482
        %v1824 = vunpack.c.h.b16 %v1482
        %v1825 = vunpack.c.l.b16 %v1483
        %v1826 = vunpack.c.l.b16 %v1484
        %v1827 = vunpack.c.h.b16 %v1484
        %v1828 = vunpack.c.l.b16 %v1485
        %v1829 = vunpack.c.l.b16 %v1486
        %v1830 = vunpack.c.h.b16 %v1486
        %v1831 = vunpack.c.l.b16 %v1487
        %v1832 = vunpack.c.l.b16 %v1488
        %v1833 = vunpack.c.h.b16 %v1488
        %v1834 = vunpack.c.l.b16 %v1489
        %v1835 = vunpack.c.l.b16 %v1490
        %v1836 = vunpack.c.h.b16 %v1490
        %v1837 = vunpack.c.l.b16 %v1491
        %v1838 = vunpack.c.l.b16 %v1492
        %v1839 = vunpack.c.h.b16 %v1492
        %v1840 = vunpack.c.l.b16 %v1493
        %v1841 = vunpack.c.l.b16 %v1494
        %v1842 = vunpack.c.h.b16 %v1494
        %v1843 = vunpack.c.l.b16 %v1495
        %v1844 = vunpack.c.l.b16 %v1496
        %v1845 = vunpack.c.h.b16 %v1496
        %v1846 = vunpack.c.l.b16 %v1497
        %v1847 = vunpack.c.l.b16 %v1498
        %v1848 = vunpack.c.h.b16 %v1498
        %v1849 = vunpack.c.l.b16 %v1499
        %v1850 = vunpack.c.l.b16 %v1500
        %v1851 = vunpack.c.h.b16 %v1500
        %v1852 = vunpack.c.l.b16 %v1501
        %v1853 = vunpack.c.l.b16 %v1502
        %v1854 = vunpack.c.h.b16 %v1502
        %v1855 = vunpack.c.l.b16 %v1503
        %v1856 = vunpack.c.l.b16 %v1504
        %v1857 = vunpack.c.h.b16 %v1504
        %v1858 = vunpack.c.l.b16 %v1505
        %v1859 = vunpack.c.l.b16 %v1506
        %v1860 = vunpack.c.h.b16 %v1506
        %v1861 = vunpack.c.l.b16 %v1507
        %v1862 = vunpack.c.l.b16 %v1508
        %v1863 = vunpack.c.h.b16 %v1508
        %v1864 = vunpack.c.l.b16 %v1509
        %v1865 = vunpack.c.l.b16 %v1510
        %v1866 = vunpack.c.h.b16 %v1510
        %v1867 = vunpack.c.l.b16 %v1511
        %v1868 = vunpack.c.l.b16 %v1512
        %v1869 = vunpack.c.h.b16 %v1512
        %v1870 = vunpack.c.l.b16 %v1513
        %v1871 = vunpack.c.l.b16 %v1514
        %v1872 = vunpack.c.h.b16 %v1514
        %v1873 = vunpack.c.l.b16 %v1515
        %v1874 = vunpack.c.l.b16 %v1516
        %v1875 = vunpack.c.h.b16 %v1516
        %v1876 = vunpack.c.l.b16 %v1517
        %v1877 = vunpack.c.l.b16 %v1518
        %v1878 = vunpack.c.h.b16 %v1518
        %v1879 = vunpack.c.l.b16 %v1519
        %v1880 = vunpack.c.l.b16 %v1520
        %v1881 = vunpack.c.h.b16 %v1520
        %v1882 = vunpack.c.l.b16 %v1521
        %v1883 = vunpack.c.l.b16 %v1522
        %v1884 = vunpack.c.h.b16 %v1522
        %v1885 = vunpack.c.l.b16 %v1523
        %v1886 = vunpack.c.l.b16 %v1524
        %v1887 = vunpack.c.h.b16 %v1524
        %v1888 = vunpack.c.l.b16 %v1525
        %v1889 = vunpack.c.l.b16 %v1526
        %v1890 = vunpack.c.h.b16 %v1526
        %v1891 = vunpack.c.l.b16 %v1527
        %v1892 = vunpack.c.l.b16 %v1528
        %v1893 = vunpack.c.h.b16 %v1528
        %v1894 = vunpack.c.l.b16 %v1529
        %v1895 = vunpack.c.l.b16 %v1530
        %v1896 = vunpack.c.h.b16 %v1530
        %v1897 = vunpack.c.l.b16 %v1531
        %v1898 = vunpack.c.l.b16 %v1532
        %v1899 = vunpack.c.h.b16 %v1532
        %v1900 = vunpack.c.l.b16 %v1533
        %v1901 = vunpack.c.l.b16 %v1534
        %v1902 = vunpack.c.h.b16 %v1534
        %v1903 = vunpack.c.l.b16 %v1535
        %v1904 = vunpack.c.l.b16 %v1536
        %v1905 = vunpack.c.h.b16 %v1536
        %v1906 = vunpack.c.l.b16 %v1537
        %v1907 = vunpack.c.l.b16 %v1538
        %v1908 = vunpack.c.h.b16 %v1538
        %v1909 = vunpack.c.l.b16 %v1539
        %v1910 = vunpack.c.l.b16 %v1540
        %v1911 = vunpack.c.h.b16 %v1540
        %v1912 = vunpack.c.l.b16 %v1541
        %v1913 = vunpack.c.l.b16 %v1542
        %v1914 = vunpack.c.h.b16 %v1542
        %v1915 = vunpack.c.l.b16 %v1543
        %v1916 = vunpack.c.l.b16 %v1544
        %v1917 = vunpack.c.h.b16 %v1544
        %v1918 = vunpack.c.l.b16 %v1545
        %v1919 = vunpack.c.l.b16 %v1546
        %v1920 = vunpack.c.h.b16 %v1546
        %v1921 = vunpack.c.l.b16 %v1547
        %v1922 = vunpack.c.l.b16 %v1548
        %v1923 = vunpack.c.h.b16 %v1548
        %v1924 = vunpack.c.l.b16 %v1549
        %v1925 = vunpack.c.l.b16 %v1550
        %v1926 = vunpack.c.h.b16 %v1550
        %v1927 = vunpack.c.l.b16 %v1551
        %v1928 = vunpack.c.l.b16 %v1552
        %v1929 = vunpack.c.h.b16 %v1552
        %v1930 = vunpack.c.l.b16 %v1553
        %v1931 = vunpack.c.l.b16 %v1554
        %v1932 = vunpack.c.h.b16 %v1554
        %v1933 = vunpack.c.l.b16 %v1555
        %v1934 = vunpack.c.l.b16 %v1556
        %v1935 = vunpack.c.h.b16 %v1556
        %v1936 = vunpack.c.l.b16 %v1557
        %v1937 = vunpack.c.l.b16 %v1558
        %v1938 = vunpack.c.h.b16 %v1558
        %v1939 = vunpack.c.l.b16 %v1559
        %v1940 = vunpack.c.l.b16 %v1560
        %v1941 = vunpack.c.h.b16 %v1560
        %v1942 = vunpack.c.l.b16 %v1561
        %v1943 = vunpack.c.l.b16 %v1562
        %v1944 = vunpack.c.h.b16 %v1562
        %v1945 = vunpack.c.l.b16 %v1563
        %v1946 = vunpack.c.l.b16 %v1564
        %v1947 = vunpack.c.h.b16 %v1564
        %v1948 = vunpack.c.l.b16 %v1565
        %v1949 = vunpack.c.l.b16 %v1566
        %v1950 = vunpack.c.h.b16 %v1566
        %v1951 = vunpack.c.l.b16 %v1567
        %v1952 = vunpack.c.l.b16 %v1568
        %v1953 = vunpack.c.h.b16 %v1568
        %v1954 = vunpack.c.l.b16 %v1569
        %v1955 = vunpack.c.l.b16 %v1570
        %v1956 = vunpack.c.h.b16 %v1570
        %v1957 = vunpack.c.l.b16 %v1571
        %v1958 = vunpack.c.l.b16 %v1572
        %v1959 = vunpack.c.h.b16 %v1572
        %v1960 = vunpack.c.l.b16 %v1573
        %v1961 = vunpack.c.l.b16 %v1574
        %v1962 = vunpack.c.h.b16 %v1574
        %v1963 = vunpack.c.l.b16 %v1575
        %v1964 = vunpack.c.l.b16 %v1576
        %v1965 = vunpack.c.h.b16 %v1576
        %v1966 = vunpack.c.l.b16 %v1577
        %v1967 = vunpack.c.l.b16 %v1578
        %v1968 = vunpack.c.h.b16 %v1578
        %v1969 = vunpack.c.l.b16 %v1579
        %v1970 = vunpack.c.l.b16 %v1580
        %v1971 = vunpack.c.h.b16 %v1580
        %v1972 = vunpack.c.l.b16 %v1581
        %v1973 = vunpack.c.l.b16 %v1582
        %v1974 = vunpack.c.h.b16 %v1582
        %v1975 = vunpack.c.l.b16 %v1583
        %v1976 = vunpack.c.l.b16 %v1584
        %v1977 = vunpack.c.h.b16 %v1584
        %v1978 = vunpack.c.l.b16 %v1585
        %v1979 = vunpack.c.l.b16 %v1586
        %v1980 = vunpack.c.h.b16 %v1586
        %v1981 = vunpack.c.l.b16 %v1587
        %v1982 = vunpack.c.l.b16 %v1588
        %v1983 = vunpack.c.h.b16 %v1588
        %v1984 = vunpack.c.l.b16 %v1589
        %v1985 = vunpack.c.l.b16 %v1590
        %v1986 = vunpack.c.h.b16 %v1590
        %v1987 = vunpack.c.l.b16 %v1591
        %v1988 = vunpack.c.l.b16 %v1592
        %v1989 = vunpack.c.h.b16 %v1592
        %v1990 = vunpack.c.l.b16 %v1593
        %v1991 = vunpack.c.l.b16 %v1594
        %v1992 = vunpack.c.h.b16 %v1594
        %v1993 = vunpack.c.l.b16 %v1595
        %v1994 = vunpack.c.l.b16 %v1596
        %v1995 = vunpack.c.h.b16 %v1596
        %v1996 = vunpack.c.l.b16 %v1597
        %v1997 = vunpack.c.l.b16 %v1598
        %v1998 = vunpack.c.h.b16 %v1598
        %v1999 = vunpack.c.l.b16 %v1599
        %v2000 = vunpack.c.l.b16 %v1600
        %v2001 = vunpack.c.h.b16 %v1600
        %v2002 = vunpack.c.l.b16 %v1601
        %v2003 = vunpack.c.l.b16 %v1602
        %v2004 = vunpack.c.h.b16 %v1602
        %v2005 = vunpack.c.l.b16 %v1603
        %v2006 = vunpack.c.l.b16 %v1604
        %v2007 = vunpack.c.h.b16 %v1604
        %v2008 = vunpack.c.l.b16 %v1605
        %v2009 = vunpack.c.l.b16 %v1606
        %v2010 = vunpack.c.h.b16 %v1606
        %v2011 = vunpack.c.l.b16 %v1607
        %v2012 = vunpack.c.l.b16 %v1608
        %v2013 = vunpack.c.h.b16 %v1608
        %v2014 = vunpack.c.l.b16 %v1609
        %v2015 = vunpack.c.l.b16 %v1610
        %v2016 = vunpack.c.h.b16 %v1610
        %v2017 = vunpack.c.l.b16 %v1611
        %v2018 = vunpack.c.l.b16 %v1612
        %v2019 = vunpack.c.h.b16 %v1612
        %v2020 = vunpack.c.l.b16 %v1613
        %v2021 = vunpack.c.l.b16 %v1614
        %v2022 = vunpack.c.h.b16 %v1614
        %v2023 = vunpack.c.l.b16 %v1615
        %v2024 = vunpack.c.l.b16 %v1616
        %v2025 = vunpack.c.h.b16 %v1616
        %v2026 = vunpack.c.l.b16 %v1617
        %v2027 = vunpack.c.l.b16 %v1618
        %v2028 = vunpack.c.h.b16 %v1618
        %v2029 = vunpack.c.l.b16 %v1619
        %v2030 = vunpack.c.l.b16 %v1620
        %v2031 = vunpack.c.h.b16 %v1620
        %v2032 = vunpack.c.l.b16 %v1621
        %v2033 = vunpack.c.l.b16 %v1622
        %v2034 = vunpack.c.h.b16 %v1622
        %v2035 = vunpack.c.l.b16 %v1623
        %v2036 = vunpack.c.l.b16 %v1624
        %v2037 = vunpack.c.h.b16 %v1624
        %v2038 = vunpack.c.l.b16 %v1625
        %v2039 = vunpack.c.l.b16 %v1626
        %v2040 = vunpack.c.h.b16 %v1626
        %v2041 = vunpack.c.l.b16 %v1627
        %v2042 = vunpack.c.l.b16 %v1628
        %v2043 = vunpack.c.h.b16 %v1628
        %v2044 = vunpack.c.l.b16 %v1629
        %v2045 = vunpack.c.l.b16 %v1630
        %v2046 = vunpack.c.h.b16 %v1630
        %v2047 = vunpack.c.l.b16 %v1631
        %v2048 = vunpack.c.l.b16 %v1632
        %v2049 = vunpack.c.h.b16 %v1632
        %v2050 = vunpack.c.l.b16 %v1633
        %v2051 = vpack.c.b16 %v1814, %v1811
        %v2052 = vpack.c.b16 %v1815, %v1812
        %v2053 = vpack.c.b16 %v1816, %v1813
        %v2054 = vpack.c.b16 %v1820, %v1817
        %v2055 = vpack.c.b16 %v1821, %v1818
        %v2056 = vpack.c.b16 %v1822, %v1819
        %v2057 = vpack.c.b16 %v1826, %v1823
        %v2058 = vpack.c.b16 %v1827, %v1824
        %v2059 = vpack.c.b16 %v1828, %v1825
        %v2060 = vpack.c.b16 %v1832, %v1829
        %v2061 = vpack.c.b16 %v1833, %v1830
        %v2062 = vpack.c.b16 %v1834, %v1831
        %v2063 = vpack.c.b16 %v1838, %v1835
        %v2064 = vpack.c.b16 %v1839, %v1836
        %v2065 = vpack.c.b16 %v1840, %v1837
        %v2066 = vpack.c.b16 %v1844, %v1841
        %v2067 = vpack.c.b16 %v1845, %v1842
        %v2068 = vpack.c.b16 %v1846, %v1843
        %v2069 = vpack.c.b16 %v1850, %v1847
        %v2070 = vpack.c.b16 %v1851, %v1848
        %v2071 = vpack.c.b16 %v1852, %v1849
        %v2072 = vpack.c.b16 %v1856, %v1853
        %v2073 = vpack.c.b16 %v1857, %v1854
        %v2074 = vpack.c.b16 %v1858, %v1855
        %v2075 = vpack.c.b16 %v1862, %v1859
        %v2076 = vpack.c.b16 %v1863, %v1860
        %v2077 = vpack.c.b16 %v1864, %v1861
        %v2078 = vpack.c.b16 %v1868, %v1865
        %v2079 = vpack.c.b16 %v1869, %v1866
        %v2080 = vpack.c.b16 %v1870, %v1867
        %v2081 = vpack.c.b16 %v1874, %v1871
        %v2082 = vpack.c.b16 %v1875, %v1872
        %v2083 = vpack.c.b16 %v1876, %v1873
        %v2084 = vpack.c.b16 %v1880, %v1877
        %v2085 = vpack.c.b16 %v1881, %v1878
        %v2086 = vpack.c.b16 %v1882, %v1879
        %v2087 = vpack.c.b16 %v1886, %v1883
        %v2088 = vpack.c.b16 %v1887, %v1884
        %v2089 = vpack.c.b16 %v1888, %v1885
        %v2090 = vpack.c.b16 %v1892, %v1889
        %v2091 = vpack.c.b16 %v1893, %v1890
        %v2092 = vpack.c.b16 %v1894, %v1891
        %v2093 = vpack.c.b16 %v1898, %v1895
        %v2094 = vpack.c.b16 %v1899, %v1896
        %v2095 = vpack.c.b16 %v1900, %v1897
        %v2096 = vpack.c.b16 %v1904, %v1901
        %v2097 = vpack.c.b16 %v1905, %v1902
        %v2098 = vpack.c.b16 %v1906, %v1903
        %v2099 = vpack.c.b16 %v1910, %v1907
        %v2100 = vpack.c.b16 %v1911, %v1908
        %v2101 = vpack.c.b16 %v1912, %v1909
        %v2102 = vpack.c.b16 %v1916, %v1913
        %v2103 = vpack.c.b16 %v1917, %v1914
        %v2104 = vpack.c.b16 %v1918, %v1915
        %v2105 = vpack.c.b16 %v1922, %v1919
        %v2106 = vpack.c.b16 %v1923, %v1920
        %v2107 = vpack.c.b16 %v1924, %v1921
        %v2108 = vpack.c.b16 %v1928, %v1925
        %v2109 = vpack.c.b16 %v1929, %v1926
        %v2110 = vpack.c.b16 %v1930, %v1927
        %v2111 = vpack.c.b16 %v1934, %v1931
        %v2112 = vpack.c.b16 %v1935, %v1932
        %v2113 = vpack.c.b16 %v1936, %v1933
        %v2114 = vpack.c.b16 %v1940, %v1937
        %v2115 = vpack.c.b16 %v1941, %v1938
        %v2116 = vpack.c.b16 %v1942, %v1939
        %v2117 = vpack.c.b16 %v1946, %v1943
        %v2118 = vpack.c.b16 %v1947, %v1944
        %v2119 = vpack.c.b16 %v1948, %v1945
        %v2120 = vpack.c.b16 %v1952, %v1949
        %v2121 = vpack.c.b16 %v1953, %v1950
        %v2122 = vpack.c.b16 %v1954, %v1951
        %v2123 = vpack.c.b16 %v1958, %v1955
        %v2124 = vpack.c.b16 %v1959, %v1956
        %v2125 = vpack.c.b16 %v1960, %v1957
        %v2126 = vpack.c.b16 %v1964, %v1961
        %v2127 = vpack.c.b16 %v1965, %v1962
        %v2128 = vpack.c.b16 %v1966, %v1963
        %v2129 = vpack.c.b16 %v1970, %v1967
        %v2130 = vpack.c.b16 %v1971, %v1968
        %v2131 = vpack.c.b16 %v1972, %v1969
        %v2132 = vpack.c.b16 %v1976, %v1973
        %v2133 = vpack.c.b16 %v1977, %v1974
        %v2134 = vpack.c.b16 %v1978, %v1975
        %v2135 = vpack.c.b16 %v1982, %v1979
        %v2136 = vpack.c.b16 %v1983, %v1980
        %v2137 = vpack.c.b16 %v1984, %v1981
        %v2138 = vpack.c.b16 %v1988, %v1985
        %v2139 = vpack.c.b16 %v1989, %v1986
        %v2140 = vpack.c.b16 %v1990, %v1987
        %v2141 = vpack.c.b16 %v1994, %v1991
        %v2142 = vpack.c.b16 %v1995, %v1992
        %v2143 = vpack.c.b16 %v1996, %v1993
        %v2144 = vpack.c.b16 %v2000, %v1997
        %v2145 = vpack.c.b16 %v2001, %v1998
        %v2146 = vpack.c.b16 %v2002, %v1999
        %v2147 = vpack.c.b16 %v2006, %v2003
        %v2148 = vpack.c.b16 %v2007, %v2004
        %v2149 = vpack.c.b16 %v2008, %v2005
        %v2150 = vpack.c.b16 %v2012, %v2009
        %v2151 = vpack.c.b16 %v2013, %v2010
        %v2152 = vpack.c.b16 %v2014, %v2011
        %v2153 = vpack.c.b16 %v2018, %v2015
        %v2154 = vpack.c.b16 %v2019, %v2016
        %v2155 = vpack.c.b16 %v2020, %v2017
        %v2156 = vpack.c.b16 %v2024, %v2021
        %v2157 = vpack.c.b16 %v2025, %v2022
        %v2158 = vpack.c.b16 %v2026, %v2023
        %v2159 = vpack.c.b16 %v2030, %v2027
        %v2160 = vpack.c.b16 %v2031, %v2028
        %v2161 = vpack.c.b16 %v2032, %v2029
        %v2162 = vpack.c.b16 %v2036, %v2033
        %v2163 = vpack.c.b16 %v2037, %v2034
        %v2164 = vpack.c.b16 %v2038, %v2035
        %v2165 = vpack.c.b16 %v2042, %v2039
        %v2166 = vpack.c.b16 %v2043, %v2040
        %v2167 = vpack.c.b16 %v2044, %v2041
        %v2168 = vpack.c.b16 %v2048, %v2045
        %v2169 = vpack.c.b16 %v2049, %v2046
        %v2170 = vpack.c.b16 %v2050, %v2047
        %2291 = vmatprep.subr.bf16.mxu0 %v2052
        %2292 = vmatpush1.bf16.msra.mxu0 %v2051
        %2293 = vmatprep.subr.bf16.mxu0 %v2055
        %2294 = vmatpush1.bf16.msra.mxu0 %v2054
        %2295 = vmatprep.subr.bf16.mxu0 %v2058
        %2296 = vmatpush1.bf16.msra.mxu0 %v2057
        %2297 = vmatprep.subr.bf16.mxu0 %v2061
        %2298 = vmatpush1.bf16.msra.mxu0 %v2060
        %2299 = vmatprep.subr.bf16.mxu0 %v2064
        %2300 = vmatpush1.bf16.msra.mxu0 %v2063
        %2301 = vmatprep.subr.bf16.mxu0 %v2067
        %2302 = vmatpush1.bf16.msra.mxu0 %v2066
        %2303 = vmatprep.subr.bf16.mxu0 %v2070
        %2304 = vmatpush1.bf16.msra.mxu0 %v2069
        %2305 = vmatprep.subr.bf16.mxu0 %v2073
        %2306 = vmatpush1.bf16.msra.mxu0 %v2072
        %2307 = vmatprep.subr.bf16.mxu0 %v2076
        %2308 = vmatpush1.bf16.msra.mxu0 %v2075
        %2309 = vmatprep.subr.bf16.mxu0 %v2079
        %2310 = vmatpush1.bf16.msra.mxu0 %v2078
        %2311 = vmatprep.subr.bf16.mxu0 %v2082
        %2312 = vmatpush1.bf16.msra.mxu0 %v2081
        %2313 = vmatprep.subr.bf16.mxu0 %v2085
        %2314 = vmatpush1.bf16.msra.mxu0 %v2084
        %2315 = vmatprep.subr.bf16.mxu0 %v2088
        %2316 = vmatpush1.bf16.msra.mxu0 %v2087
        %2317 = vmatprep.subr.bf16.mxu0 %v2091
        %2318 = vmatpush1.bf16.msra.mxu0 %v2090
        %2319 = vmatprep.subr.bf16.mxu0 %v2094
        %2320 = vmatpush1.bf16.msra.mxu0 %v2093
        %2321 = vmatprep.subr.bf16.mxu0 %v2097
        %2322 = vmatpush1.bf16.msra.mxu0 %v2096
        %2323 = vmatprep.mubr.bf16.mxu0 %v738
        %2324 = vmatmul.mubr.bf16.gmra.mrb[0].mxu0 %v498
        %v2325 = vpop.f32.mrb[0].mxu0
        %v2326 = vadd.f32 %v1639, %v2325
        %v2327 = vpop.f32.mrb[0].mxu0
        %v2328 = vadd.f32 %v1643, %v2327
        %v2329 = vpop.f32.mrb[0].mxu0
        %v2330 = vadd.f32 %v1639, %v2329
        %v2331 = vpop.f32.mrb[0].mxu0
        %v2332 = vadd.f32 %v1643, %v2331
        %2333 = vmatprep.mubr.bf16.mxu0 %v739
        %2334 = vmatmul.mubr.bf16.gmra.mrb[0].mxu0 %v499
        %v2335 = vpop.f32.mrb[0].mxu0
        %v2336 = vadd.f32 %v1639, %v2335
        %v2337 = vpop.f32.mrb[0].mxu0
        %v2338 = vadd.f32 %v1643, %v2337
        %v2339 = vpop.f32.mrb[0].mxu0
        %v2340 = vadd.f32 %v1639, %v2339
        %v2341 = vpop.f32.mrb[0].mxu0
        %v2342 = vadd.f32 %v1643, %v2341
        %2343 = vmatprep.mubr.bf16.mxu0 %v740
        %2344 = vmatmul.mubr.bf16.gmra.mrb[0].mxu0 %v500
        %v2345 = vpop.f32.mrb[0].mxu0
        %v2346 = vadd.f32 %v1639, %v2345
        %v2347 = vpop.f32.mrb[0].mxu0
        %v2348 = vadd.f32 %v1643, %v2347
        %v2349 = vpop.f32.mrb[0].mxu0
        %v2350 = vadd.f32 %v1639, %v2349
        %v2351 = vpop.f32.mrb[0].mxu0
        %v2352 = vadd.f32 %v1643, %v2351
        %2353 = vmatprep.mubr.bf16.mxu0 %v741
        %2354 = vmatmul.mubr.bf16.gmra.mrb[0].mxu0 %v501
        %v2355 = vpop.f32.mrb[0].mxu0
        %v2356 = vadd.f32 %v1639, %v2355
        %v2357 = vpop.f32.mrb[0].mxu0
        %v2358 = vadd.f32 %v1643, %v2357
        %v2359 = vpop.f32.mrb[0].mxu0
        %v2360 = vadd.f32 %v1639, %v2359
        %v2361 = vpop.f32.mrb[0].mxu0
        %v2362 = vadd.f32 %v1643, %v2361
        %2363 = vmatprep.mubr.bf16.mxu0 %v742
        %2364 = vmatmul.mubr.bf16.gmra.mrb[0].mxu0 %v502
        %v2365 = vpop.f32.mrb[0].mxu0
        %v2366 = vadd.f32 %v1639, %v2365
        %v2367 = vpop.f32.mrb[0].mxu0
        %v2368 = vadd.f32 %v1643, %v2367
        %v2369 = vpop.f32.mrb[0].mxu0
        %v2370 = vadd.f32 %v1639, %v2369
        %v2371 = vpop.f32.mrb[0].mxu0
        %v2372 = vadd.f32 %v1643, %v2371
        %2373 = vmatprep.mubr.bf16.mxu0 %v743
        %2374 = vmatmul.mubr.bf16.gmra.mrb[0].mxu0 %v503
        %v2375 = vpop.f32.mrb[0].mxu0
        %v2376 = vadd.f32 %v1639, %v2375
        %v2377 = vpop.f32.mrb[0].mxu0
        %v2378 = vadd.f32 %v1643, %v2377
        %v2379 = vpop.f32.mrb[0].mxu0
        %v2380 = vadd.f32 %v1639, %v2379
        %v2381 = vpop.f32.mrb[0].mxu0
        %v2382 = vadd.f32 %v1643, %v2381
        %2383 = vmatprep.mubr.bf16.mxu0 %v744
        %2384 = vmatmul.mubr.bf16.gmra.mrb[0].mxu0 %v504
        %v2385 = vpop.f32.mrb[0].mxu0
        %v2386 = vadd.f32 %v1639, %v2385
        %v2387 = vpop.f32.mrb[0].mxu0
        %v2388 = vadd.f32 %v1643, %v2387
        %v2389 = vpop.f32.mrb[0].mxu0
        %v2390 = vadd.f32 %v1639, %v2389
        %v2391 = vpop.f32.mrb[0].mxu0
        %v2392 = vadd.f32 %v1643, %v2391
        %2393 = vmatprep.mubr.bf16.mxu0 %v745
        %2394 = vmatmul.mubr.bf16.gmra.mrb[0].mxu0 %v505
        %v2395 = vpop.f32.mrb[0].mxu0
        %v2396 = vadd.f32 %v1639, %v2395
        %v2397 = vpop.f32.mrb[0].mxu0
        %v2398 = vadd.f32 %v1643, %v2397
        %v2399 = vpop.f32.mrb[0].mxu0
        %v2400 = vadd.f32 %v1639, %v2399
        %v2401 = vpop.f32.mrb[0].mxu0
        %v2402 = vadd.f32 %v1643, %v2401
        %2403 = vmatprep.mubr.bf16.mxu0 %v746
        %2404 = vmatmul.mubr.bf16.gmra.mrb[0].mxu0 %v506
        %v2405 = vpop.f32.mrb[0].mxu0
        %v2406 = vadd.f32 %v1639, %v2405
        %v2407 = vpop.f32.mrb[0].mxu0
        %v2408 = vadd.f32 %v1643, %v2407
        %v2409 = vpop.f32.mrb[0].mxu0
        %v2410 = vadd.f32 %v1639, %v2409
        %v2411 = vpop.f32.mrb[0].mxu0
        %v2412 = vadd.f32 %v1643, %v2411
        %2413 = vmatprep.mubr.bf16.mxu0 %v747
        %2414 = vmatmul.mubr.bf16.gmra.mrb[0].mxu0 %v507
        %v2415 = vpop.f32.mrb[0].mxu0
        %v2416 = vadd.f32 %v1639, %v2415
        %v2417 = vpop.f32.mrb[0].mxu0
        %v2418 = vadd.f32 %v1643, %v2417
        %v2419 = vpop.f32.mrb[0].mxu0
        %v2420 = vadd.f32 %v1639, %v2419
        %v2421 = vpop.f32.mrb[0].mxu0
        %v2422 = vadd.f32 %v1643, %v2421
        %2423 = vmatprep.mubr.bf16.mxu0 %v748
        %2424 = vmatmul.mubr.bf16.gmra.mrb[0].mxu0 %v508
        %v2425 = vpop.f32.mrb[0].mxu0
        %v2426 = vadd.f32 %v1639, %v2425
        %v2427 = vpop.f32.mrb[0].mxu0
        %v2428 = vadd.f32 %v1643, %v2427
        %v2429 = vpop.f32.mrb[0].mxu0
        %v2430 = vadd.f32 %v1639, %v2429
        %v2431 = vpop.f32.mrb[0].mxu0
        %v2432 = vadd.f32 %v1643, %v2431
        %2433 = vmatprep.mubr.bf16.mxu0 %v749
        %2434 = vmatmul.mubr.bf16.gmra.mrb[0].mxu0 %v509
        %v2435 = vpop.f32.mrb[0].mxu0
        %v2436 = vadd.f32 %v1639, %v2435
        %v2437 = vpop.f32.mrb[0].mxu0
        %v2438 = vadd.f32 %v1643, %v2437
        %v2439 = vpop.f32.mrb[0].mxu0
        %v2440 = vadd.f32 %v1639, %v2439
        %v2441 = vpop.f32.mrb[0].mxu0
        %v2442 = vadd.f32 %v1643, %v2441
        %2443 = vmatprep.mubr.bf16.mxu0 %v750
        %2444 = vmatmul.mubr.bf16.gmra.mrb[0].mxu0 %v510
        %v2445 = vpop.f32.mrb[0].mxu0
        %v2446 = vadd.f32 %v1639, %v2445
        %v2447 = vpop.f32.mrb[0].mxu0
        %v2448 = vadd.f32 %v1643, %v2447
        %v2449 = vpop.f32.mrb[0].mxu0
        %v2450 = vadd.f32 %v1639, %v2449
        %v2451 = vpop.f32.mrb[0].mxu0
        %v2452 = vadd.f32 %v1643, %v2451
        %2453 = vmatprep.mubr.bf16.mxu0 %v751
        %2454 = vmatmul.mubr.bf16.gmra.mrb[0].mxu0 %v511
        %v2455 = vpop.f32.mrb[0].mxu0
        %v2456 = vadd.f32 %v1639, %v2455
        %v2457 = vpop.f32.mrb[0].mxu0
        %v2458 = vadd.f32 %v1643, %v2457
        %v2459 = vpop.f32.mrb[0].mxu0
        %v2460 = vadd.f32 %v1639, %v2459
        %v2461 = vpop.f32.mrb[0].mxu0
        %v2462 = vadd.f32 %v1643, %v2461
        %2463 = vmatprep.mubr.bf16.mxu0 %v752
        %2464 = vmatmul.mubr.bf16.gmra.mrb[0].mxu0 %v512
        %v2465 = vpop.f32.mrb[0].mxu0
        %v2466 = vadd.f32 %v1639, %v2465
        %v2467 = vpop.f32.mrb[0].mxu0
        %v2468 = vadd.f32 %v1643, %v2467
        %v2469 = vpop.f32.mrb[0].mxu0
        %v2470 = vadd.f32 %v1639, %v2469
        %v2471 = vpop.f32.mrb[0].mxu0
        %v2472 = vadd.f32 %v1643, %v2471
        %2473 = vmatprep.mubr.bf16.mxu0 %v753
        %2474 = vmatmul.mubr.bf16.gmra.mrb[0].mxu0 %v513
        %v2475 = vpop.f32.mrb[0].mxu0
        %v2476 = vadd.f32 %v1639, %v2475
        %v2477 = vpop.f32.mrb[0].mxu0
        %v2478 = vadd.f32 %v1643, %v2477
        %v2479 = vpop.f32.mrb[0].mxu0
        %v2480 = vadd.f32 %v1639, %v2479
        %v2481 = vpop.f32.mrb[0].mxu0
        %v2482 = vadd.f32 %v1643, %v2481
        %2483 = vdwg.mxu0
        %2484 = vmatprep.subr.bf16.mxu0 %v2100
        %2485 = vmatpush1.bf16.msra.mxu0 %v2099
        %2486 = vmatprep.subr.bf16.mxu0 %v2103
        %2487 = vmatpush1.bf16.msra.mxu0 %v2102
        %2488 = vmatprep.subr.bf16.mxu0 %v2106
        %2489 = vmatpush1.bf16.msra.mxu0 %v2105
        %2490 = vmatprep.subr.bf16.mxu0 %v2109
        %2491 = vmatpush1.bf16.msra.mxu0 %v2108
        %2492 = vmatprep.subr.bf16.mxu0 %v2112
        %2493 = vmatpush1.bf16.msra.mxu0 %v2111
        %2494 = vmatprep.subr.bf16.mxu0 %v2115
        %2495 = vmatpush1.bf16.msra.mxu0 %v2114
        %2496 = vmatprep.subr.bf16.mxu0 %v2118
        %2497 = vmatpush1.bf16.msra.mxu0 %v2117
        %2498 = vmatprep.subr.bf16.mxu0 %v2121
        %2499 = vmatpush1.bf16.msra.mxu0 %v2120
        %2500 = vmatprep.subr.bf16.mxu0 %v2124
        %2501 = vmatpush1.bf16.msra.mxu0 %v2123
        %2502 = vmatprep.subr.bf16.mxu0 %v2127
        %2503 = vmatpush1.bf16.msra.mxu0 %v2126
        %2504 = vmatprep.subr.bf16.mxu0 %v2130
        %2505 = vmatpush1.bf16.msra.mxu0 %v2129
        %2506 = vmatprep.subr.bf16.mxu0 %v2133
        %2507 = vmatpush1.bf16.msra.mxu0 %v2132
        %2508 = vmatprep.subr.bf16.mxu0 %v2136
        %2509 = vmatpush1.bf16.msra.mxu0 %v2135
        %2510 = vmatprep.subr.bf16.mxu0 %v2139
        %2511 = vmatpush1.bf16.msra.mxu0 %v2138
        %2512 = vmatprep.subr.bf16.mxu0 %v2142
        %2513 = vmatpush1.bf16.msra.mxu0 %v2141
        %2514 = vmatprep.subr.bf16.mxu0 %v2145
        %2515 = vmatpush1.bf16.msra.mxu0 %v2144
        %2516 = vmatprep.mubr.bf16.mxu0 %v1218
        %2517 = vmatmul.mubr.bf16.gmra.mrb[0].mxu0 %v978
        %v2518 = vpop.f32.mrb[0].mxu0
        %v2519 = vadd.f32 %v2326, %v2518
        %v2520 = vpop.f32.mrb[0].mxu0
        %v2521 = vadd.f32 %v2328, %v2520
        %v2522 = vpop.f32.mrb[0].mxu0
        %v2523 = vadd.f32 %v2330, %v2522
        %v2524 = vpop.f32.mrb[0].mxu0
        %v2525 = vadd.f32 %v2332, %v2524
        %2526 = vmatprep.mubr.bf16.mxu0 %v1219
        %2527 = vmatmul.mubr.bf16.gmra.mrb[0].mxu0 %v979
        %v2528 = vpop.f32.mrb[0].mxu0
        %v2529 = vadd.f32 %v2336, %v2528
        %v2530 = vpop.f32.mrb[0].mxu0
        %v2531 = vadd.f32 %v2338, %v2530
        %v2532 = vpop.f32.mrb[0].mxu0
        %v2533 = vadd.f32 %v2340, %v2532
        %v2534 = vpop.f32.mrb[0].mxu0
        %v2535 = vadd.f32 %v2342, %v2534
        %2536 = vmatprep.mubr.bf16.mxu0 %v1220
        %2537 = vmatmul.mubr.bf16.gmra.mrb[0].mxu0 %v980
        %v2538 = vpop.f32.mrb[0].mxu0
        %v2539 = vadd.f32 %v2346, %v2538
        %v2540 = vpop.f32.mrb[0].mxu0
        %v2541 = vadd.f32 %v2348, %v2540
        %v2542 = vpop.f32.mrb[0].mxu0
        %v2543 = vadd.f32 %v2350, %v2542
        %v2544 = vpop.f32.mrb[0].mxu0
        %v2545 = vadd.f32 %v2352, %v2544
        %2546 = vmatprep.mubr.bf16.mxu0 %v1221
        %2547 = vmatmul.mubr.bf16.gmra.mrb[0].mxu0 %v981
        %v2548 = vpop.f32.mrb[0].mxu0
        %v2549 = vadd.f32 %v2356, %v2548
        %v2550 = vpop.f32.mrb[0].mxu0
        %v2551 = vadd.f32 %v2358, %v2550
        %v2552 = vpop.f32.mrb[0].mxu0
        %v2553 = vadd.f32 %v2360, %v2552
        %v2554 = vpop.f32.mrb[0].mxu0
        %v2555 = vadd.f32 %v2362, %v2554
        %2556 = vmatprep.mubr.bf16.mxu0 %v1222
        %2557 = vmatmul.mubr.bf16.gmra.mrb[0].mxu0 %v982
        %v2558 = vpop.f32.mrb[0].mxu0
        %v2559 = vadd.f32 %v2366, %v2558
        %v2560 = vpop.f32.mrb[0].mxu0
        %v2561 = vadd.f32 %v2368, %v2560
        %v2562 = vpop.f32.mrb[0].mxu0
        %v2563 = vadd.f32 %v2370, %v2562
        %v2564 = vpop.f32.mrb[0].mxu0
        %v2565 = vadd.f32 %v2372, %v2564
        %2566 = vmatprep.mubr.bf16.mxu0 %v1223
        %2567 = vmatmul.mubr.bf16.gmra.mrb[0].mxu0 %v983
        %v2568 = vpop.f32.mrb[0].mxu0
        %v2569 = vadd.f32 %v2376, %v2568
        %v2570 = vpop.f32.mrb[0].mxu0
        %v2571 = vadd.f32 %v2378, %v2570
        %v2572 = vpop.f32.mrb[0].mxu0
        %v2573 = vadd.f32 %v2380, %v2572
        %v2574 = vpop.f32.mrb[0].mxu0
        %v2575 = vadd.f32 %v2382, %v2574
        %2576 = vmatprep.mubr.bf16.mxu0 %v1224
        %2577 = vmatmul.mubr.bf16.gmra.mrb[0].mxu0 %v984
        %v2578 = vpop.f32.mrb[0].mxu0
        %v2579 = vadd.f32 %v2386, %v2578
        %v2580 = vpop.f32.mrb[0].mxu0
        %v2581 = vadd.f32 %v2388, %v2580
        %v2582 = vpop.f32.mrb[0].mxu0
        %v2583 = vadd.f32 %v2390, %v2582
        %v2584 = vpop.f32.mrb[0].mxu0
        %v2585 = vadd.f32 %v2392, %v2584
        %2586 = vmatprep.mubr.bf16.mxu0 %v1225
        %2587 = vmatmul.mubr.bf16.gmra.mrb[0].mxu0 %v985
        %v2588 = vpop.f32.mrb[0].mxu0
        %v2589 = vadd.f32 %v2396, %v2588
        %v2590 = vpop.f32.mrb[0].mxu0
        %v2591 = vadd.f32 %v2398, %v2590
        %v2592 = vpop.f32.mrb[0].mxu0
        %v2593 = vadd.f32 %v2400, %v2592
        %v2594 = vpop.f32.mrb[0].mxu0
        %v2595 = vadd.f32 %v2402, %v2594
        %2596 = vmatprep.mubr.bf16.mxu0 %v1226
        %2597 = vmatmul.mubr.bf16.gmra.mrb[0].mxu0 %v986
        %v2598 = vpop.f32.mrb[0].mxu0
        %v2599 = vadd.f32 %v2406, %v2598
        %v2600 = vpop.f32.mrb[0].mxu0
        %v2601 = vadd.f32 %v2408, %v2600
        %v2602 = vpop.f32.mrb[0].mxu0
        %v2603 = vadd.f32 %v2410, %v2602
        %v2604 = vpop.f32.mrb[0].mxu0
        %v2605 = vadd.f32 %v2412, %v2604
        %2606 = vmatprep.mubr.bf16.mxu0 %v1227
        %2607 = vmatmul.mubr.bf16.gmra.mrb[0].mxu0 %v987
        %v2608 = vpop.f32.mrb[0].mxu0
        %v2609 = vadd.f32 %v2416, %v2608
        %v2610 = vpop.f32.mrb[0].mxu0
        %v2611 = vadd.f32 %v2418, %v2610
        %v2612 = vpop.f32.mrb[0].mxu0
        %v2613 = vadd.f32 %v2420, %v2612
        %v2614 = vpop.f32.mrb[0].mxu0
        %v2615 = vadd.f32 %v2422, %v2614
        %2616 = vmatprep.mubr.bf16.mxu0 %v1228
        %2617 = vmatmul.mubr.bf16.gmra.mrb[0].mxu0 %v988
        %v2618 = vpop.f32.mrb[0].mxu0
        %v2619 = vadd.f32 %v2426, %v2618
        %v2620 = vpop.f32.mrb[0].mxu0
        %v2621 = vadd.f32 %v2428, %v2620
        %v2622 = vpop.f32.mrb[0].mxu0
        %v2623 = vadd.f32 %v2430, %v2622
        %v2624 = vpop.f32.mrb[0].mxu0
        %v2625 = vadd.f32 %v2432, %v2624
        %2626 = vmatprep.mubr.bf16.mxu0 %v1229
        %2627 = vmatmul.mubr.bf16.gmra.mrb[0].mxu0 %v989
        %v2628 = vpop.f32.mrb[0].mxu0
        %v2629 = vadd.f32 %v2436, %v2628
        %v2630 = vpop.f32.mrb[0].mxu0
        %v2631 = vadd.f32 %v2438, %v2630
        %v2632 = vpop.f32.mrb[0].mxu0
        %v2633 = vadd.f32 %v2440, %v2632
        %v2634 = vpop.f32.mrb[0].mxu0
        %v2635 = vadd.f32 %v2442, %v2634
        %2636 = vmatprep.mubr.bf16.mxu0 %v1230
        %2637 = vmatmul.mubr.bf16.gmra.mrb[0].mxu0 %v990
        %v2638 = vpop.f32.mrb[0].mxu0
        %v2639 = vadd.f32 %v2446, %v2638
        %v2640 = vpop.f32.mrb[0].mxu0
        %v2641 = vadd.f32 %v2448, %v2640
        %v2642 = vpop.f32.mrb[0].mxu0
        %v2643 = vadd.f32 %v2450, %v2642
        %v2644 = vpop.f32.mrb[0].mxu0
        %v2645 = vadd.f32 %v2452, %v2644
        %2646 = vmatprep.mubr.bf16.mxu0 %v1231
        %2647 = vmatmul.mubr.bf16.gmra.mrb[0].mxu0 %v991
        %v2648 = vpop.f32.mrb[0].mxu0
        %v2649 = vadd.f32 %v2456, %v2648
        %v2650 = vpop.f32.mrb[0].mxu0
        %v2651 = vadd.f32 %v2458, %v2650
        %v2652 = vpop.f32.mrb[0].mxu0
        %v2653 = vadd.f32 %v2460, %v2652
        %v2654 = vpop.f32.mrb[0].mxu0
        %v2655 = vadd.f32 %v2462, %v2654
        %2656 = vmatprep.mubr.bf16.mxu0 %v1232
        %2657 = vmatmul.mubr.bf16.gmra.mrb[0].mxu0 %v992
        %v2658 = vpop.f32.mrb[0].mxu0
        %v2659 = vadd.f32 %v2466, %v2658
        %v2660 = vpop.f32.mrb[0].mxu0
        %v2661 = vadd.f32 %v2468, %v2660
        %v2662 = vpop.f32.mrb[0].mxu0
        %v2663 = vadd.f32 %v2470, %v2662
        %v2664 = vpop.f32.mrb[0].mxu0
        %v2665 = vadd.f32 %v2472, %v2664
        %2666 = vmatprep.mubr.bf16.mxu0 %v1233
        %2667 = vmatmul.mubr.bf16.gmra.mrb[0].mxu0 %v993
        %v2668 = vpop.f32.mrb[0].mxu0
        %v2669 = vadd.f32 %v2476, %v2668
        %v2670 = vpop.f32.mrb[0].mxu0
        %v2671 = vadd.f32 %v2478, %v2670
        %v2672 = vpop.f32.mrb[0].mxu0
        %v2673 = vadd.f32 %v2480, %v2672
        %v2674 = vpop.f32.mrb[0].mxu0
        %v2675 = vadd.f32 %v2482, %v2674
        %2676 = vdwg.mxu0
        %2677 = vmatprep.subr.bf16.mxu0 %v2148
        %2678 = vmatpush1.bf16.msra.mxu0 %v2147
        %2679 = vmatprep.subr.bf16.mxu0 %v2151
        %2680 = vmatpush1.bf16.msra.mxu0 %v2150
        %2681 = vmatprep.subr.bf16.mxu0 %v2154
        %2682 = vmatpush1.bf16.msra.mxu0 %v2153
        %2683 = vmatprep.subr.bf16.mxu0 %v2157
        %2684 = vmatpush1.bf16.msra.mxu0 %v2156
        %2685 = vmatprep.subr.bf16.mxu0 %v2160
        %2686 = vmatpush1.bf16.msra.mxu0 %v2159
        %2687 = vmatprep.subr.bf16.mxu0 %v2163
        %2688 = vmatpush1.bf16.msra.mxu0 %v2162
        %2689 = vmatprep.subr.bf16.mxu0 %v2166
        %2690 = vmatpush1.bf16.msra.mxu0 %v2165
        %2691 = vmatprep.subr.bf16.mxu0 %v2169
        %2692 = vmatpush1.bf16.msra.mxu0 %v2168
        %2693 = vmatprep.subr.bf16.mxu0 0
        %2694 = vmatpush1.bf16.msra.mxu0 0
        %2695 = vmatprep.subr.bf16.mxu0 0
        %2696 = vmatpush1.bf16.msra.mxu0 0
        %2697 = vmatprep.subr.bf16.mxu0 0
        %2698 = vmatpush1.bf16.msra.mxu0 0
        %2699 = vmatprep.subr.bf16.mxu0 0
        %2700 = vmatpush1.bf16.msra.mxu0 0
        %2701 = vmatprep.subr.bf16.mxu0 0
        %2702 = vmatpush1.bf16.msra.mxu0 0
        %2703 = vmatprep.subr.bf16.mxu0 0
        %2704 = vmatpush1.bf16.msra.mxu0 0
        %2705 = vmatprep.subr.bf16.mxu0 0
        %2706 = vmatpush1.bf16.msra.mxu0 0
        %2707 = vmatprep.subr.bf16.mxu0 0
        %2708 = vmatpush1.bf16.msra.mxu0 0
        %2709 = vmatprep.mubr.bf16.mxu0 0
        %2710 = vmatmul.mubr.bf16.gmra.mrb[0].mxu0 %v1458
        %v2711 = vpop.f32.mrb[0].mxu0
        %v2712 = vadd.f32 %v2519, %v2711
        %v2713 = vpop.f32.mrb[0].mxu0
        %v2714 = vadd.f32 %v2521, %v2713
        %v2715 = vpop.f32.mrb[0].mxu0
        %v2716 = vadd.f32 %v2523, %v2715
        %v2717 = vpop.f32.mrb[0].mxu0
        %v2718 = vadd.f32 %v2525, %v2717
        %2719 = vmatprep.mubr.bf16.mxu0 0
        %2720 = vmatmul.mubr.bf16.gmra.mrb[0].mxu0 %v1459
        %v2721 = vpop.f32.mrb[0].mxu0
        %v2722 = vadd.f32 %v2529, %v2721
        %v2723 = vpop.f32.mrb[0].mxu0
        %v2724 = vadd.f32 %v2531, %v2723
        %v2725 = vpop.f32.mrb[0].mxu0
        %v2726 = vadd.f32 %v2533, %v2725
        %v2727 = vpop.f32.mrb[0].mxu0
        %v2728 = vadd.f32 %v2535, %v2727
        %2729 = vmatprep.mubr.bf16.mxu0 0
        %2730 = vmatmul.mubr.bf16.gmra.mrb[0].mxu0 %v1460
        %v2731 = vpop.f32.mrb[0].mxu0
        %v2732 = vadd.f32 %v2539, %v2731
        %v2733 = vpop.f32.mrb[0].mxu0
        %v2734 = vadd.f32 %v2541, %v2733
        %v2735 = vpop.f32.mrb[0].mxu0
        %v2736 = vadd.f32 %v2543, %v2735
        %v2737 = vpop.f32.mrb[0].mxu0
        %v2738 = vadd.f32 %v2545, %v2737
        %2739 = vmatprep.mubr.bf16.mxu0 0
        %2740 = vmatmul.mubr.bf16.gmra.mrb[0].mxu0 %v1461
        %v2741 = vpop.f32.mrb[0].mxu0
        %v2742 = vadd.f32 %v2549, %v2741
        %v2743 = vpop.f32.mrb[0].mxu0
        %v2744 = vadd.f32 %v2551, %v2743
        %v2745 = vpop.f32.mrb[0].mxu0
        %v2746 = vadd.f32 %v2553, %v2745
        %v2747 = vpop.f32.mrb[0].mxu0
        %v2748 = vadd.f32 %v2555, %v2747
        %2749 = vmatprep.mubr.bf16.mxu0 0
        %2750 = vmatmul.mubr.bf16.gmra.mrb[0].mxu0 %v1462
        %v2751 = vpop.f32.mrb[0].mxu0
        %v2752 = vadd.f32 %v2559, %v2751
        %v2753 = vpop.f32.mrb[0].mxu0
        %v2754 = vadd.f32 %v2561, %v2753
        %v2755 = vpop.f32.mrb[0].mxu0
        %v2756 = vadd.f32 %v2563, %v2755
        %v2757 = vpop.f32.mrb[0].mxu0
        %v2758 = vadd.f32 %v2565, %v2757
        %2759 = vmatprep.mubr.bf16.mxu0 0
        %2760 = vmatmul.mubr.bf16.gmra.mrb[0].mxu0 %v1463
        %v2761 = vpop.f32.mrb[0].mxu0
        %v2762 = vadd.f32 %v2569, %v2761
        %v2763 = vpop.f32.mrb[0].mxu0
        %v2764 = vadd.f32 %v2571, %v2763
        %v2765 = vpop.f32.mrb[0].mxu0
        %v2766 = vadd.f32 %v2573, %v2765
        %v2767 = vpop.f32.mrb[0].mxu0
        %v2768 = vadd.f32 %v2575, %v2767
        %2769 = vmatprep.mubr.bf16.mxu0 0
        %2770 = vmatmul.mubr.bf16.gmra.mrb[0].mxu0 %v1464
        %v2771 = vpop.f32.mrb[0].mxu0
        %v2772 = vadd.f32 %v2579, %v2771
        %v2773 = vpop.f32.mrb[0].mxu0
        %v2774 = vadd.f32 %v2581, %v2773
        %v2775 = vpop.f32.mrb[0].mxu0
        %v2776 = vadd.f32 %v2583, %v2775
        %v2777 = vpop.f32.mrb[0].mxu0
        %v2778 = vadd.f32 %v2585, %v2777
        %2779 = vmatprep.mubr.bf16.mxu0 0
        %2780 = vmatmul.mubr.bf16.gmra.mrb[0].mxu0 %v1465
        %v2781 = vpop.f32.mrb[0].mxu0
        %v2782 = vadd.f32 %v2589, %v2781
        %v2783 = vpop.f32.mrb[0].mxu0
        %v2784 = vadd.f32 %v2591, %v2783
        %v2785 = vpop.f32.mrb[0].mxu0
        %v2786 = vadd.f32 %v2593, %v2785
        %v2787 = vpop.f32.mrb[0].mxu0
        %v2788 = vadd.f32 %v2595, %v2787
        %2789 = vmatprep.mubr.bf16.mxu0 0
        %2790 = vmatmul.mubr.bf16.gmra.mrb[0].mxu0 %v1466
        %v2791 = vpop.f32.mrb[0].mxu0
        %v2792 = vadd.f32 %v2599, %v2791
        %v2793 = vpop.f32.mrb[0].mxu0
        %v2794 = vadd.f32 %v2601, %v2793
        %v2795 = vpop.f32.mrb[0].mxu0
        %v2796 = vadd.f32 %v2603, %v2795
        %v2797 = vpop.f32.mrb[0].mxu0
        %v2798 = vadd.f32 %v2605, %v2797
        %2799 = vmatprep.mubr.bf16.mxu0 0
        %2800 = vmatmul.mubr.bf16.gmra.mrb[0].mxu0 %v1467
        %v2801 = vpop.f32.mrb[0].mxu0
        %v2802 = vadd.f32 %v2609, %v2801
        %v2803 = vpop.f32.mrb[0].mxu0
        %v2804 = vadd.f32 %v2611, %v2803
        %v2805 = vpop.f32.mrb[0].mxu0
        %v2806 = vadd.f32 %v2613, %v2805
        %v2807 = vpop.f32.mrb[0].mxu0
        %v2808 = vadd.f32 %v2615, %v2807
        %2809 = vmatprep.mubr.bf16.mxu0 0
        %2810 = vmatmul.mubr.bf16.gmra.mrb[0].mxu0 %v1468
        %v2811 = vpop.f32.mrb[0].mxu0
        %v2812 = vadd.f32 %v2619, %v2811
        %v2813 = vpop.f32.mrb[0].mxu0
        %v2814 = vadd.f32 %v2621, %v2813
        %v2815 = vpop.f32.mrb[0].mxu0
        %v2816 = vadd.f32 %v2623, %v2815
        %v2817 = vpop.f32.mrb[0].mxu0
        %v2818 = vadd.f32 %v2625, %v2817
        %2819 = vmatprep.mubr.bf16.mxu0 0
        %2820 = vmatmul.mubr.bf16.gmra.mrb[0].mxu0 %v1469
        %v2821 = vpop.f32.mrb[0].mxu0
        %v2822 = vadd.f32 %v2629, %v2821
        %v2823 = vpop.f32.mrb[0].mxu0
        %v2824 = vadd.f32 %v2631, %v2823
        %v2825 = vpop.f32.mrb[0].mxu0
        %v2826 = vadd.f32 %v2633, %v2825
        %v2827 = vpop.f32.mrb[0].mxu0
        %v2828 = vadd.f32 %v2635, %v2827
        %2829 = vmatprep.mubr.bf16.mxu0 0
        %2830 = vmatmul.mubr.bf16.gmra.mrb[0].mxu0 %v1470
        %v2831 = vpop.f32.mrb[0].mxu0
        %v2832 = vadd.f32 %v2639, %v2831
        %v2833 = vpop.f32.mrb[0].mxu0
        %v2834 = vadd.f32 %v2641, %v2833
        %v2835 = vpop.f32.mrb[0].mxu0
        %v2836 = vadd.f32 %v2643, %v2835
        %v2837 = vpop.f32.mrb[0].mxu0
        %v2838 = vadd.f32 %v2645, %v2837
        %2839 = vmatprep.mubr.bf16.mxu0 0
        %2840 = vmatmul.mubr.bf16.gmra.mrb[0].mxu0 %v1471
        %v2841 = vpop.f32.mrb[0].mxu0
        %v2842 = vadd.f32 %v2649, %v2841
        %v2843 = vpop.f32.mrb[0].mxu0
        %v2844 = vadd.f32 %v2651, %v2843
        %v2845 = vpop.f32.mrb[0].mxu0
        %v2846 = vadd.f32 %v2653, %v2845
        %v2847 = vpop.f32.mrb[0].mxu0
        %v2848 = vadd.f32 %v2655, %v2847
        %2849 = vmatprep.mubr.bf16.mxu0 0
        %2850 = vmatmul.mubr.bf16.gmra.mrb[0].mxu0 %v1472
        %v2851 = vpop.f32.mrb[0].mxu0
        %v2852 = vadd.f32 %v2659, %v2851
        %v2853 = vpop.f32.mrb[0].mxu0
        %v2854 = vadd.f32 %v2661, %v2853
        %v2855 = vpop.f32.mrb[0].mxu0
        %v2856 = vadd.f32 %v2663, %v2855
        %v2857 = vpop.f32.mrb[0].mxu0
        %v2858 = vadd.f32 %v2665, %v2857
        %2859 = vmatprep.mubr.bf16.mxu0 0
        %2860 = vmatmul.mubr.bf16.gmra.mrb[0].mxu0 %v1473
        %v2861 = vpop.f32.mrb[0].mxu0
        %v2862 = vadd.f32 %v2669, %v2861
        %v2863 = vpop.f32.mrb[0].mxu0
        %v2864 = vadd.f32 %v2671, %v2863
        %v2865 = vpop.f32.mrb[0].mxu0
        %v2866 = vadd.f32 %v2673, %v2865
        %v2867 = vpop.f32.mrb[0].mxu0
        %v2868 = vadd.f32 %v2675, %v2867
        %2869 = vdwg.mxu0
        %2870 = vmatprep.subr.bf16.mxu0 0
        %2871 = vmatpush1.bf16.msra.mxu0 %v2053
        %2872 = vmatprep.subr.bf16.mxu0 0
        %2873 = vmatpush1.bf16.msra.mxu0 %v2056
        %2874 = vmatprep.subr.bf16.mxu0 0
        %2875 = vmatpush1.bf16.msra.mxu0 %v2059
        %2876 = vmatprep.subr.bf16.mxu0 0
        %2877 = vmatpush1.bf16.msra.mxu0 %v2062
        %2878 = vmatprep.subr.bf16.mxu0 0
        %2879 = vmatpush1.bf16.msra.mxu0 %v2065
        %2880 = vmatprep.subr.bf16.mxu0 0
        %2881 = vmatpush1.bf16.msra.mxu0 %v2068
        %2882 = vmatprep.subr.bf16.mxu0 0
        %2883 = vmatpush1.bf16.msra.mxu0 %v2071
        %2884 = vmatprep.subr.bf16.mxu0 0
        %2885 = vmatpush1.bf16.msra.mxu0 %v2074
        %2886 = vmatprep.subr.bf16.mxu0 0
        %2887 = vmatpush1.bf16.msra.mxu0 %v2077
        %2888 = vmatprep.subr.bf16.mxu0 0
        %2889 = vmatpush1.bf16.msra.mxu0 %v2080
        %2890 = vmatprep.subr.bf16.mxu0 0
        %2891 = vmatpush1.bf16.msra.mxu0 %v2083
        %2892 = vmatprep.subr.bf16.mxu0 0
        %2893 = vmatpush1.bf16.msra.mxu0 %v2086
        %2894 = vmatprep.subr.bf16.mxu0 0
        %2895 = vmatpush1.bf16.msra.mxu0 %v2089
        %2896 = vmatprep.subr.bf16.mxu0 0
        %2897 = vmatpush1.bf16.msra.mxu0 %v2092
        %2898 = vmatprep.subr.bf16.mxu0 0
        %2899 = vmatpush1.bf16.msra.mxu0 %v2095
        %2900 = vmatprep.subr.bf16.mxu0 0
        %2901 = vmatpush1.bf16.msra.mxu0 %v2098
        %2902 = vmatprep.mubr.bf16.mxu0 %v738
        %2903 = vmatmul.mubr.bf16.gmra.mrb[0].mxu0 %v498
        %v2904 = vpop.f32.mrb[0].mxu0
        %v2905 = vadd.f32 %v1647, %v2904
        %v2906 = vpop.f32.mrb[0].mxu0
        %v2907 = vpop.f32.mrb[0].mxu0
        %v2908 = vadd.f32 %v1647, %v2907
        %v2909 = vpop.f32.mrb[0].mxu0
        %2910 = vmatprep.mubr.bf16.mxu0 %v739
        %2911 = vmatmul.mubr.bf16.gmra.mrb[0].mxu0 %v499
        %v2912 = vpop.f32.mrb[0].mxu0
        %v2913 = vadd.f32 %v1647, %v2912
        %v2914 = vpop.f32.mrb[0].mxu0
        %v2915 = vpop.f32.mrb[0].mxu0
        %v2916 = vadd.f32 %v1647, %v2915
        %v2917 = vpop.f32.mrb[0].mxu0
        %2918 = vmatprep.mubr.bf16.mxu0 %v740
        %2919 = vmatmul.mubr.bf16.gmra.mrb[0].mxu0 %v500
        %v2920 = vpop.f32.mrb[0].mxu0
        %v2921 = vadd.f32 %v1647, %v2920
        %v2922 = vpop.f32.mrb[0].mxu0
        %v2923 = vpop.f32.mrb[0].mxu0
        %v2924 = vadd.f32 %v1647, %v2923
        %v2925 = vpop.f32.mrb[0].mxu0
        %2926 = vmatprep.mubr.bf16.mxu0 %v741
        %2927 = vmatmul.mubr.bf16.gmra.mrb[0].mxu0 %v501
        %v2928 = vpop.f32.mrb[0].mxu0
        %v2929 = vadd.f32 %v1647, %v2928
        %v2930 = vpop.f32.mrb[0].mxu0
        %v2931 = vpop.f32.mrb[0].mxu0
        %v2932 = vadd.f32 %v1647, %v2931
        %v2933 = vpop.f32.mrb[0].mxu0
        %2934 = vmatprep.mubr.bf16.mxu0 %v742
        %2935 = vmatmul.mubr.bf16.gmra.mrb[0].mxu0 %v502
        %v2936 = vpop.f32.mrb[0].mxu0
        %v2937 = vadd.f32 %v1647, %v2936
        %v2938 = vpop.f32.mrb[0].mxu0
        %v2939 = vpop.f32.mrb[0].mxu0
        %v2940 = vadd.f32 %v1647, %v2939
        %v2941 = vpop.f32.mrb[0].mxu0
        %2942 = vmatprep.mubr.bf16.mxu0 %v743
        %2943 = vmatmul.mubr.bf16.gmra.mrb[0].mxu0 %v503
        %v2944 = vpop.f32.mrb[0].mxu0
        %v2945 = vadd.f32 %v1647, %v2944
        %v2946 = vpop.f32.mrb[0].mxu0
        %v2947 = vpop.f32.mrb[0].mxu0
        %v2948 = vadd.f32 %v1647, %v2947
        %v2949 = vpop.f32.mrb[0].mxu0
        %2950 = vmatprep.mubr.bf16.mxu0 %v744
        %2951 = vmatmul.mubr.bf16.gmra.mrb[0].mxu0 %v504
        %v2952 = vpop.f32.mrb[0].mxu0
        %v2953 = vadd.f32 %v1647, %v2952
        %v2954 = vpop.f32.mrb[0].mxu0
        %v2955 = vpop.f32.mrb[0].mxu0
        %v2956 = vadd.f32 %v1647, %v2955
        %v2957 = vpop.f32.mrb[0].mxu0
        %2958 = vmatprep.mubr.bf16.mxu0 %v745
        %2959 = vmatmul.mubr.bf16.gmra.mrb[0].mxu0 %v505
        %v2960 = vpop.f32.mrb[0].mxu0
        %v2961 = vadd.f32 %v1647, %v2960
        %v2962 = vpop.f32.mrb[0].mxu0
        %v2963 = vpop.f32.mrb[0].mxu0
        %v2964 = vadd.f32 %v1647, %v2963
        %v2965 = vpop.f32.mrb[0].mxu0
        %2966 = vmatprep.mubr.bf16.mxu0 %v746
        %2967 = vmatmul.mubr.bf16.gmra.mrb[0].mxu0 %v506
        %v2968 = vpop.f32.mrb[0].mxu0
        %v2969 = vadd.f32 %v1647, %v2968
        %v2970 = vpop.f32.mrb[0].mxu0
        %v2971 = vpop.f32.mrb[0].mxu0
        %v2972 = vadd.f32 %v1647, %v2971
        %v2973 = vpop.f32.mrb[0].mxu0
        %2974 = vmatprep.mubr.bf16.mxu0 %v747
        %2975 = vmatmul.mubr.bf16.gmra.mrb[0].mxu0 %v507
        %v2976 = vpop.f32.mrb[0].mxu0
        %v2977 = vadd.f32 %v1647, %v2976
        %v2978 = vpop.f32.mrb[0].mxu0
        %v2979 = vpop.f32.mrb[0].mxu0
        %v2980 = vadd.f32 %v1647, %v2979
        %v2981 = vpop.f32.mrb[0].mxu0
        %2982 = vmatprep.mubr.bf16.mxu0 %v748
        %2983 = vmatmul.mubr.bf16.gmra.mrb[0].mxu0 %v508
        %v2984 = vpop.f32.mrb[0].mxu0
        %v2985 = vadd.f32 %v1647, %v2984
        %v2986 = vpop.f32.mrb[0].mxu0
        %v2987 = vpop.f32.mrb[0].mxu0
        %v2988 = vadd.f32 %v1647, %v2987
        %v2989 = vpop.f32.mrb[0].mxu0
        %2990 = vmatprep.mubr.bf16.mxu0 %v749
        %2991 = vmatmul.mubr.bf16.gmra.mrb[0].mxu0 %v509
        %v2992 = vpop.f32.mrb[0].mxu0
        %v2993 = vadd.f32 %v1647, %v2992
        %v2994 = vpop.f32.mrb[0].mxu0
        %v2995 = vpop.f32.mrb[0].mxu0
        %v2996 = vadd.f32 %v1647, %v2995
        %v2997 = vpop.f32.mrb[0].mxu0
        %2998 = vmatprep.mubr.bf16.mxu0 %v750
        %2999 = vmatmul.mubr.bf16.gmra.mrb[0].mxu0 %v510
        %v3000 = vpop.f32.mrb[0].mxu0
        %v3001 = vadd.f32 %v1647, %v3000
        %v3002 = vpop.f32.mrb[0].mxu0
        %v3003 = vpop.f32.mrb[0].mxu0
        %v3004 = vadd.f32 %v1647, %v3003
        %v3005 = vpop.f32.mrb[0].mxu0
        %3006 = vmatprep.mubr.bf16.mxu0 %v751
        %3007 = vmatmul.mubr.bf16.gmra.mrb[0].mxu0 %v511
        %v3008 = vpop.f32.mrb[0].mxu0
        %v3009 = vadd.f32 %v1647, %v3008
        %v3010 = vpop.f32.mrb[0].mxu0
        %v3011 = vpop.f32.mrb[0].mxu0
        %v3012 = vadd.f32 %v1647, %v3011
        %v3013 = vpop.f32.mrb[0].mxu0
        %3014 = vmatprep.mubr.bf16.mxu0 %v752
        %3015 = vmatmul.mubr.bf16.gmra.mrb[0].mxu0 %v512
        %v3016 = vpop.f32.mrb[0].mxu0
        %v3017 = vadd.f32 %v1647, %v3016
        %v3018 = vpop.f32.mrb[0].mxu0
        %v3019 = vpop.f32.mrb[0].mxu0
        %v3020 = vadd.f32 %v1647, %v3019
        %v3021 = vpop.f32.mrb[0].mxu0
        %3022 = vmatprep.mubr.bf16.mxu0 %v753
        %3023 = vmatmul.mubr.bf16.gmra.mrb[0].mxu0 %v513
        %v3024 = vpop.f32.mrb[0].mxu0
        %v3025 = vadd.f32 %v1647, %v3024
        %v3026 = vpop.f32.mrb[0].mxu0
        %v3027 = vpop.f32.mrb[0].mxu0
        %v3028 = vadd.f32 %v1647, %v3027
        %v3029 = vpop.f32.mrb[0].mxu0
        %3030 = vdwg.mxu0
        %3031 = vmatprep.subr.bf16.mxu0 0
        %3032 = vmatpush1.bf16.msra.mxu0 %v2101
        %3033 = vmatprep.subr.bf16.mxu0 0
        %3034 = vmatpush1.bf16.msra.mxu0 %v2104
        %3035 = vmatprep.subr.bf16.mxu0 0
        %3036 = vmatpush1.bf16.msra.mxu0 %v2107
        %3037 = vmatprep.subr.bf16.mxu0 0
        %3038 = vmatpush1.bf16.msra.mxu0 %v2110
        %3039 = vmatprep.subr.bf16.mxu0 0
        %3040 = vmatpush1.bf16.msra.mxu0 %v2113
        %3041 = vmatprep.subr.bf16.mxu0 0
        %3042 = vmatpush1.bf16.msra.mxu0 %v2116
        %3043 = vmatprep.subr.bf16.mxu0 0
        %3044 = vmatpush1.bf16.msra.mxu0 %v2119
        %3045 = vmatprep.subr.bf16.mxu0 0
        %3046 = vmatpush1.bf16.msra.mxu0 %v2122
        %3047 = vmatprep.subr.bf16.mxu0 0
        %3048 = vmatpush1.bf16.msra.mxu0 %v2125
        %3049 = vmatprep.subr.bf16.mxu0 0
        %3050 = vmatpush1.bf16.msra.mxu0 %v2128
        %3051 = vmatprep.subr.bf16.mxu0 0
        %3052 = vmatpush1.bf16.msra.mxu0 %v2131
        %3053 = vmatprep.subr.bf16.mxu0 0
        %3054 = vmatpush1.bf16.msra.mxu0 %v2134
        %3055 = vmatprep.subr.bf16.mxu0 0
        %3056 = vmatpush1.bf16.msra.mxu0 %v2137
        %3057 = vmatprep.subr.bf16.mxu0 0
        %3058 = vmatpush1.bf16.msra.mxu0 %v2140
        %3059 = vmatprep.subr.bf16.mxu0 0
        %3060 = vmatpush1.bf16.msra.mxu0 %v2143
        %3061 = vmatprep.subr.bf16.mxu0 0
        %3062 = vmatpush1.bf16.msra.mxu0 %v2146
        %3063 = vmatprep.mubr.bf16.mxu0 %v1218
        %3064 = vmatmul.mubr.bf16.gmra.mrb[0].mxu0 %v978
        %v3065 = vpop.f32.mrb[0].mxu0
        %v3066 = vadd.f32 %v2905, %v3065
        %v3067 = vpop.f32.mrb[0].mxu0
        %v3068 = vpop.f32.mrb[0].mxu0
        %v3069 = vadd.f32 %v2908, %v3068
        %v3070 = vpop.f32.mrb[0].mxu0
        %3071 = vmatprep.mubr.bf16.mxu0 %v1219
        %3072 = vmatmul.mubr.bf16.gmra.mrb[0].mxu0 %v979
        %v3073 = vpop.f32.mrb[0].mxu0
        %v3074 = vadd.f32 %v2913, %v3073
        %v3075 = vpop.f32.mrb[0].mxu0
        %v3076 = vpop.f32.mrb[0].mxu0
        %v3077 = vadd.f32 %v2916, %v3076
        %v3078 = vpop.f32.mrb[0].mxu0
        %3079 = vmatprep.mubr.bf16.mxu0 %v1220
        %3080 = vmatmul.mubr.bf16.gmra.mrb[0].mxu0 %v980
        %v3081 = vpop.f32.mrb[0].mxu0
        %v3082 = vadd.f32 %v2921, %v3081
        %v3083 = vpop.f32.mrb[0].mxu0
        %v3084 = vpop.f32.mrb[0].mxu0
        %v3085 = vadd.f32 %v2924, %v3084
        %v3086 = vpop.f32.mrb[0].mxu0
        %3087 = vmatprep.mubr.bf16.mxu0 %v1221
        %3088 = vmatmul.mubr.bf16.gmra.mrb[0].mxu0 %v981
        %v3089 = vpop.f32.mrb[0].mxu0
        %v3090 = vadd.f32 %v2929, %v3089
        %v3091 = vpop.f32.mrb[0].mxu0
        %v3092 = vpop.f32.mrb[0].mxu0
        %v3093 = vadd.f32 %v2932, %v3092
        %v3094 = vpop.f32.mrb[0].mxu0
        %3095 = vmatprep.mubr.bf16.mxu0 %v1222
        %3096 = vmatmul.mubr.bf16.gmra.mrb[0].mxu0 %v982
        %v3097 = vpop.f32.mrb[0].mxu0
        %v3098 = vadd.f32 %v2937, %v3097
        %v3099 = vpop.f32.mrb[0].mxu0
        %v3100 = vpop.f32.mrb[0].mxu0
        %v3101 = vadd.f32 %v2940, %v3100
        %v3102 = vpop.f32.mrb[0].mxu0
        %3103 = vmatprep.mubr.bf16.mxu0 %v1223
        %3104 = vmatmul.mubr.bf16.gmra.mrb[0].mxu0 %v983
        %v3105 = vpop.f32.mrb[0].mxu0
        %v3106 = vadd.f32 %v2945, %v3105
        %v3107 = vpop.f32.mrb[0].mxu0
        %v3108 = vpop.f32.mrb[0].mxu0
        %v3109 = vadd.f32 %v2948, %v3108
        %v3110 = vpop.f32.mrb[0].mxu0
        %3111 = vmatprep.mubr.bf16.mxu0 %v1224
        %3112 = vmatmul.mubr.bf16.gmra.mrb[0].mxu0 %v984
        %v3113 = vpop.f32.mrb[0].mxu0
        %v3114 = vadd.f32 %v2953, %v3113
        %v3115 = vpop.f32.mrb[0].mxu0
        %v3116 = vpop.f32.mrb[0].mxu0
        %v3117 = vadd.f32 %v2956, %v3116
        %v3118 = vpop.f32.mrb[0].mxu0
        %3119 = vmatprep.mubr.bf16.mxu0 %v1225
        %3120 = vmatmul.mubr.bf16.gmra.mrb[0].mxu0 %v985
        %v3121 = vpop.f32.mrb[0].mxu0
        %v3122 = vadd.f32 %v2961, %v3121
        %v3123 = vpop.f32.mrb[0].mxu0
        %v3124 = vpop.f32.mrb[0].mxu0
        %v3125 = vadd.f32 %v2964, %v3124
        %v3126 = vpop.f32.mrb[0].mxu0
        %3127 = vmatprep.mubr.bf16.mxu0 %v1226
        %3128 = vmatmul.mubr.bf16.gmra.mrb[0].mxu0 %v986
        %v3129 = vpop.f32.mrb[0].mxu0
        %v3130 = vadd.f32 %v2969, %v3129
        %v3131 = vpop.f32.mrb[0].mxu0
        %v3132 = vpop.f32.mrb[0].mxu0
        %v3133 = vadd.f32 %v2972, %v3132
        %v3134 = vpop.f32.mrb[0].mxu0
        %3135 = vmatprep.mubr.bf16.mxu0 %v1227
        %3136 = vmatmul.mubr.bf16.gmra.mrb[0].mxu0 %v987
        %v3137 = vpop.f32.mrb[0].mxu0
        %v3138 = vadd.f32 %v2977, %v3137
        %v3139 = vpop.f32.mrb[0].mxu0
        %v3140 = vpop.f32.mrb[0].mxu0
        %v3141 = vadd.f32 %v2980, %v3140
        %v3142 = vpop.f32.mrb[0].mxu0
        %3143 = vmatprep.mubr.bf16.mxu0 %v1228
        %3144 = vmatmul.mubr.bf16.gmra.mrb[0].mxu0 %v988
        %v3145 = vpop.f32.mrb[0].mxu0
        %v3146 = vadd.f32 %v2985, %v3145
        %v3147 = vpop.f32.mrb[0].mxu0
        %v3148 = vpop.f32.mrb[0].mxu0
        %v3149 = vadd.f32 %v2988, %v3148
        %v3150 = vpop.f32.mrb[0].mxu0
        %3151 = vmatprep.mubr.bf16.mxu0 %v1229
        %3152 = vmatmul.mubr.bf16.gmra.mrb[0].mxu0 %v989
        %v3153 = vpop.f32.mrb[0].mxu0
        %v3154 = vadd.f32 %v2993, %v3153
        %v3155 = vpop.f32.mrb[0].mxu0
        %v3156 = vpop.f32.mrb[0].mxu0
        %v3157 = vadd.f32 %v2996, %v3156
        %v3158 = vpop.f32.mrb[0].mxu0
        %3159 = vmatprep.mubr.bf16.mxu0 %v1230
        %3160 = vmatmul.mubr.bf16.gmra.mrb[0].mxu0 %v990
        %v3161 = vpop.f32.mrb[0].mxu0
        %v3162 = vadd.f32 %v3001, %v3161
        %v3163 = vpop.f32.mrb[0].mxu0
        %v3164 = vpop.f32.mrb[0].mxu0
        %v3165 = vadd.f32 %v3004, %v3164
        %v3166 = vpop.f32.mrb[0].mxu0
        %3167 = vmatprep.mubr.bf16.mxu0 %v1231
        %3168 = vmatmul.mubr.bf16.gmra.mrb[0].mxu0 %v991
        %v3169 = vpop.f32.mrb[0].mxu0
        %v3170 = vadd.f32 %v3009, %v3169
        %v3171 = vpop.f32.mrb[0].mxu0
        %v3172 = vpop.f32.mrb[0].mxu0
        %v3173 = vadd.f32 %v3012, %v3172
        %v3174 = vpop.f32.mrb[0].mxu0
        %3175 = vmatprep.mubr.bf16.mxu0 %v1232
        %3176 = vmatmul.mubr.bf16.gmra.mrb[0].mxu0 %v992
        %v3177 = vpop.f32.mrb[0].mxu0
        %v3178 = vadd.f32 %v3017, %v3177
        %v3179 = vpop.f32.mrb[0].mxu0
        %v3180 = vpop.f32.mrb[0].mxu0
        %v3181 = vadd.f32 %v3020, %v3180
        %v3182 = vpop.f32.mrb[0].mxu0
        %3183 = vmatprep.mubr.bf16.mxu0 %v1233
        %3184 = vmatmul.mubr.bf16.gmra.mrb[0].mxu0 %v993
        %v3185 = vpop.f32.mrb[0].mxu0
        %v3186 = vadd.f32 %v3025, %v3185
        %v3187 = vpop.f32.mrb[0].mxu0
        %v3188 = vpop.f32.mrb[0].mxu0
        %v3189 = vadd.f32 %v3028, %v3188
        %v3190 = vpop.f32.mrb[0].mxu0
        %3191 = vdwg.mxu0
        %3192 = vmatprep.subr.bf16.mxu0 0
        %3193 = vmatpush1.bf16.msra.mxu0 %v2149
        %3194 = vmatprep.subr.bf16.mxu0 0
        %3195 = vmatpush1.bf16.msra.mxu0 %v2152
        %3196 = vmatprep.subr.bf16.mxu0 0
        %3197 = vmatpush1.bf16.msra.mxu0 %v2155
        %3198 = vmatprep.subr.bf16.mxu0 0
        %3199 = vmatpush1.bf16.msra.mxu0 %v2158
        %3200 = vmatprep.subr.bf16.mxu0 0
        %3201 = vmatpush1.bf16.msra.mxu0 %v2161
        %3202 = vmatprep.subr.bf16.mxu0 0
        %3203 = vmatpush1.bf16.msra.mxu0 %v2164
        %3204 = vmatprep.subr.bf16.mxu0 0
        %3205 = vmatpush1.bf16.msra.mxu0 %v2167
        %3206 = vmatprep.subr.bf16.mxu0 0
        %3207 = vmatpush1.bf16.msra.mxu0 %v2170
        %3208 = vmatprep.subr.bf16.mxu0 0
        %3209 = vmatpush1.bf16.msra.mxu0 0
        %3210 = vmatprep.subr.bf16.mxu0 0
        %3211 = vmatpush1.bf16.msra.mxu0 0
        %3212 = vmatprep.subr.bf16.mxu0 0
        %3213 = vmatpush1.bf16.msra.mxu0 0
        %3214 = vmatprep.subr.bf16.mxu0 0
        %3215 = vmatpush1.bf16.msra.mxu0 0
        %3216 = vmatprep.subr.bf16.mxu0 0
        %3217 = vmatpush1.bf16.msra.mxu0 0
        %3218 = vmatprep.subr.bf16.mxu0 0
        %3219 = vmatpush1.bf16.msra.mxu0 0
        %3220 = vmatprep.subr.bf16.mxu0 0
        %3221 = vmatpush1.bf16.msra.mxu0 0
        %3222 = vmatprep.subr.bf16.mxu0 0
        %3223 = vmatpush1.bf16.msra.mxu0 0
        %3224 = vmatprep.mubr.bf16.mxu0 0
        %3225 = vmatmul.mubr.bf16.gmra.mrb[0].mxu0 %v1458
        %v3226 = vpop.f32.mrb[0].mxu0
        %v3227 = vadd.f32 %v3066, %v3226
        %v3228 = vpop.f32.mrb[0].mxu0
        %v3229 = vpop.f32.mrb[0].mxu0
        %v3230 = vadd.f32 %v3069, %v3229
        %v3231 = vpop.f32.mrb[0].mxu0
        %3232 = vmatprep.mubr.bf16.mxu0 0
        %3233 = vmatmul.mubr.bf16.gmra.mrb[0].mxu0 %v1459
        %v3234 = vpop.f32.mrb[0].mxu0
        %v3235 = vadd.f32 %v3074, %v3234
        %v3236 = vpop.f32.mrb[0].mxu0
        %v3237 = vpop.f32.mrb[0].mxu0
        %v3238 = vadd.f32 %v3077, %v3237
        %v3239 = vpop.f32.mrb[0].mxu0
        %3240 = vmatprep.mubr.bf16.mxu0 0
        %3241 = vmatmul.mubr.bf16.gmra.mrb[0].mxu0 %v1460
        %v3242 = vpop.f32.mrb[0].mxu0
        %v3243 = vadd.f32 %v3082, %v3242
        %v3244 = vpop.f32.mrb[0].mxu0
        %v3245 = vpop.f32.mrb[0].mxu0
        %v3246 = vadd.f32 %v3085, %v3245
        %v3247 = vpop.f32.mrb[0].mxu0
        %3248 = vmatprep.mubr.bf16.mxu0 0
        %3249 = vmatmul.mubr.bf16.gmra.mrb[0].mxu0 %v1461
        %v3250 = vpop.f32.mrb[0].mxu0
        %v3251 = vadd.f32 %v3090, %v3250
        %v3252 = vpop.f32.mrb[0].mxu0
        %v3253 = vpop.f32.mrb[0].mxu0
        %v3254 = vadd.f32 %v3093, %v3253
        %v3255 = vpop.f32.mrb[0].mxu0
        %3256 = vmatprep.mubr.bf16.mxu0 0
        %3257 = vmatmul.mubr.bf16.gmra.mrb[0].mxu0 %v1462
        %v3258 = vpop.f32.mrb[0].mxu0
        %v3259 = vadd.f32 %v3098, %v3258
        %v3260 = vpop.f32.mrb[0].mxu0
        %v3261 = vpop.f32.mrb[0].mxu0
        %v3262 = vadd.f32 %v3101, %v3261
        %v3263 = vpop.f32.mrb[0].mxu0
        %3264 = vmatprep.mubr.bf16.mxu0 0
        %3265 = vmatmul.mubr.bf16.gmra.mrb[0].mxu0 %v1463
        %v3266 = vpop.f32.mrb[0].mxu0
        %v3267 = vadd.f32 %v3106, %v3266
        %v3268 = vpop.f32.mrb[0].mxu0
        %v3269 = vpop.f32.mrb[0].mxu0
        %v3270 = vadd.f32 %v3109, %v3269
        %v3271 = vpop.f32.mrb[0].mxu0
        %3272 = vmatprep.mubr.bf16.mxu0 0
        %3273 = vmatmul.mubr.bf16.gmra.mrb[0].mxu0 %v1464
        %v3274 = vpop.f32.mrb[0].mxu0
        %v3275 = vadd.f32 %v3114, %v3274
        %v3276 = vpop.f32.mrb[0].mxu0
        %v3277 = vpop.f32.mrb[0].mxu0
        %v3278 = vadd.f32 %v3117, %v3277
        %v3279 = vpop.f32.mrb[0].mxu0
        %3280 = vmatprep.mubr.bf16.mxu0 0
        %3281 = vmatmul.mubr.bf16.gmra.mrb[0].mxu0 %v1465
        %v3282 = vpop.f32.mrb[0].mxu0
        %v3283 = vadd.f32 %v3122, %v3282
        %v3284 = vpop.f32.mrb[0].mxu0
        %v3285 = vpop.f32.mrb[0].mxu0
        %v3286 = vadd.f32 %v3125, %v3285
        %v3287 = vpop.f32.mrb[0].mxu0
        %3288 = vmatprep.mubr.bf16.mxu0 0
        %3289 = vmatmul.mubr.bf16.gmra.mrb[0].mxu0 %v1466
        %v3290 = vpop.f32.mrb[0].mxu0
        %v3291 = vadd.f32 %v3130, %v3290
        %v3292 = vpop.f32.mrb[0].mxu0
        %v3293 = vpop.f32.mrb[0].mxu0
        %v3294 = vadd.f32 %v3133, %v3293
        %v3295 = vpop.f32.mrb[0].mxu0
        %3296 = vmatprep.mubr.bf16.mxu0 0
        %3297 = vmatmul.mubr.bf16.gmra.mrb[0].mxu0 %v1467
        %v3298 = vpop.f32.mrb[0].mxu0
        %v3299 = vadd.f32 %v3138, %v3298
        %v3300 = vpop.f32.mrb[0].mxu0
        %v3301 = vpop.f32.mrb[0].mxu0
        %v3302 = vadd.f32 %v3141, %v3301
        %v3303 = vpop.f32.mrb[0].mxu0
        %3304 = vmatprep.mubr.bf16.mxu0 0
        %3305 = vmatmul.mubr.bf16.gmra.mrb[0].mxu0 %v1468
        %v3306 = vpop.f32.mrb[0].mxu0
        %v3307 = vadd.f32 %v3146, %v3306
        %v3308 = vpop.f32.mrb[0].mxu0
        %v3309 = vpop.f32.mrb[0].mxu0
        %v3310 = vadd.f32 %v3149, %v3309
        %v3311 = vpop.f32.mrb[0].mxu0
        %3312 = vmatprep.mubr.bf16.mxu0 0
        %3313 = vmatmul.mubr.bf16.gmra.mrb[0].mxu0 %v1469
        %v3314 = vpop.f32.mrb[0].mxu0
        %v3315 = vadd.f32 %v3154, %v3314
        %v3316 = vpop.f32.mrb[0].mxu0
        %v3317 = vpop.f32.mrb[0].mxu0
        %v3318 = vadd.f32 %v3157, %v3317
        %v3319 = vpop.f32.mrb[0].mxu0
        %3320 = vmatprep.mubr.bf16.mxu0 0
        %3321 = vmatmul.mubr.bf16.gmra.mrb[0].mxu0 %v1470
        %v3322 = vpop.f32.mrb[0].mxu0
        %v3323 = vadd.f32 %v3162, %v3322
        %v3324 = vpop.f32.mrb[0].mxu0
        %v3325 = vpop.f32.mrb[0].mxu0
        %v3326 = vadd.f32 %v3165, %v3325
        %v3327 = vpop.f32.mrb[0].mxu0
        %3328 = vmatprep.mubr.bf16.mxu0 0
        %3329 = vmatmul.mubr.bf16.gmra.mrb[0].mxu0 %v1471
        %v3330 = vpop.f32.mrb[0].mxu0
        %v3331 = vadd.f32 %v3170, %v3330
        %v3332 = vpop.f32.mrb[0].mxu0
        %v3333 = vpop.f32.mrb[0].mxu0
        %v3334 = vadd.f32 %v3173, %v3333
        %v3335 = vpop.f32.mrb[0].mxu0
        %3336 = vmatprep.mubr.bf16.mxu0 0
        %3337 = vmatmul.mubr.bf16.gmra.mrb[0].mxu0 %v1472
        %v3338 = vpop.f32.mrb[0].mxu0
        %v3339 = vadd.f32 %v3178, %v3338
        %v3340 = vpop.f32.mrb[0].mxu0
        %v3341 = vpop.f32.mrb[0].mxu0
        %v3342 = vadd.f32 %v3181, %v3341
        %v3343 = vpop.f32.mrb[0].mxu0
        %3344 = vmatprep.mubr.bf16.mxu0 0
        %3345 = vmatmul.mubr.bf16.gmra.mrb[0].mxu0 %v1473
        %v3346 = vpop.f32.mrb[0].mxu0
        %v3347 = vadd.f32 %v3186, %v3346
        %v3348 = vpop.f32.mrb[0].mxu0
        %v3349 = vpop.f32.mrb[0].mxu0
        %v3350 = vadd.f32 %v3189, %v3349
        %v3351 = vpop.f32.mrb[0].mxu0
        %3352 = vdwg.mxu0
        %v3353 = vmax.f32 %v2712, 0.0
        %v3354 = vmax.f32 %v2714, 0.0
        %v3355 = vmax.f32 %v3227, 0.0
        %v3356 = vmax.f32 %v2716, 0.0
        %v3357 = vmax.f32 %v2718, 0.0
        %v3358 = vmax.f32 %v3230, 0.0
        %v3359 = vmax.f32 %v2722, 0.0
        %v3360 = vmax.f32 %v2724, 0.0
        %v3361 = vmax.f32 %v3235, 0.0
        %v3362 = vmax.f32 %v2726, 0.0
        %v3363 = vmax.f32 %v2728, 0.0
        %v3364 = vmax.f32 %v3238, 0.0
        %v3365 = vmax.f32 %v2732, 0.0
        %v3366 = vmax.f32 %v2734, 0.0
        %v3367 = vmax.f32 %v3243, 0.0
        %v3368 = vmax.f32 %v2736, 0.0
        %v3369 = vmax.f32 %v2738, 0.0
        %v3370 = vmax.f32 %v3246, 0.0
        %v3371 = vmax.f32 %v2742, 0.0
        %v3372 = vmax.f32 %v2744, 0.0
        %v3373 = vmax.f32 %v3251, 0.0
        %v3374 = vmax.f32 %v2746, 0.0
        %v3375 = vmax.f32 %v2748, 0.0
        %v3376 = vmax.f32 %v3254, 0.0
        %v3377 = vmax.f32 %v2752, 0.0
        %v3378 = vmax.f32 %v2754, 0.0
        %v3379 = vmax.f32 %v3259, 0.0
        %v3380 = vmax.f32 %v2756, 0.0
        %v3381 = vmax.f32 %v2758, 0.0
        %v3382 = vmax.f32 %v3262, 0.0
        %v3383 = vmax.f32 %v2762, 0.0
        %v3384 = vmax.f32 %v2764, 0.0
        %v3385 = vmax.f32 %v3267, 0.0
        %v3386 = vmax.f32 %v2766, 0.0
        %v3387 = vmax.f32 %v2768, 0.0
        %v3388 = vmax.f32 %v3270, 0.0
        %v3389 = vmax.f32 %v2772, 0.0
        %v3390 = vmax.f32 %v2774, 0.0
        %v3391 = vmax.f32 %v3275, 0.0
        %v3392 = vmax.f32 %v2776, 0.0
        %v3393 = vmax.f32 %v2778, 0.0
        %v3394 = vmax.f32 %v3278, 0.0
        %v3395 = vmax.f32 %v2782, 0.0
        %v3396 = vmax.f32 %v2784, 0.0
        %v3397 = vmax.f32 %v3283, 0.0
        %v3398 = vmax.f32 %v2786, 0.0
        %v3399 = vmax.f32 %v2788, 0.0
        %v3400 = vmax.f32 %v3286, 0.0
        %v3401 = vmax.f32 %v2792, 0.0
        %v3402 = vmax.f32 %v2794, 0.0
        %v3403 = vmax.f32 %v3291, 0.0
        %v3404 = vmax.f32 %v2796, 0.0
        %v3405 = vmax.f32 %v2798, 0.0
        %v3406 = vmax.f32 %v3294, 0.0
        %v3407 = vmax.f32 %v2802, 0.0
        %v3408 = vmax.f32 %v2804, 0.0
        %v3409 = vmax.f32 %v3299, 0.0
        %v3410 = vmax.f32 %v2806, 0.0
        %v3411 = vmax.f32 %v2808, 0.0
        %v3412 = vmax.f32 %v3302, 0.0
        %v3413 = vmax.f32 %v2812, 0.0
        %v3414 = vmax.f32 %v2814, 0.0
        %v3415 = vmax.f32 %v3307, 0.0
        %v3416 = vmax.f32 %v2816, 0.0
        %v3417 = vmax.f32 %v2818, 0.0
        %v3418 = vmax.f32 %v3310, 0.0
        %v3419 = vmax.f32 %v2822, 0.0
        %v3420 = vmax.f32 %v2824, 0.0
        %v3421 = vmax.f32 %v3315, 0.0
        %v3422 = vmax.f32 %v2826, 0.0
        %v3423 = vmax.f32 %v2828, 0.0
        %v3424 = vmax.f32 %v3318, 0.0
        %v3425 = vmax.f32 %v2832, 0.0
        %v3426 = vmax.f32 %v2834, 0.0
        %v3427 = vmax.f32 %v3323, 0.0
        %v3428 = vmax.f32 %v2836, 0.0
        %v3429 = vmax.f32 %v2838, 0.0
        %v3430 = vmax.f32 %v3326, 0.0
        %v3431 = vmax.f32 %v2842, 0.0
        %v3432 = vmax.f32 %v2844, 0.0
        %v3433 = vmax.f32 %v3331, 0.0
        %v3434 = vmax.f32 %v2846, 0.0
        %v3435 = vmax.f32 %v2848, 0.0
        %v3436 = vmax.f32 %v3334, 0.0
        %v3437 = vmax.f32 %v2852, 0.0
        %v3438 = vmax.f32 %v2854, 0.0
        %v3439 = vmax.f32 %v3339, 0.0
        %v3440 = vmax.f32 %v2856, 0.0
        %v3441 = vmax.f32 %v2858, 0.0
        %v3442 = vmax.f32 %v3342, 0.0
        %v3443 = vmax.f32 %v2862, 0.0
        %v3444 = vmax.f32 %v2864, 0.0
        %v3445 = vmax.f32 %v3347, 0.0
        %v3446 = vmax.f32 %v2866, 0.0
        %v3447 = vmax.f32 %v2868, 0.0
        %v3448 = vmax.f32 %v3350, 0.0
        %v3449 = vld [vmem:[%s3] sm:$0xff]
        %v3450 = vld [vmem:[%s3 + $0x8] sm:$0xff]
        %v3451 = vld [vmem:[%s3 + $0x10] sm:$0xff]
        %v3452 = vld [vmem:[%s3 + $0x18] sm:$0xff]
        %v3453 = vld [vmem:[%s3 + $0x20] sm:$0xff]
        %v3454 = vld [vmem:[%s3 + $0x28] sm:$0xff]
        %v3455 = vmul.f32 %v3353, %v3449
        %v3456 = vmul.f32 %v3354, %v3450
        %v3457 = vmul.f32 %v3355, %v3451
        %v3458 = vmul.f32 %v3356, %v3452
        %v3459 = vmul.f32 %v3357, %v3453
        %v3460 = vmul.f32 %v3358, %v3454
        %v3461 = vmul.f32 %v3359, %v3449
        %v3462 = vmul.f32 %v3360, %v3450
        %v3463 = vmul.f32 %v3361, %v3451
        %v3464 = vmul.f32 %v3362, %v3452
        %v3465 = vmul.f32 %v3363, %v3453
        %v3466 = vmul.f32 %v3364, %v3454
        %v3467 = vmul.f32 %v3365, %v3449
        %v3468 = vmul.f32 %v3366, %v3450
        %v3469 = vmul.f32 %v3367, %v3451
        %v3470 = vmul.f32 %v3368, %v3452
        %v3471 = vmul.f32 %v3369, %v3453
        %v3472 = vmul.f32 %v3370, %v3454
        %v3473 = vmul.f32 %v3371, %v3449
        %v3474 = vmul.f32 %v3372, %v3450
        %v3475 = vmul.f32 %v3373, %v3451
        %v3476 = vmul.f32 %v3374, %v3452
        %v3477 = vmul.f32 %v3375, %v3453
        %v3478 = vmul.f32 %v3376, %v3454
        %v3479 = vmul.f32 %v3377, %v3449
        %v3480 = vmul.f32 %v3378, %v3450
        %v3481 = vmul.f32 %v3379, %v3451
        %v3482 = vmul.f32 %v3380, %v3452
        %v3483 = vmul.f32 %v3381, %v3453
        %v3484 = vmul.f32 %v3382, %v3454
        %v3485 = vmul.f32 %v3383, %v3449
        %v3486 = vmul.f32 %v3384, %v3450
        %v3487 = vmul.f32 %v3385, %v3451
        %v3488 = vmul.f32 %v3386, %v3452
        %v3489 = vmul.f32 %v3387, %v3453
        %v3490 = vmul.f32 %v3388, %v3454
        %v3491 = vmul.f32 %v3389, %v3449
        %v3492 = vmul.f32 %v3390, %v3450
        %v3493 = vmul.f32 %v3391, %v3451
        %v3494 = vmul.f32 %v3392, %v3452
        %v3495 = vmul.f32 %v3393, %v3453
        %v3496 = vmul.f32 %v3394, %v3454
        %v3497 = vmul.f32 %v3395, %v3449
        %v3498 = vmul.f32 %v3396, %v3450
        %v3499 = vmul.f32 %v3397, %v3451
        %v3500 = vmul.f32 %v3398, %v3452
        %v3501 = vmul.f32 %v3399, %v3453
        %v3502 = vmul.f32 %v3400, %v3454
        %v3503 = vmul.f32 %v3401, %v3449
        %v3504 = vmul.f32 %v3402, %v3450
        %v3505 = vmul.f32 %v3403, %v3451
        %v3506 = vmul.f32 %v3404, %v3452
        %v3507 = vmul.f32 %v3405, %v3453
        %v3508 = vmul.f32 %v3406, %v3454
        %v3509 = vmul.f32 %v3407, %v3449
        %v3510 = vmul.f32 %v3408, %v3450
        %v3511 = vmul.f32 %v3409, %v3451
        %v3512 = vmul.f32 %v3410, %v3452
        %v3513 = vmul.f32 %v3411, %v3453
        %v3514 = vmul.f32 %v3412, %v3454
        %v3515 = vmul.f32 %v3413, %v3449
        %v3516 = vmul.f32 %v3414, %v3450
        %v3517 = vmul.f32 %v3415, %v3451
        %v3518 = vmul.f32 %v3416, %v3452
        %v3519 = vmul.f32 %v3417, %v3453
        %v3520 = vmul.f32 %v3418, %v3454
        %v3521 = vmul.f32 %v3419, %v3449
        %v3522 = vmul.f32 %v3420, %v3450
        %v3523 = vmul.f32 %v3421, %v3451
        %v3524 = vmul.f32 %v3422, %v3452
        %v3525 = vmul.f32 %v3423, %v3453
        %v3526 = vmul.f32 %v3424, %v3454
        %v3527 = vmul.f32 %v3425, %v3449
        %v3528 = vmul.f32 %v3426, %v3450
        %v3529 = vmul.f32 %v3427, %v3451
        %v3530 = vmul.f32 %v3428, %v3452
        %v3531 = vmul.f32 %v3429, %v3453
        %v3532 = vmul.f32 %v3430, %v3454
        %v3533 = vmul.f32 %v3431, %v3449
        %v3534 = vmul.f32 %v3432, %v3450
        %v3535 = vmul.f32 %v3433, %v3451
        %v3536 = vmul.f32 %v3434, %v3452
        %v3537 = vmul.f32 %v3435, %v3453
        %v3538 = vmul.f32 %v3436, %v3454
        %v3539 = vmul.f32 %v3437, %v3449
        %v3540 = vmul.f32 %v3438, %v3450
        %v3541 = vmul.f32 %v3439, %v3451
        %v3542 = vmul.f32 %v3440, %v3452
        %v3543 = vmul.f32 %v3441, %v3453
        %v3544 = vmul.f32 %v3442, %v3454
        %v3545 = vmul.f32 %v3443, %v3449
        %v3546 = vmul.f32 %v3444, %v3450
        %v3547 = vmul.f32 %v3445, %v3451
        %v3548 = vmul.f32 %v3446, %v3452
        %v3549 = vmul.f32 %v3447, %v3453
        %v3550 = vmul.f32 %v3448, %v3454
        %v3551 = vmax.f32 %v3455, %v3458
        %v3552 = vrot.slane %v3551, 4
        %v3553 = vmax.f32 %v3551, %v3552
        %v3554 = vrot.slane %v3553, 2
        %v3555 = vmax.f32 %v3553, %v3554
        %v3556 = vrot.slane %v3555, 1
        %v3557 = vmax.f32 %v3555, %v3556
        %v3558 = vmax.f32 %v3456, %v3459
        %v3559 = vrot.slane %v3558, 4
        %v3560 = vmax.f32 %v3558, %v3559
        %v3561 = vrot.slane %v3560, 2
        %v3562 = vmax.f32 %v3560, %v3561
        %v3563 = vrot.slane %v3562, 1
        %v3564 = vmax.f32 %v3562, %v3563
        %v3565 = vmax.f32 %v3457, %v3460
        %v3566 = vrot.slane %v3565, 4
        %v3567 = vmax.f32 %v3565, %v3566
        %v3568 = vrot.slane %v3567, 2
        %v3569 = vmax.f32 %v3567, %v3568
        %v3570 = vrot.slane %v3569, 1
        %v3571 = vmax.f32 %v3569, %v3570
        %v3572 = vmax.f32 %v3461, %v3464
        %v3573 = vrot.slane %v3572, 4
        %v3574 = vmax.f32 %v3572, %v3573
        %v3575 = vrot.slane %v3574, 2
        %v3576 = vmax.f32 %v3574, %v3575
        %v3577 = vrot.slane %v3576, 1
        %v3578 = vmax.f32 %v3576, %v3577
        %v3579 = vmax.f32 %v3462, %v3465
        %v3580 = vrot.slane %v3579, 4
        %v3581 = vmax.f32 %v3579, %v3580
        %v3582 = vrot.slane %v3581, 2
        %v3583 = vmax.f32 %v3581, %v3582
        %v3584 = vrot.slane %v3583, 1
        %v3585 = vmax.f32 %v3583, %v3584
        %v3586 = vmax.f32 %v3463, %v3466
        %v3587 = vrot.slane %v3586, 4
        %v3588 = vmax.f32 %v3586, %v3587
        %v3589 = vrot.slane %v3588, 2
        %v3590 = vmax.f32 %v3588, %v3589
        %v3591 = vrot.slane %v3590, 1
        %v3592 = vmax.f32 %v3590, %v3591
        %v3593 = vmax.f32 %v3467, %v3470
        %v3594 = vrot.slane %v3593, 4
        %v3595 = vmax.f32 %v3593, %v3594
        %v3596 = vrot.slane %v3595, 2
        %v3597 = vmax.f32 %v3595, %v3596
        %v3598 = vrot.slane %v3597, 1
        %v3599 = vmax.f32 %v3597, %v3598
        %v3600 = vmax.f32 %v3468, %v3471
        %v3601 = vrot.slane %v3600, 4
        %v3602 = vmax.f32 %v3600, %v3601
        %v3603 = vrot.slane %v3602, 2
        %v3604 = vmax.f32 %v3602, %v3603
        %v3605 = vrot.slane %v3604, 1
        %v3606 = vmax.f32 %v3604, %v3605
        %v3607 = vmax.f32 %v3469, %v3472
        %v3608 = vrot.slane %v3607, 4
        %v3609 = vmax.f32 %v3607, %v3608
        %v3610 = vrot.slane %v3609, 2
        %v3611 = vmax.f32 %v3609, %v3610
        %v3612 = vrot.slane %v3611, 1
        %v3613 = vmax.f32 %v3611, %v3612
        %v3614 = vmax.f32 %v3473, %v3476
        %v3615 = vrot.slane %v3614, 4
        %v3616 = vmax.f32 %v3614, %v3615
        %v3617 = vrot.slane %v3616, 2
        %v3618 = vmax.f32 %v3616, %v3617
        %v3619 = vrot.slane %v3618, 1
        %v3620 = vmax.f32 %v3618, %v3619
        %v3621 = vmax.f32 %v3474, %v3477
        %v3622 = vrot.slane %v3621, 4
        %v3623 = vmax.f32 %v3621, %v3622
        %v3624 = vrot.slane %v3623, 2
        %v3625 = vmax.f32 %v3623, %v3624
        %v3626 = vrot.slane %v3625, 1
        %v3627 = vmax.f32 %v3625, %v3626
        %v3628 = vmax.f32 %v3475, %v3478
        %v3629 = vrot.slane %v3628, 4
        %v3630 = vmax.f32 %v3628, %v3629
        %v3631 = vrot.slane %v3630, 2
        %v3632 = vmax.f32 %v3630, %v3631
        %v3633 = vrot.slane %v3632, 1
        %v3634 = vmax.f32 %v3632, %v3633
        %v3635 = vmax.f32 %v3479, %v3482
        %v3636 = vrot.slane %v3635, 4
        %v3637 = vmax.f32 %v3635, %v3636
        %v3638 = vrot.slane %v3637, 2
        %v3639 = vmax.f32 %v3637, %v3638
        %v3640 = vrot.slane %v3639, 1
        %v3641 = vmax.f32 %v3639, %v3640
        %v3642 = vmax.f32 %v3480, %v3483
        %v3643 = vrot.slane %v3642, 4
        %v3644 = vmax.f32 %v3642, %v3643
        %v3645 = vrot.slane %v3644, 2
        %v3646 = vmax.f32 %v3644, %v3645
        %v3647 = vrot.slane %v3646, 1
        %v3648 = vmax.f32 %v3646, %v3647
        %v3649 = vmax.f32 %v3481, %v3484
        %v3650 = vrot.slane %v3649, 4
        %v3651 = vmax.f32 %v3649, %v3650
        %v3652 = vrot.slane %v3651, 2
        %v3653 = vmax.f32 %v3651, %v3652
        %v3654 = vrot.slane %v3653, 1
        %v3655 = vmax.f32 %v3653, %v3654
        %v3656 = vmax.f32 %v3485, %v3488
        %v3657 = vrot.slane %v3656, 4
        %v3658 = vmax.f32 %v3656, %v3657
        %v3659 = vrot.slane %v3658, 2
        %v3660 = vmax.f32 %v3658, %v3659
        %v3661 = vrot.slane %v3660, 1
        %v3662 = vmax.f32 %v3660, %v3661
        %v3663 = vmax.f32 %v3486, %v3489
        %v3664 = vrot.slane %v3663, 4
        %v3665 = vmax.f32 %v3663, %v3664
        %v3666 = vrot.slane %v3665, 2
        %v3667 = vmax.f32 %v3665, %v3666
        %v3668 = vrot.slane %v3667, 1
        %v3669 = vmax.f32 %v3667, %v3668
        %v3670 = vmax.f32 %v3487, %v3490
        %v3671 = vrot.slane %v3670, 4
        %v3672 = vmax.f32 %v3670, %v3671
        %v3673 = vrot.slane %v3672, 2
        %v3674 = vmax.f32 %v3672, %v3673
        %v3675 = vrot.slane %v3674, 1
        %v3676 = vmax.f32 %v3674, %v3675
        %v3677 = vmax.f32 %v3491, %v3494
        %v3678 = vrot.slane %v3677, 4
        %v3679 = vmax.f32 %v3677, %v3678
        %v3680 = vrot.slane %v3679, 2
        %v3681 = vmax.f32 %v3679, %v3680
        %v3682 = vrot.slane %v3681, 1
        %v3683 = vmax.f32 %v3681, %v3682
        %v3684 = vmax.f32 %v3492, %v3495
        %v3685 = vrot.slane %v3684, 4
        %v3686 = vmax.f32 %v3684, %v3685
        %v3687 = vrot.slane %v3686, 2
        %v3688 = vmax.f32 %v3686, %v3687
        %v3689 = vrot.slane %v3688, 1
        %v3690 = vmax.f32 %v3688, %v3689
        %v3691 = vmax.f32 %v3493, %v3496
        %v3692 = vrot.slane %v3691, 4
        %v3693 = vmax.f32 %v3691, %v3692
        %v3694 = vrot.slane %v3693, 2
        %v3695 = vmax.f32 %v3693, %v3694
        %v3696 = vrot.slane %v3695, 1
        %v3697 = vmax.f32 %v3695, %v3696
        %v3698 = vmax.f32 %v3497, %v3500
        %v3699 = vrot.slane %v3698, 4
        %v3700 = vmax.f32 %v3698, %v3699
        %v3701 = vrot.slane %v3700, 2
        %v3702 = vmax.f32 %v3700, %v3701
        %v3703 = vrot.slane %v3702, 1
        %v3704 = vmax.f32 %v3702, %v3703
        %v3705 = vmax.f32 %v3498, %v3501
        %v3706 = vrot.slane %v3705, 4
        %v3707 = vmax.f32 %v3705, %v3706
        %v3708 = vrot.slane %v3707, 2
        %v3709 = vmax.f32 %v3707, %v3708
        %v3710 = vrot.slane %v3709, 1
        %v3711 = vmax.f32 %v3709, %v3710
        %v3712 = vmax.f32 %v3499, %v3502
        %v3713 = vrot.slane %v3712, 4
        %v3714 = vmax.f32 %v3712, %v3713
        %v3715 = vrot.slane %v3714, 2
        %v3716 = vmax.f32 %v3714, %v3715
        %v3717 = vrot.slane %v3716, 1
        %v3718 = vmax.f32 %v3716, %v3717
        %v3719 = vmax.f32 %v3503, %v3506
        %v3720 = vrot.slane %v3719, 4
        %v3721 = vmax.f32 %v3719, %v3720
        %v3722 = vrot.slane %v3721, 2
        %v3723 = vmax.f32 %v3721, %v3722
        %v3724 = vrot.slane %v3723, 1
        %v3725 = vmax.f32 %v3723, %v3724
        %v3726 = vmax.f32 %v3504, %v3507
        %v3727 = vrot.slane %v3726, 4
        %v3728 = vmax.f32 %v3726, %v3727
        %v3729 = vrot.slane %v3728, 2
        %v3730 = vmax.f32 %v3728, %v3729
        %v3731 = vrot.slane %v3730, 1
        %v3732 = vmax.f32 %v3730, %v3731
        %v3733 = vmax.f32 %v3505, %v3508
        %v3734 = vrot.slane %v3733, 4
        %v3735 = vmax.f32 %v3733, %v3734
        %v3736 = vrot.slane %v3735, 2
        %v3737 = vmax.f32 %v3735, %v3736
        %v3738 = vrot.slane %v3737, 1
        %v3739 = vmax.f32 %v3737, %v3738
        %v3740 = vmax.f32 %v3509, %v3512
        %v3741 = vrot.slane %v3740, 4
        %v3742 = vmax.f32 %v3740, %v3741
        %v3743 = vrot.slane %v3742, 2
        %v3744 = vmax.f32 %v3742, %v3743
        %v3745 = vrot.slane %v3744, 1
        %v3746 = vmax.f32 %v3744, %v3745
        %v3747 = vmax.f32 %v3510, %v3513
        %v3748 = vrot.slane %v3747, 4
        %v3749 = vmax.f32 %v3747, %v3748
        %v3750 = vrot.slane %v3749, 2
        %v3751 = vmax.f32 %v3749, %v3750
        %v3752 = vrot.slane %v3751, 1
        %v3753 = vmax.f32 %v3751, %v3752
        %v3754 = vmax.f32 %v3511, %v3514
        %v3755 = vrot.slane %v3754, 4
        %v3756 = vmax.f32 %v3754, %v3755
        %v3757 = vrot.slane %v3756, 2
        %v3758 = vmax.f32 %v3756, %v3757
        %v3759 = vrot.slane %v3758, 1
        %v3760 = vmax.f32 %v3758, %v3759
        %v3761 = vmax.f32 %v3515, %v3518
        %v3762 = vrot.slane %v3761, 4
        %v3763 = vmax.f32 %v3761, %v3762
        %v3764 = vrot.slane %v3763, 2
        %v3765 = vmax.f32 %v3763, %v3764
        %v3766 = vrot.slane %v3765, 1
        %v3767 = vmax.f32 %v3765, %v3766
        %v3768 = vmax.f32 %v3516, %v3519
        %v3769 = vrot.slane %v3768, 4
        %v3770 = vmax.f32 %v3768, %v3769
        %v3771 = vrot.slane %v3770, 2
        %v3772 = vmax.f32 %v3770, %v3771
        %v3773 = vrot.slane %v3772, 1
        %v3774 = vmax.f32 %v3772, %v3773
        %v3775 = vmax.f32 %v3517, %v3520
        %v3776 = vrot.slane %v3775, 4
        %v3777 = vmax.f32 %v3775, %v3776
        %v3778 = vrot.slane %v3777, 2
        %v3779 = vmax.f32 %v3777, %v3778
        %v3780 = vrot.slane %v3779, 1
        %v3781 = vmax.f32 %v3779, %v3780
        %v3782 = vmax.f32 %v3521, %v3524
        %v3783 = vrot.slane %v3782, 4
        %v3784 = vmax.f32 %v3782, %v3783
        %v3785 = vrot.slane %v3784, 2
        %v3786 = vmax.f32 %v3784, %v3785
        %v3787 = vrot.slane %v3786, 1
        %v3788 = vmax.f32 %v3786, %v3787
        %v3789 = vmax.f32 %v3522, %v3525
        %v3790 = vrot.slane %v3789, 4
        %v3791 = vmax.f32 %v3789, %v3790
        %v3792 = vrot.slane %v3791, 2
        %v3793 = vmax.f32 %v3791, %v3792
        %v3794 = vrot.slane %v3793, 1
        %v3795 = vmax.f32 %v3793, %v3794
        %v3796 = vmax.f32 %v3523, %v3526
        %v3797 = vrot.slane %v3796, 4
        %v3798 = vmax.f32 %v3796, %v3797
        %v3799 = vrot.slane %v3798, 2
        %v3800 = vmax.f32 %v3798, %v3799
        %v3801 = vrot.slane %v3800, 1
        %v3802 = vmax.f32 %v3800, %v3801
        %v3803 = vmax.f32 %v3527, %v3530
        %v3804 = vrot.slane %v3803, 4
        %v3805 = vmax.f32 %v3803, %v3804
        %v3806 = vrot.slane %v3805, 2
        %v3807 = vmax.f32 %v3805, %v3806
        %v3808 = vrot.slane %v3807, 1
        %v3809 = vmax.f32 %v3807, %v3808
        %v3810 = vmax.f32 %v3528, %v3531
        %v3811 = vrot.slane %v3810, 4
        %v3812 = vmax.f32 %v3810, %v3811
        %v3813 = vrot.slane %v3812, 2
        %v3814 = vmax.f32 %v3812, %v3813
        %v3815 = vrot.slane %v3814, 1
        %v3816 = vmax.f32 %v3814, %v3815
        %v3817 = vmax.f32 %v3529, %v3532
        %v3818 = vrot.slane %v3817, 4
        %v3819 = vmax.f32 %v3817, %v3818
        %v3820 = vrot.slane %v3819, 2
        %v3821 = vmax.f32 %v3819, %v3820
        %v3822 = vrot.slane %v3821, 1
        %v3823 = vmax.f32 %v3821, %v3822
        %v3824 = vmax.f32 %v3533, %v3536
        %v3825 = vrot.slane %v3824, 4
        %v3826 = vmax.f32 %v3824, %v3825
        %v3827 = vrot.slane %v3826, 2
        %v3828 = vmax.f32 %v3826, %v3827
        %v3829 = vrot.slane %v3828, 1
        %v3830 = vmax.f32 %v3828, %v3829
        %v3831 = vmax.f32 %v3534, %v3537
        %v3832 = vrot.slane %v3831, 4
        %v3833 = vmax.f32 %v3831, %v3832
        %v3834 = vrot.slane %v3833, 2
        %v3835 = vmax.f32 %v3833, %v3834
        %v3836 = vrot.slane %v3835, 1
        %v3837 = vmax.f32 %v3835, %v3836
        %v3838 = vmax.f32 %v3535, %v3538
        %v3839 = vrot.slane %v3838, 4
        %v3840 = vmax.f32 %v3838, %v3839
        %v3841 = vrot.slane %v3840, 2
        %v3842 = vmax.f32 %v3840, %v3841
        %v3843 = vrot.slane %v3842, 1
        %v3844 = vmax.f32 %v3842, %v3843
        %v3845 = vmax.f32 %v3539, %v3542
        %v3846 = vrot.slane %v3845, 4
        %v3847 = vmax.f32 %v3845, %v3846
        %v3848 = vrot.slane %v3847, 2
        %v3849 = vmax.f32 %v3847, %v3848
        %v3850 = vrot.slane %v3849, 1
        %v3851 = vmax.f32 %v3849, %v3850
        %v3852 = vmax.f32 %v3540, %v3543
        %v3853 = vrot.slane %v3852, 4
        %v3854 = vmax.f32 %v3852, %v3853
        %v3855 = vrot.slane %v3854, 2
        %v3856 = vmax.f32 %v3854, %v3855
        %v3857 = vrot.slane %v3856, 1
        %v3858 = vmax.f32 %v3856, %v3857
        %v3859 = vmax.f32 %v3541, %v3544
        %v3860 = vrot.slane %v3859, 4
        %v3861 = vmax.f32 %v3859, %v3860
        %v3862 = vrot.slane %v3861, 2
        %v3863 = vmax.f32 %v3861, %v3862
        %v3864 = vrot.slane %v3863, 1
        %v3865 = vmax.f32 %v3863, %v3864
        %v3866 = vmax.f32 %v3545, %v3548
        %v3867 = vrot.slane %v3866, 4
        %v3868 = vmax.f32 %v3866, %v3867
        %v3869 = vrot.slane %v3868, 2
        %v3870 = vmax.f32 %v3868, %v3869
        %v3871 = vrot.slane %v3870, 1
        %v3872 = vmax.f32 %v3870, %v3871
        %v3873 = vmax.f32 %v3546, %v3549
        %v3874 = vrot.slane %v3873, 4
        %v3875 = vmax.f32 %v3873, %v3874
        %v3876 = vrot.slane %v3875, 2
        %v3877 = vmax.f32 %v3875, %v3876
        %v3878 = vrot.slane %v3877, 1
        %v3879 = vmax.f32 %v3877, %v3878
        %v3880 = vmax.f32 %v3547, %v3550
        %v3881 = vrot.slane %v3880, 4
        %v3882 = vmax.f32 %v3880, %v3881
        %v3883 = vrot.slane %v3882, 2
        %v3884 = vmax.f32 %v3882, %v3883
        %v3885 = vrot.slane %v3884, 1
        %v3886 = vmax.f32 %v3884, %v3885
        %v3887 = vpack.c.bf16 %v3557, %v3557
        %v3888 = vpack.c.bf16 %v3564, %v3564
        %v3889 = vpack.c.bf16 %v3571, %v3571
        %v3890 = vpack.c.bf16 %v3578, %v3578
        %v3891 = vpack.c.bf16 %v3585, %v3585
        %v3892 = vpack.c.bf16 %v3592, %v3592
        %v3893 = vpack.c.bf16 %v3599, %v3599
        %v3894 = vpack.c.bf16 %v3606, %v3606
        %v3895 = vpack.c.bf16 %v3613, %v3613
        %v3896 = vpack.c.bf16 %v3620, %v3620
        %v3897 = vpack.c.bf16 %v3627, %v3627
        %v3898 = vpack.c.bf16 %v3634, %v3634
        %v3899 = vpack.c.bf16 %v3641, %v3641
        %v3900 = vpack.c.bf16 %v3648, %v3648
        %v3901 = vpack.c.bf16 %v3655, %v3655
        %v3902 = vpack.c.bf16 %v3662, %v3662
        %v3903 = vpack.c.bf16 %v3669, %v3669
        %v3904 = vpack.c.bf16 %v3676, %v3676
        %v3905 = vpack.c.bf16 %v3683, %v3683
        %v3906 = vpack.c.bf16 %v3690, %v3690
        %v3907 = vpack.c.bf16 %v3697, %v3697
        %v3908 = vpack.c.bf16 %v3704, %v3704
        %v3909 = vpack.c.bf16 %v3711, %v3711
        %v3910 = vpack.c.bf16 %v3718, %v3718
        %v3911 = vpack.c.bf16 %v3725, %v3725
        %v3912 = vpack.c.bf16 %v3732, %v3732
        %v3913 = vpack.c.bf16 %v3739, %v3739
        %v3914 = vpack.c.bf16 %v3746, %v3746
        %v3915 = vpack.c.bf16 %v3753, %v3753
        %v3916 = vpack.c.bf16 %v3760, %v3760
        %v3917 = vpack.c.bf16 %v3767, %v3767
        %v3918 = vpack.c.bf16 %v3774, %v3774
        %v3919 = vpack.c.bf16 %v3781, %v3781
        %v3920 = vpack.c.bf16 %v3788, %v3788
        %v3921 = vpack.c.bf16 %v3795, %v3795
        %v3922 = vpack.c.bf16 %v3802, %v3802
        %v3923 = vpack.c.bf16 %v3809, %v3809
        %v3924 = vpack.c.bf16 %v3816, %v3816
        %v3925 = vpack.c.bf16 %v3823, %v3823
        %v3926 = vpack.c.bf16 %v3830, %v3830
        %v3927 = vpack.c.bf16 %v3837, %v3837
        %v3928 = vpack.c.bf16 %v3844, %v3844
        %v3929 = vpack.c.bf16 %v3851, %v3851
        %v3930 = vpack.c.bf16 %v3858, %v3858
        %v3931 = vpack.c.bf16 %v3865, %v3865
        %v3932 = vpack.c.bf16 %v3872, %v3872
        %v3933 = vpack.c.bf16 %v3879, %v3879
        %v3934 = vpack.c.bf16 %v3886, %v3886
        %v3935 = vld [vmem:[%s4] sm:$0xf]
        %v3936 = vld [vmem:[%s4 + $0x4] sm:$0xf]
        %v3937 = vld [vmem:[%s4 + $0x8] sm:$0xf]
        %v3938 = vld [vmem:[%s4 + $0xc] sm:$0xf]
        %v3939 = vld [vmem:[%s4 + $0x10] sm:$0xf]
        %v3940 = vld [vmem:[%s4 + $0x14] sm:$0xf]
        %v3941 = vld [vmem:[%s4 + $0x18] sm:$0xf]
        %v3942 = vld [vmem:[%s4 + $0x1c] sm:$0xf]
        %v3943 = vld [vmem:[%s4 + $0x20] sm:$0xf]
        %v3944 = vld [vmem:[%s4 + $0x24] sm:$0xf]
        %v3945 = vld [vmem:[%s4 + $0x28] sm:$0xf]
        %v3946 = vld [vmem:[%s4 + $0x2c] sm:$0xf]
        %v3947 = vld [vmem:[%s4 + $0x30] sm:$0xf]
        %v3948 = vld [vmem:[%s4 + $0x34] sm:$0xf]
        %v3949 = vld [vmem:[%s4 + $0x38] sm:$0xf]
        %v3950 = vld [vmem:[%s4 + $0x3c] sm:$0xf]
        %v3951 = vld [vmem:[%s4 + $0x40] sm:$0xf]
        %v3952 = vld [vmem:[%s4 + $0x44] sm:$0xf]
        %v3953 = vld [vmem:[%s4 + $0x48] sm:$0xf]
        %v3954 = vld [vmem:[%s4 + $0x4c] sm:$0xf]
        %v3955 = vld [vmem:[%s4 + $0x50] sm:$0xf]
        %v3956 = vld [vmem:[%s4 + $0x54] sm:$0xf]
        %v3957 = vld [vmem:[%s4 + $0x58] sm:$0xf]
        %v3958 = vld [vmem:[%s4 + $0x5c] sm:$0xf]
        %v3959 = vld [vmem:[%s4 + $0x60] sm:$0xf]
        %v3960 = vld [vmem:[%s4 + $0x64] sm:$0xf]
        %v3961 = vld [vmem:[%s4 + $0x68] sm:$0xf]
        %v3962 = vld [vmem:[%s4 + $0x6c] sm:$0xf]
        %v3963 = vld [vmem:[%s4 + $0x70] sm:$0xf]
        %v3964 = vld [vmem:[%s4 + $0x74] sm:$0xf]
        %v3965 = vld [vmem:[%s4 + $0x78] sm:$0xf]
        %v3966 = vld [vmem:[%s4 + $0x7c] sm:$0xf]
        %v3967 = vld [vmem:[%s4 + $0x80] sm:$0xf]
        %v3968 = vld [vmem:[%s4 + $0x84] sm:$0xf]
        %v3969 = vld [vmem:[%s4 + $0x88] sm:$0xf]
        %v3970 = vld [vmem:[%s4 + $0x8c] sm:$0xf]
        %v3971 = vld [vmem:[%s4 + $0x90] sm:$0xf]
        %v3972 = vld [vmem:[%s4 + $0x94] sm:$0xf]
        %v3973 = vld [vmem:[%s4 + $0x98] sm:$0xf]
        %v3974 = vld [vmem:[%s4 + $0x9c] sm:$0xf]
        %v3975 = vld [vmem:[%s4 + $0xa0] sm:$0xf]
        %v3976 = vld [vmem:[%s4 + $0xa4] sm:$0xf]
        %v3977 = vld [vmem:[%s4 + $0xa8] sm:$0xf]
        %v3978 = vld [vmem:[%s4 + $0xac] sm:$0xf]
        %v3979 = vld [vmem:[%s4 + $0xb0] sm:$0xf]
        %v3980 = vld [vmem:[%s4 + $0xb4] sm:$0xf]
        %v3981 = vld [vmem:[%s4 + $0xb8] sm:$0xf]
        %v3982 = vld [vmem:[%s4 + $0xbc] sm:$0xf]
        %v3983 = vld [vmem:[%s5] sm:$0x1]
        %v3985 = vlaneseq
        %v3986 = vshrl.u32 %v3985, 7
        %v3987 = vsub.s32 0, %v3986
        %v3988 = vrot.slane %v3983, %v3987
        %v4038 = vunpack.c.l.b16 %v3887
        %v4039 = vunpack.c.l.b16 %v3888
        %v4040 = vunpack.c.l.b16 %v3889
        %v4041 = vunpack.c.l.b16 %v3890
        %v4042 = vunpack.c.l.b16 %v3891
        %v4043 = vunpack.c.l.b16 %v3892
        %v4044 = vunpack.c.l.b16 %v3893
        %v4045 = vunpack.c.l.b16 %v3894
        %v4046 = vunpack.c.l.b16 %v3895
        %v4047 = vunpack.c.l.b16 %v3896
        %v4048 = vunpack.c.l.b16 %v3897
        %v4049 = vunpack.c.l.b16 %v3898
        %v4050 = vunpack.c.l.b16 %v3899
        %v4051 = vunpack.c.l.b16 %v3900
        %v4052 = vunpack.c.l.b16 %v3901
        %v4053 = vunpack.c.l.b16 %v3902
        %v4054 = vunpack.c.l.b16 %v3903
        %v4055 = vunpack.c.l.b16 %v3904
        %v4056 = vunpack.c.l.b16 %v3905
        %v4057 = vunpack.c.l.b16 %v3906
        %v4058 = vunpack.c.l.b16 %v3907
        %v4059 = vunpack.c.l.b16 %v3908
        %v4060 = vunpack.c.l.b16 %v3909
        %v4061 = vunpack.c.l.b16 %v3910
        %v4062 = vunpack.c.l.b16 %v3911
        %v4063 = vunpack.c.l.b16 %v3912
        %v4064 = vunpack.c.l.b16 %v3913
        %v4065 = vunpack.c.l.b16 %v3914
        %v4066 = vunpack.c.l.b16 %v3915
        %v4067 = vunpack.c.l.b16 %v3916
        %v4068 = vunpack.c.l.b16 %v3917
        %v4069 = vunpack.c.l.b16 %v3918
        %v4070 = vunpack.c.l.b16 %v3919
        %v4071 = vunpack.c.l.b16 %v3920
        %v4072 = vunpack.c.l.b16 %v3921
        %v4073 = vunpack.c.l.b16 %v3922
        %v4074 = vunpack.c.l.b16 %v3923
        %v4075 = vunpack.c.l.b16 %v3924
        %v4076 = vunpack.c.l.b16 %v3925
        %v4077 = vunpack.c.l.b16 %v3926
        %v4078 = vunpack.c.l.b16 %v3927
        %v4079 = vunpack.c.l.b16 %v3928
        %v4080 = vunpack.c.l.b16 %v3929
        %v4081 = vunpack.c.l.b16 %v3930
        %v4082 = vunpack.c.l.b16 %v3931
        %v4083 = vunpack.c.l.b16 %v3932
        %v4084 = vunpack.c.l.b16 %v3933
        %v4085 = vunpack.c.l.b16 %v3934
        %vm4086 = vcmask 1041409
        %v4087 = vsel %vm4086, %v4041, %v4038
        %vm4088 = vcmask 1042434
        %v4089 = vsel %vm4088, %v4044, %v4087
        %vm4090 = vcmask 1043459
        %v4091 = vsel %vm4090, %v4047, %v4089
        %vm4092 = vcmask 1044484
        %v4093 = vsel %vm4092, %v4050, %v4091
        %vm4094 = vcmask 1045509
        %v4095 = vsel %vm4094, %v4053, %v4093
        %vm4096 = vcmask 1046534
        %v4097 = vsel %vm4096, %v4056, %v4095
        %vm4098 = vcmask 1047559
        %v4099 = vsel %vm4098, %v4059, %v4097
        %v4100 = vsel %vm4086, %v4042, %v4039
        %v4101 = vsel %vm4088, %v4045, %v4100
        %v4102 = vsel %vm4090, %v4048, %v4101
        %v4103 = vsel %vm4092, %v4051, %v4102
        %v4104 = vsel %vm4094, %v4054, %v4103
        %v4105 = vsel %vm4096, %v4057, %v4104
        %v4106 = vsel %vm4098, %v4060, %v4105
        %v4107 = vsel %vm4086, %v4043, %v4040
        %v4108 = vsel %vm4088, %v4046, %v4107
        %v4109 = vsel %vm4090, %v4049, %v4108
        %v4110 = vsel %vm4092, %v4052, %v4109
        %v4111 = vsel %vm4094, %v4055, %v4110
        %v4112 = vsel %vm4096, %v4058, %v4111
        %v4113 = vsel %vm4098, %v4061, %v4112
        %v4114 = vsel %vm4086, %v4065, %v4062
        %v4115 = vsel %vm4088, %v4068, %v4114
        %v4116 = vsel %vm4090, %v4071, %v4115
        %v4117 = vsel %vm4092, %v4074, %v4116
        %v4118 = vsel %vm4094, %v4077, %v4117
        %v4119 = vsel %vm4096, %v4080, %v4118
        %v4120 = vsel %vm4098, %v4083, %v4119
        %v4121 = vsel %vm4086, %v4066, %v4063
        %v4122 = vsel %vm4088, %v4069, %v4121
        %v4123 = vsel %vm4090, %v4072, %v4122
        %v4124 = vsel %vm4092, %v4075, %v4123
        %v4125 = vsel %vm4094, %v4078, %v4124
        %v4126 = vsel %vm4096, %v4081, %v4125
        %v4127 = vsel %vm4098, %v4084, %v4126
        %v4128 = vsel %vm4086, %v4067, %v4064
        %v4129 = vsel %vm4088, %v4070, %v4128
        %v4130 = vsel %vm4090, %v4073, %v4129
        %v4131 = vsel %vm4092, %v4076, %v4130
        %v4132 = vsel %vm4094, %v4079, %v4131
        %v4133 = vsel %vm4096, %v4082, %v4132
        %v4134 = vsel %vm4098, %v4085, %v4133
        %v4135 = vpack.c.b16 %v4120, %v4099
        %v4136 = vpack.c.b16 %v4127, %v4106
        %v4137 = vpack.c.b16 %v4134, %v4113
        %v4189 = vunpack.c.l.b16 %v3935
        %v4190 = vunpack.c.l.b16 %v3936
        %v4191 = vunpack.c.l.b16 %v3937
        %v4192 = vunpack.c.l.b16 %v3938
        %v4193 = vunpack.c.l.b16 %v3939
        %v4194 = vunpack.c.l.b16 %v3940
        %v4195 = vunpack.c.l.b16 %v3941
        %v4196 = vunpack.c.l.b16 %v3942
        %v4197 = vunpack.c.l.b16 %v3943
        %v4198 = vunpack.c.l.b16 %v3944
        %v4199 = vunpack.c.l.b16 %v3945
        %v4200 = vunpack.c.l.b16 %v3946
        %v4201 = vunpack.c.l.b16 %v3947
        %v4202 = vunpack.c.l.b16 %v3948
        %v4203 = vunpack.c.l.b16 %v3949
        %v4204 = vunpack.c.l.b16 %v3950
        %v4205 = vunpack.c.l.b16 %v3951
        %v4206 = vunpack.c.l.b16 %v3952
        %v4207 = vunpack.c.l.b16 %v3953
        %v4208 = vunpack.c.l.b16 %v3954
        %v4209 = vunpack.c.l.b16 %v3955
        %v4210 = vunpack.c.l.b16 %v3956
        %v4211 = vunpack.c.l.b16 %v3957
        %v4212 = vunpack.c.l.b16 %v3958
        %v4213 = vunpack.c.l.b16 %v3959
        %v4214 = vunpack.c.l.b16 %v3960
        %v4215 = vunpack.c.l.b16 %v3961
        %v4216 = vunpack.c.l.b16 %v3962
        %v4217 = vunpack.c.l.b16 %v3963
        %v4218 = vunpack.c.l.b16 %v3964
        %v4219 = vunpack.c.l.b16 %v3965
        %v4220 = vunpack.c.l.b16 %v3966
        %v4221 = vunpack.c.l.b16 %v3967
        %v4222 = vunpack.c.l.b16 %v3968
        %v4223 = vunpack.c.l.b16 %v3969
        %v4224 = vunpack.c.l.b16 %v3970
        %v4225 = vunpack.c.l.b16 %v3971
        %v4226 = vunpack.c.l.b16 %v3972
        %v4227 = vunpack.c.l.b16 %v3973
        %v4228 = vunpack.c.l.b16 %v3974
        %v4229 = vunpack.c.l.b16 %v3975
        %v4230 = vunpack.c.l.b16 %v3976
        %v4231 = vunpack.c.l.b16 %v3977
        %v4232 = vunpack.c.l.b16 %v3978
        %v4233 = vunpack.c.l.b16 %v3979
        %v4234 = vunpack.c.l.b16 %v3980
        %v4235 = vunpack.c.l.b16 %v3981
        %v4236 = vunpack.c.l.b16 %v3982
        %v4237 = vpack.c.b16 %v4190, %v4189
        %v4238 = vpack.c.b16 %v4192, %v4191
        %v4239 = vpack.c.b16 %v4194, %v4193
        %v4240 = vpack.c.b16 %v4196, %v4195
        %v4241 = vpack.c.b16 %v4198, %v4197
        %v4242 = vpack.c.b16 %v4200, %v4199
        %v4243 = vpack.c.b16 %v4202, %v4201
        %v4244 = vpack.c.b16 %v4204, %v4203
        %v4245 = vpack.c.b16 %v4206, %v4205
        %v4246 = vpack.c.b16 %v4208, %v4207
        %v4247 = vpack.c.b16 %v4210, %v4209
        %v4248 = vpack.c.b16 %v4212, %v4211
        %v4249 = vpack.c.b16 %v4214, %v4213
        %v4250 = vpack.c.b16 %v4216, %v4215
        %v4251 = vpack.c.b16 %v4218, %v4217
        %v4252 = vpack.c.b16 %v4220, %v4219
        %v4253 = vpack.c.b16 %v4222, %v4221
        %v4254 = vpack.c.b16 %v4224, %v4223
        %v4255 = vpack.c.b16 %v4226, %v4225
        %v4256 = vpack.c.b16 %v4228, %v4227
        %v4257 = vpack.c.b16 %v4230, %v4229
        %v4258 = vpack.c.b16 %v4232, %v4231
        %v4259 = vpack.c.b16 %v4234, %v4233
        %v4260 = vpack.c.b16 %v4236, %v4235
        %4285 = vmatprep.subr.bf16.mxu0 0
        %4286 = vmatpush1.bf16.msra.mxu0 %v4237
        %4287 = vmatprep.subr.bf16.mxu0 0
        %4288 = vmatpush1.bf16.msra.mxu0 %v4238
        %4289 = vmatprep.subr.bf16.mxu0 0
        %4290 = vmatpush1.bf16.msra.mxu0 %v4239
        %4291 = vmatprep.subr.bf16.mxu0 0
        %4292 = vmatpush1.bf16.msra.mxu0 %v4240
        %4293 = vmatprep.subr.bf16.mxu0 0
        %4294 = vmatpush1.bf16.msra.mxu0 %v4241
        %4295 = vmatprep.subr.bf16.mxu0 0
        %4296 = vmatpush1.bf16.msra.mxu0 %v4242
        %4297 = vmatprep.subr.bf16.mxu0 0
        %4298 = vmatpush1.bf16.msra.mxu0 %v4243
        %4299 = vmatprep.subr.bf16.mxu0 0
        %4300 = vmatpush1.bf16.msra.mxu0 %v4244
        %4301 = vmatprep.subr.bf16.mxu0 0
        %4302 = vmatpush1.bf16.msra.mxu0 %v4245
        %4303 = vmatprep.subr.bf16.mxu0 0
        %4304 = vmatpush1.bf16.msra.mxu0 %v4246
        %4305 = vmatprep.subr.bf16.mxu0 0
        %4306 = vmatpush1.bf16.msra.mxu0 %v4247
        %4307 = vmatprep.subr.bf16.mxu0 0
        %4308 = vmatpush1.bf16.msra.mxu0 %v4248
        %4309 = vmatprep.subr.bf16.mxu0 0
        %4310 = vmatpush1.bf16.msra.mxu0 %v4249
        %4311 = vmatprep.subr.bf16.mxu0 0
        %4312 = vmatpush1.bf16.msra.mxu0 %v4250
        %4313 = vmatprep.subr.bf16.mxu0 0
        %4314 = vmatpush1.bf16.msra.mxu0 %v4251
        %4315 = vmatprep.subr.bf16.mxu0 0
        %4316 = vmatpush1.bf16.msra.mxu0 %v4252
        %4317 = vmatprep.mubr.bf16.mxu0 %v4136
        %4318 = vmatmul.mubr.bf16.gmra.mrb[0].mxu0 %v4135
        %v4319 = vpop.f32.mrb[0].mxu0
        %v4320 = vadd.f32 %v3988, %v4319
        %v4321 = vpop.f32.mrb[0].mxu0
        %v4322 = vpop.f32.mrb[0].mxu0
        %v4323 = vadd.f32 %v3988, %v4322
        %v4324 = vpop.f32.mrb[0].mxu0
        %4325 = vdwg.mxu0
        %4326 = vmatprep.subr.bf16.mxu0 0
        %4327 = vmatpush1.bf16.msra.mxu0 %v4253
        %4328 = vmatprep.subr.bf16.mxu0 0
        %4329 = vmatpush1.bf16.msra.mxu0 %v4254
        %4330 = vmatprep.subr.bf16.mxu0 0
        %4331 = vmatpush1.bf16.msra.mxu0 %v4255
        %4332 = vmatprep.subr.bf16.mxu0 0
        %4333 = vmatpush1.bf16.msra.mxu0 %v4256
        %4334 = vmatprep.subr.bf16.mxu0 0
        %4335 = vmatpush1.bf16.msra.mxu0 %v4257
        %4336 = vmatprep.subr.bf16.mxu0 0
        %4337 = vmatpush1.bf16.msra.mxu0 %v4258
        %4338 = vmatprep.subr.bf16.mxu0 0
        %4339 = vmatpush1.bf16.msra.mxu0 %v4259
        %4340 = vmatprep.subr.bf16.mxu0 0
        %4341 = vmatpush1.bf16.msra.mxu0 %v4260
        %4342 = vmatprep.subr.bf16.mxu0 0
        %4343 = vmatpush1.bf16.msra.mxu0 0
        %4344 = vmatprep.subr.bf16.mxu0 0
        %4345 = vmatpush1.bf16.msra.mxu0 0
        %4346 = vmatprep.subr.bf16.mxu0 0
        %4347 = vmatpush1.bf16.msra.mxu0 0
        %4348 = vmatprep.subr.bf16.mxu0 0
        %4349 = vmatpush1.bf16.msra.mxu0 0
        %4350 = vmatprep.subr.bf16.mxu0 0
        %4351 = vmatpush1.bf16.msra.mxu0 0
        %4352 = vmatprep.subr.bf16.mxu0 0
        %4353 = vmatpush1.bf16.msra.mxu0 0
        %4354 = vmatprep.subr.bf16.mxu0 0
        %4355 = vmatpush1.bf16.msra.mxu0 0
        %4356 = vmatprep.subr.bf16.mxu0 0
        %4357 = vmatpush1.bf16.msra.mxu0 0
        %4358 = vmatprep.mubr.bf16.mxu0 0
        %4359 = vmatmul.mubr.bf16.gmra.mrb[0].mxu0 %v4137
        %v4360 = vpop.f32.mrb[0].mxu0
        %v4361 = vadd.f32 %v4320, %v4360
        %v4362 = vpop.f32.mrb[0].mxu0
        %v4363 = vpop.f32.mrb[0].mxu0
        %v4364 = vadd.f32 %v4323, %v4363
        %v4365 = vpop.f32.mrb[0].mxu0
        %4366 = vdwg.mxu0
        %4367 = vmax.xlane.f32.xlu0 %v4361
        %v4368 = vpop.xlane.xlu0 %4367
        %4369 = vmax.xlane.f32.xlu0 %v4364
        %v4370 = vpop.xlane.xlu0 %4369
        %v4371 = vsub.f32 %v4361, %v4368
        %v4372 = vsub.f32 %v4364, %v4370
        %v4373 = vmul.f32 %v4371, 1.442695
        %v4374 = vpow.pop %v4373
        %v4375 = vmul.f32 %v4372, 1.442695
        %v4376 = vpow.pop %v4375
        %4377 = vadd.xlane.f32.xlu0 %v4374
        %v4378 = vpop.xlane.xlu0 %4377
        %4379 = vadd.xlane.f32.xlu0 %v4376
        %v4380 = vpop.xlane.xlu0 %4379
        %v4381 = vlog2.pop %v4378
        %v4382 = vmul.f32 %v4381, 0.6931472
        %v4383 = vlog2.pop %v4380
        %v4384 = vmul.f32 %v4383, 0.6931472
        %v4385 = vsub.f32 %v4371, %v4382
        %v4386 = vsub.f32 %v4372, %v4384
        %4387 = vst [vmem:[%s262] sm:$0xff] %v4385
        %4388 = vst [vmem:[%s262 + $0x8] sm:$0xff] %v4386
        %s4389 = sand.u32 %s160, 1
        %s4390 = scalar_lea.sflag [#allocation4], %s4389
        %s4391 = sand.u32 %s160, 1
        %s4392 = smul.addr %s4391, 16
        %s4393 = scalar_lea.vmem [#allocation5], %s4392
        // Predicated region
        $region49: #{tpu_custom_call.1} parent=43 // pred_check
          %p4394 = pneg %p170
        $region50: #{tpu_custom_call.1} parent=43 // pred_check_branch
          %4396 = sbr.rel (%p4394) target = $region52
        $region51: #{tpu_custom_call.1} parent=43 // pred_region
          %s4397 = smul.u32 2, %s21
          %s4399 = ssub.s32 256, 256
          %4400 = vsyncadd %s4390, %s4399
          %s4401 = smul.addr %s4397, 128
          %s4402 = scalar_lea.hbm %s6, %s4401
          %s4403 = sshll.u32 %s4393, 4
          %s4404 = int_to_ptr.vmem [resolvable:$true] %s4403
          %4409 = dma.vmem_to_hbm [thread:$0]  %s4404, 256, %s4402, %s4390, 128, 128, 8
        $region52: #{tpu_custom_call.1} parent=43 // pred_fallthru
          _
      $region44: #{tpu_custom_call.1} parent=5 // pred_fallthru
        _
      %p4410 = scmp.le.s32.totalorder 2, %s16
      // Predicated region
      $region53: #{tpu_custom_call.1} parent=5 // pred_check
        %p4411 = pneg %p4410
      $region54: #{tpu_custom_call.1} parent=5 // pred_check_branch
        %4413 = sbr.rel (%p4411) target = $region56
      $region55: #{tpu_custom_call.1} parent=5 // pred_region
        %s4414 = ssub.s32 %s16, 2
        // Predicated region
        $region57: #{tpu_custom_call.1} parent=55 // pred_check
          %p4415 = pneg %p176
        $region58: #{tpu_custom_call.1} parent=55 // pred_check_branch
          %4417 = sbr.rel (%p4415) target = $region60
        $region59: #{tpu_custom_call.1} parent=55 // pred_region
          %s4418 = sand.u32 %s161, 1
          %s4419 = scalar_lea.sflag [#allocation4], %s4418
          %s4420 = sand.u32 %s161, 1
          %s4421 = smul.addr %s4420, 16
          %s4422 = scalar_lea.vmem [#allocation5], %s4421
          %4423 = dma.done %s4419, 256
        $region60: #{tpu_custom_call.1} parent=55 // pred_fallthru
          _
      $region56: #{tpu_custom_call.1} parent=5 // pred_fallthru
        _
    $region6: #{tpu_custom_call.1} parent=1 // loop_footer
      %s20 = sadd.s32 1, %s16
    $region7: #{tpu_custom_call.1} parent=1 // loop_footer_branch
      %15 = sbr.rel target = $region3
    $region8: #{tpu_custom_call.1} parent=1 // loop_exit
      _
    %4424 = vsyncpa [#allocation3], 1
    %s4425 = scalar_lea.sflag [#allocation3], 1
    %4426 = vsyncpa %s4425, 1
    %4427 = vsyncpa [#allocation4], 1
    %s4428 = scalar_lea.sflag [#allocation4], 1
    %4429 = vsyncpa %s4428, 1

</llo_original>
